<compile_context>
chip_gen: v7x
topology: tpu7x:2x2x1
jax: 0.10.0
libtpu: 0.0.40
codegen_flags: <defaults>
</compile_context>

<pallas_src>
import functools

import jax
import jax.numpy as jnp
from jax.experimental import pallas as pl
from jax.experimental.pallas import tpu as pltpu

HEADS = 2
NEG_SLOPE = 0.2  # PyG GATConv default negative_slope

DIMS = ((784, 4), (4, 16), (16, 32), (32, 64),
        (64, 128), (128, 256), (256, 512), (512, 2))


def _round_up(x, m):
    return ((x + m - 1) // m) * m


# Per-layer head segment width (W columns + 2 attention-logit columns, padded
# to a 128-lane boundary so per-head slices of the combined matmul stay
# lane-aligned).
SEGS = tuple(_round_up(f_out + 2, 128) for _, f_out in DIMS)


def fused_gat_kernel(*refs, dims, segs):
    """Entire 8-layer GAT forward pass in one kernel.

    refs = (x_ref[N, F_in0], adj_ref[N, N],
            # per layer l (2 refs each):
            #   w_ref[l]    : [F_in_l, HEADS*seg_l] bf16
            #                 head hd occupies cols [hd*seg, hd*seg+f_out) = W[hd],
            #                 cols hd*seg+f_out / +f_out+1 = W[hd]@att_src / att_dst,
            #                 remaining cols zero padding.
            #   bias_ref[l] : [1, F_out_l] f32
            ...,
            out_ref[N, F_out_last])
    """
    x_ref, adj_ref = refs[0], refs[1]
    out_ref = refs[-1]
    p_refs = refs[2:-1]
    assert len(p_refs) == 2 * len(dims)

    adj = adj_ref[...]                       # [N, N] f32 mask
    neg_big = jnp.float32(-1e30)
    n_layers = len(dims)

    h = x_ref[...]                           # [N, F_in0] f32
    for li, (_, f_out) in enumerate(dims):
        seg = segs[li]
        w_ref = p_refs[2 * li + 0]           # [F_in, HEADS*seg] bf16
        bias_ref = p_refs[2 * li + 1]        # [1, F_out]        f32

        # Single projection matmul for BOTH heads AND both attention logits
        # (att vectors folded into W in the wrapper).  bf16 operands, f32 acc.
        h_bf = h.astype(jnp.bfloat16)
        comb = jnp.dot(h_bf, w_ref[...],
                       preferred_element_type=jnp.float32)   # [N, HEADS*seg] f32

        alphas = []
        xhs = []
        for hd in range(HEADS):              # static unroll (HEADS == 2)
            base = hd * seg                  # 128-aligned lane offset
            xh = comb[:, base:base + f_out]                       # [N, F_out]
            a_src = comb[:, base + f_out:base + f_out + 1]        # [N, 1]
            a_dst = comb[:, base + f_out + 1:base + f_out + 2]    # [N, 1]

            # e[i, j] = leaky_relu(a_dst[i] + a_src[j]); mask non-edges.
            e = a_dst + jnp.transpose(a_src)                      # [N, N]
            e = jnp.where(e > 0, e, NEG_SLOPE * e)
            e = jnp.where(adj > 0.5, e, neg_big)

            # Masked softmax over sources j (incoming neighbours of target i).
            # Self-loops guarantee a finite row max, and exp(-1e30 - m) == 0,
            # so no explicit "* adj" is needed after the exp.
            m = jnp.max(e, axis=1, keepdims=True)
            p = jnp.exp(e - m)
            denom = jnp.sum(p, axis=1, keepdims=True)
            alpha = p * pl.reciprocal(denom, approx=True)          # [N, N]

            alphas.append(alpha)
            xhs.append(xh)

        # Fused aggregation for both heads: the head sum is the contraction.
        alpha_cat = jnp.concatenate(alphas, axis=1).astype(jnp.bfloat16)  # [N, H*N]
        xh_cat = jnp.concatenate(xhs, axis=0).astype(jnp.bfloat16)        # [H*N, F_out]
        acc = jnp.dot(alpha_cat, xh_cat,
                      preferred_element_type=jnp.float32)                 # [N, F_out]

        # concat=False -> mean over heads, then bias.
        out = acc * jnp.float32(1.0 / HEADS) + bias_ref[...]

        if li == n_layers - 1:
            # Final class softmax over the feature dim (exact reciprocal).
            mo = jnp.max(out, axis=1, keepdims=True)
            eo = jnp.exp(out - mo)
            out = eo * pl.reciprocal(jnp.sum(eo, axis=1, keepdims=True), approx=False)
        else:
            out = jnp.maximum(out, 0.0)      # ReLU
        h = out

    out_ref[...] = h


def _net_forward_impl(x, adj, flat_params):
    n = x.shape[0]
    inputs = [x, adj] + list(flat_params)
    kernel = functools.partial(fused_gat_kernel, dims=DIMS, segs=SEGS)
    vmem = pl.BlockSpec(memory_space=pltpu.MemorySpace.VMEM)
    return pl.pallas_call(
        kernel,
        out_shape=jax.ShapeDtypeStruct((n, DIMS[-1][1]), jnp.float32),
        in_specs=[vmem] * len(inputs),
        out_specs=vmem,
    )(*inputs)


net_forward = jax.jit(_net_forward_impl)


def prepare_params(params):
    """One-time preprocessing (hoisted out of the per-call path).

    For each layer builds the bf16 augmented weight slab
      [F_in, HEADS*seg] where per head the columns are
      [ W[h] | W[h]@att_src[h] | W[h]@att_dst[h] | 0-pad to seg ],
    plus the f32 bias. Returns a flat tuple of kernel inputs.
    """
    flat = []
    for li, ((f_in, f_out), seg) in enumerate(zip(DIMS, SEGS)):
        p = params[li]
        head_cols = []
        for hd in range(HEADS):
            w = p["w"][hd]                                     # [F_in, F_out] f32
            c_src = w @ p["att_src"][hd][:, None]              # [F_in, 1]
            c_dst = w @ p["att_dst"][hd][:, None]              # [F_in, 1]
            pad = jnp.zeros((f_in, seg - f_out - 2), jnp.float32)
            head_cols.append(jnp.concatenate([w, c_src, c_dst, pad], axis=1))
        w_all = jnp.concatenate(head_cols, axis=1).astype(jnp.bfloat16)  # [F_in, H*seg]
        flat.append(w_all)
        flat.append(p["bias"].astype(jnp.float32))             # [1, F_out]
    return tuple(flat)


def init_gat_params(key, f_in, f_out):
    """Deterministic (seeded) glorot-style init, mirroring PyG GATConv shapes."""
    k1, k2, k3 = jax.random.split(key, 3)
    lim_w = jnp.sqrt(6.0 / (f_in + HEADS * f_out))
    w = jax.random.uniform(k1, (HEADS, f_in, f_out), jnp.float32, -lim_w, lim_w)
    lim_a = jnp.sqrt(6.0 / (1 + f_out))
    att_src = jax.random.uniform(k2, (HEADS, f_out), jnp.float32, -lim_a, lim_a)
    att_dst = jax.random.uniform(k3, (HEADS, f_out), jnp.float32, -lim_a, lim_a)
    bias = jnp.zeros((1, f_out), jnp.float32)
    return dict(w=w, att_src=att_src, att_dst=att_dst, bias=bias)


def build_adjacency(edge_index, num_nodes):
    """Dense mask: adj[i, j] = 1 iff edge j -> i; self loops added (PyG default)."""
    src, dst = edge_index[0], edge_index[1]
    adj = jnp.zeros((num_nodes, num_nodes), jnp.float32)
    adj = adj.at[dst, src].set(1.0)
    diag = jnp.arange(num_nodes)
    adj = adj.at[diag, diag].set(1.0)
    return adj


if __name__ == "__main__":
    key = jax.random.PRNGKey(0)
    k_x, k_p = jax.random.split(key)

    N = 16          # number of graph nodes
    F_IN = 784      # input feature dim (matches conv1 in_channels)

    # deterministic input node features
    x = jax.random.normal(k_x, (N, F_IN), jnp.float32)

    # deterministic small graph: bidirectional ring -> edge_index [2, 2N]
    src = jnp.concatenate([jnp.arange(N), (jnp.arange(N) + 1) % N])
    dst = jnp.concatenate([(jnp.arange(N) + 1) % N, jnp.arange(N)])
    edge_index = jnp.stack([src, dst], axis=0)
    batch = jnp.zeros((N,), jnp.int32)  # unused by forward (kept for parity)

    adj = build_adjacency(edge_index, N)

    # deterministic per-layer parameters; fold/cast ONCE (outside the jit path)
    pkeys = jax.random.split(k_p, len(DIMS))
    params = [init_gat_params(pkeys[i], fi, fo) for i, (fi, fo) in enumerate(DIMS)]
    flat_params = jax.block_until_ready(prepare_params(params))

    out = net_forward(x, adj, flat_params)
    out = jax.block_until_ready(out)

    assert out.shape == (N, 2)
    assert bool(jnp.all(jnp.isfinite(out)))
    # softmax rows must sum to 1 (final softmax uses exact reciprocal)
    assert bool(jnp.all(jnp.abs(jnp.sum(out, axis=1) - 1.0) < 1e-4))
    print("KERNEL_OK")
</pallas_src>

<mosaic_0001>
module attributes {stable_mosaic.version = 11 : i64} {
  func.func @fused_gat_kernel(%arg0: memref<16x784xf32, #tpu.memory_space<vmem>>, %arg1: memref<16x16xf32, #tpu.memory_space<vmem>>, %arg2: memref<784x256xbf16, #tpu.memory_space<vmem>>, %arg3: memref<1x4xf32, #tpu.memory_space<vmem>>, %arg4: memref<4x256xbf16, #tpu.memory_space<vmem>>, %arg5: memref<1x16xf32, #tpu.memory_space<vmem>>, %arg6: memref<16x256xbf16, #tpu.memory_space<vmem>>, %arg7: memref<1x32xf32, #tpu.memory_space<vmem>>, %arg8: memref<32x256xbf16, #tpu.memory_space<vmem>>, %arg9: memref<1x64xf32, #tpu.memory_space<vmem>>, %arg10: memref<64x512xbf16, #tpu.memory_space<vmem>>, %arg11: memref<1x128xf32, #tpu.memory_space<vmem>>, %arg12: memref<128x768xbf16, #tpu.memory_space<vmem>>, %arg13: memref<1x256xf32, #tpu.memory_space<vmem>>, %arg14: memref<256x1280xbf16, #tpu.memory_space<vmem>>, %arg15: memref<1x512xf32, #tpu.memory_space<vmem>>, %arg16: memref<512x256xbf16, #tpu.memory_space<vmem>>, %arg17: memref<1x2xf32, #tpu.memory_space<vmem>>, %arg18: memref<16x2xf32, #tpu.memory_space<vmem>>) attributes {dimension_semantics = [], scalar_prefetch = 0 : i64, scratch_operands = 0 : i64, tpu.core_type = #tpu.core_type<tc>} {
    %c0 = arith.constant 0 : index
    %c0_0 = arith.constant 0 : index
    %0 = vector.load %arg1[%c0, %c0_0] : memref<16x16xf32, #tpu.memory_space<vmem>>, vector<16x16xf32>
    %c0_1 = arith.constant 0 : index
    %c0_2 = arith.constant 0 : index
    %1 = vector.load %arg0[%c0_1, %c0_2] : memref<16x784xf32, #tpu.memory_space<vmem>>, vector<16x784xf32>
    %2 = arith.truncf %1 : vector<16x784xf32> to vector<16x784xbf16>
    %c0_3 = arith.constant 0 : index
    %c0_4 = arith.constant 0 : index
    %3 = vector.load %arg2[%c0_3, %c0_4] : memref<784x256xbf16, #tpu.memory_space<vmem>>, vector<784x256xbf16>
    %cst = arith.constant dense<0.000000e+00> : vector<16x256xf32>
    %4 = tpu.matmul %2, %3, %cst {dimension_numbers = #tpu.dot_dimension_numbers<[1], [0], [0], [1], [0, 0, 1, 1], [], []>} : vector<16x784xbf16>, vector<784x256xbf16>, vector<16x256xf32> -> vector<16x256xf32>
    %5 = vector.extract_strided_slice %4 {offsets = [0, 0], sizes = [16, 4], strides = [1, 1]} : vector<16x256xf32> to vector<16x4xf32>
    %6 = vector.extract_strided_slice %4 {offsets = [0, 4], sizes = [16, 1], strides = [1, 1]} : vector<16x256xf32> to vector<16x1xf32>
    %7 = vector.extract_strided_slice %4 {offsets = [0, 5], sizes = [16, 1], strides = [1, 1]} : vector<16x256xf32> to vector<16x1xf32>
    %8 = tpu.transpose %6, [1, 0] : vector<16x1xf32> -> vector<1x16xf32>
    %9 = vector.broadcast %7 : vector<16x1xf32> to vector<16x16xf32>
    %10 = vector.broadcast %8 : vector<1x16xf32> to vector<16x16xf32>
    %11 = arith.addf %9, %10 : vector<16x16xf32>
    %cst_5 = arith.constant 0.000000e+00 : f32
    %12 = vector.broadcast %cst_5 : f32 to vector<16x16xf32>
    %13 = arith.cmpf ogt, %11, %12 : vector<16x16xf32>
    %cst_6 = arith.constant 2.000000e-01 : f32
    %14 = vector.broadcast %cst_6 : f32 to vector<16x16xf32>
    %15 = arith.mulf %14, %11 : vector<16x16xf32>
    %16 = arith.select %13, %11, %15 : vector<16x16xi1>, vector<16x16xf32>
    %cst_7 = arith.constant 5.000000e-01 : f32
    %17 = vector.broadcast %cst_7 : f32 to vector<16x16xf32>
    %18 = arith.cmpf ogt, %0, %17 : vector<16x16xf32>
    %cst_8 = arith.constant -1.000000e+30 : f32
    %19 = vector.broadcast %cst_8 : f32 to vector<16x16xf32>
    %20 = arith.select %18, %16, %19 : vector<16x16xi1>, vector<16x16xf32>
    %cst_9 = arith.constant dense<0xFF800000> : vector<16xf32>
    %21 = vector.multi_reduction <maximumf>, %20, %cst_9 [1] : vector<16x16xf32> to vector<16xf32>
    %22 = vector.shape_cast %21 : vector<16xf32> to vector<16x1xf32>
    %23 = vector.broadcast %22 : vector<16x1xf32> to vector<16x16xf32>
    %24 = arith.subf %20, %23 : vector<16x16xf32>
    %25 = math.exp %24 : vector<16x16xf32>
    %cst_10 = arith.constant dense<0.000000e+00> : vector<16xf32>
    %26 = vector.multi_reduction <add>, %25, %cst_10 [1] : vector<16x16xf32> to vector<16xf32>
    %27 = vector.shape_cast %26 : vector<16xf32> to vector<16x1xf32>
    %28 = tpu.reciprocal %27 {approx = true} : vector<16x1xf32> -> vector<16x1xf32>
    %29 = vector.broadcast %28 : vector<16x1xf32> to vector<16x16xf32>
    %30 = arith.mulf %25, %29 : vector<16x16xf32>
    %31 = vector.extract_strided_slice %4 {offsets = [0, 128], sizes = [16, 4], strides = [1, 1]} : vector<16x256xf32> to vector<16x4xf32>
    %32 = vector.extract_strided_slice %4 {offsets = [0, 132], sizes = [16, 1], strides = [1, 1]} : vector<16x256xf32> to vector<16x1xf32>
    %33 = vector.extract_strided_slice %4 {offsets = [0, 133], sizes = [16, 1], strides = [1, 1]} : vector<16x256xf32> to vector<16x1xf32>
    %34 = tpu.transpose %32, [1, 0] : vector<16x1xf32> -> vector<1x16xf32>
    %35 = vector.broadcast %33 : vector<16x1xf32> to vector<16x16xf32>
    %36 = vector.broadcast %34 : vector<1x16xf32> to vector<16x16xf32>
    %37 = arith.addf %35, %36 : vector<16x16xf32>
    %cst_11 = arith.constant 0.000000e+00 : f32
    %38 = vector.broadcast %cst_11 : f32 to vector<16x16xf32>
    %39 = arith.cmpf ogt, %37, %38 : vector<16x16xf32>
    %cst_12 = arith.constant 2.000000e-01 : f32
    %40 = vector.broadcast %cst_12 : f32 to vector<16x16xf32>
    %41 = arith.mulf %40, %37 : vector<16x16xf32>
    %42 = arith.select %39, %37, %41 : vector<16x16xi1>, vector<16x16xf32>
    %cst_13 = arith.constant 5.000000e-01 : f32
    %43 = vector.broadcast %cst_13 : f32 to vector<16x16xf32>
    %44 = arith.cmpf ogt, %0, %43 : vector<16x16xf32>
    %cst_14 = arith.constant -1.000000e+30 : f32
    %45 = vector.broadcast %cst_14 : f32 to vector<16x16xf32>
    %46 = arith.select %44, %42, %45 : vector<16x16xi1>, vector<16x16xf32>
    %cst_15 = arith.constant dense<0xFF800000> : vector<16xf32>
    %47 = vector.multi_reduction <maximumf>, %46, %cst_15 [1] : vector<16x16xf32> to vector<16xf32>
    %48 = vector.shape_cast %47 : vector<16xf32> to vector<16x1xf32>
    %49 = vector.broadcast %48 : vector<16x1xf32> to vector<16x16xf32>
    %50 = arith.subf %46, %49 : vector<16x16xf32>
    %51 = math.exp %50 : vector<16x16xf32>
    %cst_16 = arith.constant dense<0.000000e+00> : vector<16xf32>
    %52 = vector.multi_reduction <add>, %51, %cst_16 [1] : vector<16x16xf32> to vector<16xf32>
    %53 = vector.shape_cast %52 : vector<16xf32> to vector<16x1xf32>
    %54 = tpu.reciprocal %53 {approx = true} : vector<16x1xf32> -> vector<16x1xf32>
    %55 = vector.broadcast %54 : vector<16x1xf32> to vector<16x16xf32>
    %56 = arith.mulf %51, %55 : vector<16x16xf32>
    %57 = tpu.concatenate %30, %56 in 1 : vector<16x16xf32>, vector<16x16xf32> -> vector<16x32xf32>
    %58 = arith.truncf %57 : vector<16x32xf32> to vector<16x32xbf16>
    %59 = tpu.concatenate %5, %31 in 0 : vector<16x4xf32>, vector<16x4xf32> -> vector<32x4xf32>
    %60 = arith.truncf %59 : vector<32x4xf32> to vector<32x4xbf16>
    %cst_17 = arith.constant dense<0.000000e+00> : vector<16x4xf32>
    %61 = tpu.matmul %58, %60, %cst_17 {dimension_numbers = #tpu.dot_dimension_numbers<[1], [0], [0], [1], [0, 0, 1, 1], [], []>} : vector<16x32xbf16>, vector<32x4xbf16>, vector<16x4xf32> -> vector<16x4xf32>
    %cst_18 = arith.constant 5.000000e-01 : f32
    %62 = vector.broadcast %cst_18 : f32 to vector<16x4xf32>
    %63 = arith.mulf %61, %62 : vector<16x4xf32>
    %c0_19 = arith.constant 0 : index
    %c0_20 = arith.constant 0 : index
    %64 = vector.load %arg3[%c0_19, %c0_20] : memref<1x4xf32, #tpu.memory_space<vmem>>, vector<1x4xf32>
    %65 = vector.broadcast %64 : vector<1x4xf32> to vector<16x4xf32>
    %66 = arith.addf %63, %65 : vector<16x4xf32>
    %cst_21 = arith.constant 0.000000e+00 : f32
    %67 = vector.broadcast %cst_21 : f32 to vector<16x4xf32>
    %68 = arith.maximumf %66, %67 : vector<16x4xf32>
    %69 = arith.truncf %68 : vector<16x4xf32> to vector<16x4xbf16>
    %c0_22 = arith.constant 0 : index
    %c0_23 = arith.constant 0 : index
    %70 = vector.load %arg4[%c0_22, %c0_23] : memref<4x256xbf16, #tpu.memory_space<vmem>>, vector<4x256xbf16>
    %cst_24 = arith.constant dense<0.000000e+00> : vector<16x256xf32>
    %71 = tpu.matmul %69, %70, %cst_24 {dimension_numbers = #tpu.dot_dimension_numbers<[1], [0], [0], [1], [0, 0, 1, 1], [], []>} : vector<16x4xbf16>, vector<4x256xbf16>, vector<16x256xf32> -> vector<16x256xf32>
    %72 = vector.extract_strided_slice %71 {offsets = [0, 0], sizes = [16, 16], strides = [1, 1]} : vector<16x256xf32> to vector<16x16xf32>
    %73 = vector.extract_strided_slice %71 {offsets = [0, 16], sizes = [16, 1], strides = [1, 1]} : vector<16x256xf32> to vector<16x1xf32>
    %74 = vector.extract_strided_slice %71 {offsets = [0, 17], sizes = [16, 1], strides = [1, 1]} : vector<16x256xf32> to vector<16x1xf32>
    %75 = tpu.transpose %73, [1, 0] : vector<16x1xf32> -> vector<1x16xf32>
    %76 = vector.broadcast %74 : vector<16x1xf32> to vector<16x16xf32>
    %77 = vector.broadcast %75 : vector<1x16xf32> to vector<16x16xf32>
    %78 = arith.addf %76, %77 : vector<16x16xf32>
    %cst_25 = arith.constant 0.000000e+00 : f32
    %79 = vector.broadcast %cst_25 : f32 to vector<16x16xf32>
    %80 = arith.cmpf ogt, %78, %79 : vector<16x16xf32>
    %cst_26 = arith.constant 2.000000e-01 : f32
    %81 = vector.broadcast %cst_26 : f32 to vector<16x16xf32>
    %82 = arith.mulf %81, %78 : vector<16x16xf32>
    %83 = arith.select %80, %78, %82 : vector<16x16xi1>, vector<16x16xf32>
    %cst_27 = arith.constant 5.000000e-01 : f32
    %84 = vector.broadcast %cst_27 : f32 to vector<16x16xf32>
    %85 = arith.cmpf ogt, %0, %84 : vector<16x16xf32>
    %cst_28 = arith.constant -1.000000e+30 : f32
    %86 = vector.broadcast %cst_28 : f32 to vector<16x16xf32>
    %87 = arith.select %85, %83, %86 : vector<16x16xi1>, vector<16x16xf32>
    %cst_29 = arith.constant dense<0xFF800000> : vector<16xf32>
    %88 = vector.multi_reduction <maximumf>, %87, %cst_29 [1] : vector<16x16xf32> to vector<16xf32>
    %89 = vector.shape_cast %88 : vector<16xf32> to vector<16x1xf32>
    %90 = vector.broadcast %89 : vector<16x1xf32> to vector<16x16xf32>
    %91 = arith.subf %87, %90 : vector<16x16xf32>
    %92 = math.exp %91 : vector<16x16xf32>
    %cst_30 = arith.constant dense<0.000000e+00> : vector<16xf32>
    %93 = vector.multi_reduction <add>, %92, %cst_30 [1] : vector<16x16xf32> to vector<16xf32>
    %94 = vector.shape_cast %93 : vector<16xf32> to vector<16x1xf32>
    %95 = tpu.reciprocal %94 {approx = true} : vector<16x1xf32> -> vector<16x1xf32>
    %96 = vector.broadcast %95 : vector<16x1xf32> to vector<16x16xf32>
    %97 = arith.mulf %92, %96 : vector<16x16xf32>
    %98 = vector.extract_strided_slice %71 {offsets = [0, 128], sizes = [16, 16], strides = [1, 1]} : vector<16x256xf32> to vector<16x16xf32>
    %99 = vector.extract_strided_slice %71 {offsets = [0, 144], sizes = [16, 1], strides = [1, 1]} : vector<16x256xf32> to vector<16x1xf32>
    %100 = vector.extract_strided_slice %71 {offsets = [0, 145], sizes = [16, 1], strides = [1, 1]} : vector<16x256xf32> to vector<16x1xf32>
    %101 = tpu.transpose %99, [1, 0] : vector<16x1xf32> -> vector<1x16xf32>
    %102 = vector.broadcast %100 : vector<16x1xf32> to vector<16x16xf32>
    %103 = vector.broadcast %101 : vector<1x16xf32> to vector<16x16xf32>
    %104 = arith.addf %102, %103 : vector<16x16xf32>
    %cst_31 = arith.constant 0.000000e+00 : f32
    %105 = vector.broadcast %cst_31 : f32 to vector<16x16xf32>
    %106 = arith.cmpf ogt, %104, %105 : vector<16x16xf32>
    %cst_32 = arith.constant 2.000000e-01 : f32
    %107 = vector.broadcast %cst_32 : f32 to vector<16x16xf32>
    %108 = arith.mulf %107, %104 : vector<16x16xf32>
    %109 = arith.select %106, %104, %108 : vector<16x16xi1>, vector<16x16xf32>
    %cst_33 = arith.constant 5.000000e-01 : f32
    %110 = vector.broadcast %cst_33 : f32 to vector<16x16xf32>
    %111 = arith.cmpf ogt, %0, %110 : vector<16x16xf32>
    %cst_34 = arith.constant -1.000000e+30 : f32
    %112 = vector.broadcast %cst_34 : f32 to vector<16x16xf32>
    %113 = arith.select %111, %109, %112 : vector<16x16xi1>, vector<16x16xf32>
    %cst_35 = arith.constant dense<0xFF800000> : vector<16xf32>
    %114 = vector.multi_reduction <maximumf>, %113, %cst_35 [1] : vector<16x16xf32> to vector<16xf32>
    %115 = vector.shape_cast %114 : vector<16xf32> to vector<16x1xf32>
    %116 = vector.broadcast %115 : vector<16x1xf32> to vector<16x16xf32>
    %117 = arith.subf %113, %116 : vector<16x16xf32>
    %118 = math.exp %117 : vector<16x16xf32>
    %cst_36 = arith.constant dense<0.000000e+00> : vector<16xf32>
    %119 = vector.multi_reduction <add>, %118, %cst_36 [1] : vector<16x16xf32> to vector<16xf32>
    %120 = vector.shape_cast %119 : vector<16xf32> to vector<16x1xf32>
    %121 = tpu.reciprocal %120 {approx = true} : vector<16x1xf32> -> vector<16x1xf32>
    %122 = vector.broadcast %121 : vector<16x1xf32> to vector<16x16xf32>
    %123 = arith.mulf %118, %122 : vector<16x16xf32>
    %124 = tpu.concatenate %97, %123 in 1 : vector<16x16xf32>, vector<16x16xf32> -> vector<16x32xf32>
    %125 = arith.truncf %124 : vector<16x32xf32> to vector<16x32xbf16>
    %126 = tpu.concatenate %72, %98 in 0 : vector<16x16xf32>, vector<16x16xf32> -> vector<32x16xf32>
    %127 = arith.truncf %126 : vector<32x16xf32> to vector<32x16xbf16>
    %cst_37 = arith.constant dense<0.000000e+00> : vector<16x16xf32>
    %128 = tpu.matmul %125, %127, %cst_37 {dimension_numbers = #tpu.dot_dimension_numbers<[1], [0], [0], [1], [0, 0, 1, 1], [], []>} : vector<16x32xbf16>, vector<32x16xbf16>, vector<16x16xf32> -> vector<16x16xf32>
    %cst_38 = arith.constant 5.000000e-01 : f32
    %129 = vector.broadcast %cst_38 : f32 to vector<16x16xf32>
    %130 = arith.mulf %128, %129 : vector<16x16xf32>
    %c0_39 = arith.constant 0 : index
    %c0_40 = arith.constant 0 : index
    %131 = vector.load %arg5[%c0_39, %c0_40] : memref<1x16xf32, #tpu.memory_space<vmem>>, vector<1x16xf32>
    %132 = vector.broadcast %131 : vector<1x16xf32> to vector<16x16xf32>
    %133 = arith.addf %130, %132 : vector<16x16xf32>
    %cst_41 = arith.constant 0.000000e+00 : f32
    %134 = vector.broadcast %cst_41 : f32 to vector<16x16xf32>
    %135 = arith.maximumf %133, %134 : vector<16x16xf32>
    %136 = arith.truncf %135 : vector<16x16xf32> to vector<16x16xbf16>
    %c0_42 = arith.constant 0 : index
    %c0_43 = arith.constant 0 : index
    %137 = vector.load %arg6[%c0_42, %c0_43] : memref<16x256xbf16, #tpu.memory_space<vmem>>, vector<16x256xbf16>
    %cst_44 = arith.constant dense<0.000000e+00> : vector<16x256xf32>
    %138 = tpu.matmul %136, %137, %cst_44 {dimension_numbers = #tpu.dot_dimension_numbers<[1], [0], [0], [1], [0, 0, 1, 1], [], []>} : vector<16x16xbf16>, vector<16x256xbf16>, vector<16x256xf32> -> vector<16x256xf32>
    %139 = vector.extract_strided_slice %138 {offsets = [0, 0], sizes = [16, 32], strides = [1, 1]} : vector<16x256xf32> to vector<16x32xf32>
    %140 = vector.extract_strided_slice %138 {offsets = [0, 32], sizes = [16, 1], strides = [1, 1]} : vector<16x256xf32> to vector<16x1xf32>
    %141 = vector.extract_strided_slice %138 {offsets = [0, 33], sizes = [16, 1], strides = [1, 1]} : vector<16x256xf32> to vector<16x1xf32>
    %142 = tpu.transpose %140, [1, 0] : vector<16x1xf32> -> vector<1x16xf32>
    %143 = vector.broadcast %141 : vector<16x1xf32> to vector<16x16xf32>
    %144 = vector.broadcast %142 : vector<1x16xf32> to vector<16x16xf32>
    %145 = arith.addf %143, %144 : vector<16x16xf32>
    %cst_45 = arith.constant 0.000000e+00 : f32
    %146 = vector.broadcast %cst_45 : f32 to vector<16x16xf32>
    %147 = arith.cmpf ogt, %145, %146 : vector<16x16xf32>
    %cst_46 = arith.constant 2.000000e-01 : f32
    %148 = vector.broadcast %cst_46 : f32 to vector<16x16xf32>
    %149 = arith.mulf %148, %145 : vector<16x16xf32>
    %150 = arith.select %147, %145, %149 : vector<16x16xi1>, vector<16x16xf32>
    %cst_47 = arith.constant 5.000000e-01 : f32
    %151 = vector.broadcast %cst_47 : f32 to vector<16x16xf32>
    %152 = arith.cmpf ogt, %0, %151 : vector<16x16xf32>
    %cst_48 = arith.constant -1.000000e+30 : f32
    %153 = vector.broadcast %cst_48 : f32 to vector<16x16xf32>
    %154 = arith.select %152, %150, %153 : vector<16x16xi1>, vector<16x16xf32>
    %cst_49 = arith.constant dense<0xFF800000> : vector<16xf32>
    %155 = vector.multi_reduction <maximumf>, %154, %cst_49 [1] : vector<16x16xf32> to vector<16xf32>
    %156 = vector.shape_cast %155 : vector<16xf32> to vector<16x1xf32>
    %157 = vector.broadcast %156 : vector<16x1xf32> to vector<16x16xf32>
    %158 = arith.subf %154, %157 : vector<16x16xf32>
    %159 = math.exp %158 : vector<16x16xf32>
    %cst_50 = arith.constant dense<0.000000e+00> : vector<16xf32>
    %160 = vector.multi_reduction <add>, %159, %cst_50 [1] : vector<16x16xf32> to vector<16xf32>
    %161 = vector.shape_cast %160 : vector<16xf32> to vector<16x1xf32>
    %162 = tpu.reciprocal %161 {approx = true} : vector<16x1xf32> -> vector<16x1xf32>
    %163 = vector.broadcast %162 : vector<16x1xf32> to vector<16x16xf32>
    %164 = arith.mulf %159, %163 : vector<16x16xf32>
    %165 = vector.extract_strided_slice %138 {offsets = [0, 128], sizes = [16, 32], strides = [1, 1]} : vector<16x256xf32> to vector<16x32xf32>
    %166 = vector.extract_strided_slice %138 {offsets = [0, 160], sizes = [16, 1], strides = [1, 1]} : vector<16x256xf32> to vector<16x1xf32>
    %167 = vector.extract_strided_slice %138 {offsets = [0, 161], sizes = [16, 1], strides = [1, 1]} : vector<16x256xf32> to vector<16x1xf32>
    %168 = tpu.transpose %166, [1, 0] : vector<16x1xf32> -> vector<1x16xf32>
    %169 = vector.broadcast %167 : vector<16x1xf32> to vector<16x16xf32>
    %170 = vector.broadcast %168 : vector<1x16xf32> to vector<16x16xf32>
    %171 = arith.addf %169, %170 : vector<16x16xf32>
    %cst_51 = arith.constant 0.000000e+00 : f32
    %172 = vector.broadcast %cst_51 : f32 to vector<16x16xf32>
    %173 = arith.cmpf ogt, %171, %172 : vector<16x16xf32>
    %cst_52 = arith.constant 2.000000e-01 : f32
    %174 = vector.broadcast %cst_52 : f32 to vector<16x16xf32>
    %175 = arith.mulf %174, %171 : vector<16x16xf32>
    %176 = arith.select %173, %171, %175 : vector<16x16xi1>, vector<16x16xf32>
    %cst_53 = arith.constant 5.000000e-01 : f32
    %177 = vector.broadcast %cst_53 : f32 to vector<16x16xf32>
    %178 = arith.cmpf ogt, %0, %177 : vector<16x16xf32>
    %cst_54 = arith.constant -1.000000e+30 : f32
    %179 = vector.broadcast %cst_54 : f32 to vector<16x16xf32>
    %180 = arith.select %178, %176, %179 : vector<16x16xi1>, vector<16x16xf32>
    %cst_55 = arith.constant dense<0xFF800000> : vector<16xf32>
    %181 = vector.multi_reduction <maximumf>, %180, %cst_55 [1] : vector<16x16xf32> to vector<16xf32>
    %182 = vector.shape_cast %181 : vector<16xf32> to vector<16x1xf32>
    %183 = vector.broadcast %182 : vector<16x1xf32> to vector<16x16xf32>
    %184 = arith.subf %180, %183 : vector<16x16xf32>
    %185 = math.exp %184 : vector<16x16xf32>
    %cst_56 = arith.constant dense<0.000000e+00> : vector<16xf32>
    %186 = vector.multi_reduction <add>, %185, %cst_56 [1] : vector<16x16xf32> to vector<16xf32>
    %187 = vector.shape_cast %186 : vector<16xf32> to vector<16x1xf32>
    %188 = tpu.reciprocal %187 {approx = true} : vector<16x1xf32> -> vector<16x1xf32>
    %189 = vector.broadcast %188 : vector<16x1xf32> to vector<16x16xf32>
    %190 = arith.mulf %185, %189 : vector<16x16xf32>
    %191 = tpu.concatenate %164, %190 in 1 : vector<16x16xf32>, vector<16x16xf32> -> vector<16x32xf32>
    %192 = arith.truncf %191 : vector<16x32xf32> to vector<16x32xbf16>
    %193 = tpu.concatenate %139, %165 in 0 : vector<16x32xf32>, vector<16x32xf32> -> vector<32x32xf32>
    %194 = arith.truncf %193 : vector<32x32xf32> to vector<32x32xbf16>
    %cst_57 = arith.constant dense<0.000000e+00> : vector<16x32xf32>
    %195 = tpu.matmul %192, %194, %cst_57 {dimension_numbers = #tpu.dot_dimension_numbers<[1], [0], [0], [1], [0, 0, 1, 1], [], []>} : vector<16x32xbf16>, vector<32x32xbf16>, vector<16x32xf32> -> vector<16x32xf32>
    %cst_58 = arith.constant 5.000000e-01 : f32
    %196 = vector.broadcast %cst_58 : f32 to vector<16x32xf32>
    %197 = arith.mulf %195, %196 : vector<16x32xf32>
    %c0_59 = arith.constant 0 : index
    %c0_60 = arith.constant 0 : index
    %198 = vector.load %arg7[%c0_59, %c0_60] : memref<1x32xf32, #tpu.memory_space<vmem>>, vector<1x32xf32>
    %199 = vector.broadcast %198 : vector<1x32xf32> to vector<16x32xf32>
    %200 = arith.addf %197, %199 : vector<16x32xf32>
    %cst_61 = arith.constant 0.000000e+00 : f32
    %201 = vector.broadcast %cst_61 : f32 to vector<16x32xf32>
    %202 = arith.maximumf %200, %201 : vector<16x32xf32>
    %203 = arith.truncf %202 : vector<16x32xf32> to vector<16x32xbf16>
    %c0_62 = arith.constant 0 : index
    %c0_63 = arith.constant 0 : index
    %204 = vector.load %arg8[%c0_62, %c0_63] : memref<32x256xbf16, #tpu.memory_space<vmem>>, vector<32x256xbf16>
    %cst_64 = arith.constant dense<0.000000e+00> : vector<16x256xf32>
    %205 = tpu.matmul %203, %204, %cst_64 {dimension_numbers = #tpu.dot_dimension_numbers<[1], [0], [0], [1], [0, 0, 1, 1], [], []>} : vector<16x32xbf16>, vector<32x256xbf16>, vector<16x256xf32> -> vector<16x256xf32>
    %206 = vector.extract_strided_slice %205 {offsets = [0, 0], sizes = [16, 64], strides = [1, 1]} : vector<16x256xf32> to vector<16x64xf32>
    %207 = vector.extract_strided_slice %205 {offsets = [0, 64], sizes = [16, 1], strides = [1, 1]} : vector<16x256xf32> to vector<16x1xf32>
    %208 = vector.extract_strided_slice %205 {offsets = [0, 65], sizes = [16, 1], strides = [1, 1]} : vector<16x256xf32> to vector<16x1xf32>
    %209 = tpu.transpose %207, [1, 0] : vector<16x1xf32> -> vector<1x16xf32>
    %210 = vector.broadcast %208 : vector<16x1xf32> to vector<16x16xf32>
    %211 = vector.broadcast %209 : vector<1x16xf32> to vector<16x16xf32>
    %212 = arith.addf %210, %211 : vector<16x16xf32>
    %cst_65 = arith.constant 0.000000e+00 : f32
    %213 = vector.broadcast %cst_65 : f32 to vector<16x16xf32>
    %214 = arith.cmpf ogt, %212, %213 : vector<16x16xf32>
    %cst_66 = arith.constant 2.000000e-01 : f32
    %215 = vector.broadcast %cst_66 : f32 to vector<16x16xf32>
    %216 = arith.mulf %215, %212 : vector<16x16xf32>
    %217 = arith.select %214, %212, %216 : vector<16x16xi1>, vector<16x16xf32>
    %cst_67 = arith.constant 5.000000e-01 : f32
    %218 = vector.broadcast %cst_67 : f32 to vector<16x16xf32>
    %219 = arith.cmpf ogt, %0, %218 : vector<16x16xf32>
    %cst_68 = arith.constant -1.000000e+30 : f32
    %220 = vector.broadcast %cst_68 : f32 to vector<16x16xf32>
    %221 = arith.select %219, %217, %220 : vector<16x16xi1>, vector<16x16xf32>
    %cst_69 = arith.constant dense<0xFF800000> : vector<16xf32>
    %222 = vector.multi_reduction <maximumf>, %221, %cst_69 [1] : vector<16x16xf32> to vector<16xf32>
    %223 = vector.shape_cast %222 : vector<16xf32> to vector<16x1xf32>
    %224 = vector.broadcast %223 : vector<16x1xf32> to vector<16x16xf32>
    %225 = arith.subf %221, %224 : vector<16x16xf32>
    %226 = math.exp %225 : vector<16x16xf32>
    %cst_70 = arith.constant dense<0.000000e+00> : vector<16xf32>
    %227 = vector.multi_reduction <add>, %226, %cst_70 [1] : vector<16x16xf32> to vector<16xf32>
    %228 = vector.shape_cast %227 : vector<16xf32> to vector<16x1xf32>
    %229 = tpu.reciprocal %228 {approx = true} : vector<16x1xf32> -> vector<16x1xf32>
    %230 = vector.broadcast %229 : vector<16x1xf32> to vector<16x16xf32>
    %231 = arith.mulf %226, %230 : vector<16x16xf32>
    %232 = vector.extract_strided_slice %205 {offsets = [0, 128], sizes = [16, 64], strides = [1, 1]} : vector<16x256xf32> to vector<16x64xf32>
    %233 = vector.extract_strided_slice %205 {offsets = [0, 192], sizes = [16, 1], strides = [1, 1]} : vector<16x256xf32> to vector<16x1xf32>
    %234 = vector.extract_strided_slice %205 {offsets = [0, 193], sizes = [16, 1], strides = [1, 1]} : vector<16x256xf32> to vector<16x1xf32>
    %235 = tpu.transpose %233, [1, 0] : vector<16x1xf32> -> vector<1x16xf32>
    %236 = vector.broadcast %234 : vector<16x1xf32> to vector<16x16xf32>
    %237 = vector.broadcast %235 : vector<1x16xf32> to vector<16x16xf32>
    %238 = arith.addf %236, %237 : vector<16x16xf32>
    %cst_71 = arith.constant 0.000000e+00 : f32
    %239 = vector.broadcast %cst_71 : f32 to vector<16x16xf32>
    %240 = arith.cmpf ogt, %238, %239 : vector<16x16xf32>
    %cst_72 = arith.constant 2.000000e-01 : f32
    %241 = vector.broadcast %cst_72 : f32 to vector<16x16xf32>
    %242 = arith.mulf %241, %238 : vector<16x16xf32>
    %243 = arith.select %240, %238, %242 : vector<16x16xi1>, vector<16x16xf32>
    %cst_73 = arith.constant 5.000000e-01 : f32
    %244 = vector.broadcast %cst_73 : f32 to vector<16x16xf32>
    %245 = arith.cmpf ogt, %0, %244 : vector<16x16xf32>
    %cst_74 = arith.constant -1.000000e+30 : f32
    %246 = vector.broadcast %cst_74 : f32 to vector<16x16xf32>
    %247 = arith.select %245, %243, %246 : vector<16x16xi1>, vector<16x16xf32>
    %cst_75 = arith.constant dense<0xFF800000> : vector<16xf32>
    %248 = vector.multi_reduction <maximumf>, %247, %cst_75 [1] : vector<16x16xf32> to vector<16xf32>
    %249 = vector.shape_cast %248 : vector<16xf32> to vector<16x1xf32>
    %250 = vector.broadcast %249 : vector<16x1xf32> to vector<16x16xf32>
    %251 = arith.subf %247, %250 : vector<16x16xf32>
    %252 = math.exp %251 : vector<16x16xf32>
    %cst_76 = arith.constant dense<0.000000e+00> : vector<16xf32>
    %253 = vector.multi_reduction <add>, %252, %cst_76 [1] : vector<16x16xf32> to vector<16xf32>
    %254 = vector.shape_cast %253 : vector<16xf32> to vector<16x1xf32>
    %255 = tpu.reciprocal %254 {approx = true} : vector<16x1xf32> -> vector<16x1xf32>
    %256 = vector.broadcast %255 : vector<16x1xf32> to vector<16x16xf32>
    %257 = arith.mulf %252, %256 : vector<16x16xf32>
    %258 = tpu.concatenate %231, %257 in 1 : vector<16x16xf32>, vector<16x16xf32> -> vector<16x32xf32>
    %259 = arith.truncf %258 : vector<16x32xf32> to vector<16x32xbf16>
    %260 = tpu.concatenate %206, %232 in 0 : vector<16x64xf32>, vector<16x64xf32> -> vector<32x64xf32>
    %261 = arith.truncf %260 : vector<32x64xf32> to vector<32x64xbf16>
    %cst_77 = arith.constant dense<0.000000e+00> : vector<16x64xf32>
    %262 = tpu.matmul %259, %261, %cst_77 {dimension_numbers = #tpu.dot_dimension_numbers<[1], [0], [0], [1], [0, 0, 1, 1], [], []>} : vector<16x32xbf16>, vector<32x64xbf16>, vector<16x64xf32> -> vector<16x64xf32>
    %cst_78 = arith.constant 5.000000e-01 : f32
    %263 = vector.broadcast %cst_78 : f32 to vector<16x64xf32>
    %264 = arith.mulf %262, %263 : vector<16x64xf32>
    %c0_79 = arith.constant 0 : index
    %c0_80 = arith.constant 0 : index
    %265 = vector.load %arg9[%c0_79, %c0_80] : memref<1x64xf32, #tpu.memory_space<vmem>>, vector<1x64xf32>
    %266 = vector.broadcast %265 : vector<1x64xf32> to vector<16x64xf32>
    %267 = arith.addf %264, %266 : vector<16x64xf32>
    %cst_81 = arith.constant 0.000000e+00 : f32
    %268 = vector.broadcast %cst_81 : f32 to vector<16x64xf32>
    %269 = arith.maximumf %267, %268 : vector<16x64xf32>
    %270 = arith.truncf %269 : vector<16x64xf32> to vector<16x64xbf16>
    %c0_82 = arith.constant 0 : index
    %c0_83 = arith.constant 0 : index
    %271 = vector.load %arg10[%c0_82, %c0_83] : memref<64x512xbf16, #tpu.memory_space<vmem>>, vector<64x512xbf16>
    %cst_84 = arith.constant dense<0.000000e+00> : vector<16x512xf32>
    %272 = tpu.matmul %270, %271, %cst_84 {dimension_numbers = #tpu.dot_dimension_numbers<[1], [0], [0], [1], [0, 0, 1, 1], [], []>} : vector<16x64xbf16>, vector<64x512xbf16>, vector<16x512xf32> -> vector<16x512xf32>
    %273 = vector.extract_strided_slice %272 {offsets = [0, 0], sizes = [16, 128], strides = [1, 1]} : vector<16x512xf32> to vector<16x128xf32>
    %274 = vector.extract_strided_slice %272 {offsets = [0, 128], sizes = [16, 1], strides = [1, 1]} : vector<16x512xf32> to vector<16x1xf32>
    %275 = vector.extract_strided_slice %272 {offsets = [0, 129], sizes = [16, 1], strides = [1, 1]} : vector<16x512xf32> to vector<16x1xf32>
    %276 = tpu.transpose %274, [1, 0] : vector<16x1xf32> -> vector<1x16xf32>
    %277 = vector.broadcast %275 : vector<16x1xf32> to vector<16x16xf32>
    %278 = vector.broadcast %276 : vector<1x16xf32> to vector<16x16xf32>
    %279 = arith.addf %277, %278 : vector<16x16xf32>
    %cst_85 = arith.constant 0.000000e+00 : f32
    %280 = vector.broadcast %cst_85 : f32 to vector<16x16xf32>
    %281 = arith.cmpf ogt, %279, %280 : vector<16x16xf32>
    %cst_86 = arith.constant 2.000000e-01 : f32
    %282 = vector.broadcast %cst_86 : f32 to vector<16x16xf32>
    %283 = arith.mulf %282, %279 : vector<16x16xf32>
    %284 = arith.select %281, %279, %283 : vector<16x16xi1>, vector<16x16xf32>
    %cst_87 = arith.constant 5.000000e-01 : f32
    %285 = vector.broadcast %cst_87 : f32 to vector<16x16xf32>
    %286 = arith.cmpf ogt, %0, %285 : vector<16x16xf32>
    %cst_88 = arith.constant -1.000000e+30 : f32
    %287 = vector.broadcast %cst_88 : f32 to vector<16x16xf32>
    %288 = arith.select %286, %284, %287 : vector<16x16xi1>, vector<16x16xf32>
    %cst_89 = arith.constant dense<0xFF800000> : vector<16xf32>
    %289 = vector.multi_reduction <maximumf>, %288, %cst_89 [1] : vector<16x16xf32> to vector<16xf32>
    %290 = vector.shape_cast %289 : vector<16xf32> to vector<16x1xf32>
    %291 = vector.broadcast %290 : vector<16x1xf32> to vector<16x16xf32>
    %292 = arith.subf %288, %291 : vector<16x16xf32>
    %293 = math.exp %292 : vector<16x16xf32>
    %cst_90 = arith.constant dense<0.000000e+00> : vector<16xf32>
    %294 = vector.multi_reduction <add>, %293, %cst_90 [1] : vector<16x16xf32> to vector<16xf32>
    %295 = vector.shape_cast %294 : vector<16xf32> to vector<16x1xf32>
    %296 = tpu.reciprocal %295 {approx = true} : vector<16x1xf32> -> vector<16x1xf32>
    %297 = vector.broadcast %296 : vector<16x1xf32> to vector<16x16xf32>
    %298 = arith.mulf %293, %297 : vector<16x16xf32>
    %299 = vector.extract_strided_slice %272 {offsets = [0, 256], sizes = [16, 128], strides = [1, 1]} : vector<16x512xf32> to vector<16x128xf32>
    %300 = vector.extract_strided_slice %272 {offsets = [0, 384], sizes = [16, 1], strides = [1, 1]} : vector<16x512xf32> to vector<16x1xf32>
    %301 = vector.extract_strided_slice %272 {offsets = [0, 385], sizes = [16, 1], strides = [1, 1]} : vector<16x512xf32> to vector<16x1xf32>
    %302 = tpu.transpose %300, [1, 0] : vector<16x1xf32> -> vector<1x16xf32>
    %303 = vector.broadcast %301 : vector<16x1xf32> to vector<16x16xf32>
    %304 = vector.broadcast %302 : vector<1x16xf32> to vector<16x16xf32>
    %305 = arith.addf %303, %304 : vector<16x16xf32>
    %cst_91 = arith.constant 0.000000e+00 : f32
    %306 = vector.broadcast %cst_91 : f32 to vector<16x16xf32>
    %307 = arith.cmpf ogt, %305, %306 : vector<16x16xf32>
    %cst_92 = arith.constant 2.000000e-01 : f32
    %308 = vector.broadcast %cst_92 : f32 to vector<16x16xf32>
    %309 = arith.mulf %308, %305 : vector<16x16xf32>
    %310 = arith.select %307, %305, %309 : vector<16x16xi1>, vector<16x16xf32>
    %cst_93 = arith.constant 5.000000e-01 : f32
    %311 = vector.broadcast %cst_93 : f32 to vector<16x16xf32>
    %312 = arith.cmpf ogt, %0, %311 : vector<16x16xf32>
    %cst_94 = arith.constant -1.000000e+30 : f32
    %313 = vector.broadcast %cst_94 : f32 to vector<16x16xf32>
    %314 = arith.select %312, %310, %313 : vector<16x16xi1>, vector<16x16xf32>
    %cst_95 = arith.constant dense<0xFF800000> : vector<16xf32>
    %315 = vector.multi_reduction <maximumf>, %314, %cst_95 [1] : vector<16x16xf32> to vector<16xf32>
    %316 = vector.shape_cast %315 : vector<16xf32> to vector<16x1xf32>
    %317 = vector.broadcast %316 : vector<16x1xf32> to vector<16x16xf32>
    %318 = arith.subf %314, %317 : vector<16x16xf32>
    %319 = math.exp %318 : vector<16x16xf32>
    %cst_96 = arith.constant dense<0.000000e+00> : vector<16xf32>
    %320 = vector.multi_reduction <add>, %319, %cst_96 [1] : vector<16x16xf32> to vector<16xf32>
    %321 = vector.shape_cast %320 : vector<16xf32> to vector<16x1xf32>
    %322 = tpu.reciprocal %321 {approx = true} : vector<16x1xf32> -> vector<16x1xf32>
    %323 = vector.broadcast %322 : vector<16x1xf32> to vector<16x16xf32>
    %324 = arith.mulf %319, %323 : vector<16x16xf32>
    %325 = tpu.concatenate %298, %324 in 1 : vector<16x16xf32>, vector<16x16xf32> -> vector<16x32xf32>
    %326 = arith.truncf %325 : vector<16x32xf32> to vector<16x32xbf16>
    %327 = tpu.concatenate %273, %299 in 0 : vector<16x128xf32>, vector<16x128xf32> -> vector<32x128xf32>
    %328 = arith.truncf %327 : vector<32x128xf32> to vector<32x128xbf16>
    %cst_97 = arith.constant dense<0.000000e+00> : vector<16x128xf32>
    %329 = tpu.matmul %326, %328, %cst_97 {dimension_numbers = #tpu.dot_dimension_numbers<[1], [0], [0], [1], [0, 0, 1, 1], [], []>} : vector<16x32xbf16>, vector<32x128xbf16>, vector<16x128xf32> -> vector<16x128xf32>
    %cst_98 = arith.constant 5.000000e-01 : f32
    %330 = vector.broadcast %cst_98 : f32 to vector<16x128xf32>
    %331 = arith.mulf %329, %330 : vector<16x128xf32>
    %c0_99 = arith.constant 0 : index
    %c0_100 = arith.constant 0 : index
    %332 = vector.load %arg11[%c0_99, %c0_100] : memref<1x128xf32, #tpu.memory_space<vmem>>, vector<1x128xf32>
    %333 = vector.broadcast %332 : vector<1x128xf32> to vector<16x128xf32>
    %334 = arith.addf %331, %333 : vector<16x128xf32>
    %cst_101 = arith.constant 0.000000e+00 : f32
    %335 = vector.broadcast %cst_101 : f32 to vector<16x128xf32>
    %336 = arith.maximumf %334, %335 : vector<16x128xf32>
    %337 = arith.truncf %336 : vector<16x128xf32> to vector<16x128xbf16>
    %c0_102 = arith.constant 0 : index
    %c0_103 = arith.constant 0 : index
    %338 = vector.load %arg12[%c0_102, %c0_103] : memref<128x768xbf16, #tpu.memory_space<vmem>>, vector<128x768xbf16>
    %cst_104 = arith.constant dense<0.000000e+00> : vector<16x768xf32>
    %339 = tpu.matmul %337, %338, %cst_104 {dimension_numbers = #tpu.dot_dimension_numbers<[1], [0], [0], [1], [0, 0, 1, 1], [], []>} : vector<16x128xbf16>, vector<128x768xbf16>, vector<16x768xf32> -> vector<16x768xf32>
    %340 = vector.extract_strided_slice %339 {offsets = [0, 0], sizes = [16, 256], strides = [1, 1]} : vector<16x768xf32> to vector<16x256xf32>
    %341 = vector.extract_strided_slice %339 {offsets = [0, 256], sizes = [16, 1], strides = [1, 1]} : vector<16x768xf32> to vector<16x1xf32>
    %342 = vector.extract_strided_slice %339 {offsets = [0, 257], sizes = [16, 1], strides = [1, 1]} : vector<16x768xf32> to vector<16x1xf32>
    %343 = tpu.transpose %341, [1, 0] : vector<16x1xf32> -> vector<1x16xf32>
    %344 = vector.broadcast %342 : vector<16x1xf32> to vector<16x16xf32>
    %345 = vector.broadcast %343 : vector<1x16xf32> to vector<16x16xf32>
    %346 = arith.addf %344, %345 : vector<16x16xf32>
    %cst_105 = arith.constant 0.000000e+00 : f32
    %347 = vector.broadcast %cst_105 : f32 to vector<16x16xf32>
    %348 = arith.cmpf ogt, %346, %347 : vector<16x16xf32>
    %cst_106 = arith.constant 2.000000e-01 : f32
    %349 = vector.broadcast %cst_106 : f32 to vector<16x16xf32>
    %350 = arith.mulf %349, %346 : vector<16x16xf32>
    %351 = arith.select %348, %346, %350 : vector<16x16xi1>, vector<16x16xf32>
    %cst_107 = arith.constant 5.000000e-01 : f32
    %352 = vector.broadcast %cst_107 : f32 to vector<16x16xf32>
    %353 = arith.cmpf ogt, %0, %352 : vector<16x16xf32>
    %cst_108 = arith.constant -1.000000e+30 : f32
    %354 = vector.broadcast %cst_108 : f32 to vector<16x16xf32>
    %355 = arith.select %353, %351, %354 : vector<16x16xi1>, vector<16x16xf32>
    %cst_109 = arith.constant dense<0xFF800000> : vector<16xf32>
    %356 = vector.multi_reduction <maximumf>, %355, %cst_109 [1] : vector<16x16xf32> to vector<16xf32>
    %357 = vector.shape_cast %356 : vector<16xf32> to vector<16x1xf32>
    %358 = vector.broadcast %357 : vector<16x1xf32> to vector<16x16xf32>
    %359 = arith.subf %355, %358 : vector<16x16xf32>
    %360 = math.exp %359 : vector<16x16xf32>
    %cst_110 = arith.constant dense<0.000000e+00> : vector<16xf32>
    %361 = vector.multi_reduction <add>, %360, %cst_110 [1] : vector<16x16xf32> to vector<16xf32>
    %362 = vector.shape_cast %361 : vector<16xf32> to vector<16x1xf32>
    %363 = tpu.reciprocal %362 {approx = true} : vector<16x1xf32> -> vector<16x1xf32>
    %364 = vector.broadcast %363 : vector<16x1xf32> to vector<16x16xf32>
    %365 = arith.mulf %360, %364 : vector<16x16xf32>
    %366 = vector.extract_strided_slice %339 {offsets = [0, 384], sizes = [16, 256], strides = [1, 1]} : vector<16x768xf32> to vector<16x256xf32>
    %367 = vector.extract_strided_slice %339 {offsets = [0, 640], sizes = [16, 1], strides = [1, 1]} : vector<16x768xf32> to vector<16x1xf32>
    %368 = vector.extract_strided_slice %339 {offsets = [0, 641], sizes = [16, 1], strides = [1, 1]} : vector<16x768xf32> to vector<16x1xf32>
    %369 = tpu.transpose %367, [1, 0] : vector<16x1xf32> -> vector<1x16xf32>
    %370 = vector.broadcast %368 : vector<16x1xf32> to vector<16x16xf32>
    %371 = vector.broadcast %369 : vector<1x16xf32> to vector<16x16xf32>
    %372 = arith.addf %370, %371 : vector<16x16xf32>
    %cst_111 = arith.constant 0.000000e+00 : f32
    %373 = vector.broadcast %cst_111 : f32 to vector<16x16xf32>
    %374 = arith.cmpf ogt, %372, %373 : vector<16x16xf32>
    %cst_112 = arith.constant 2.000000e-01 : f32
    %375 = vector.broadcast %cst_112 : f32 to vector<16x16xf32>
    %376 = arith.mulf %375, %372 : vector<16x16xf32>
    %377 = arith.select %374, %372, %376 : vector<16x16xi1>, vector<16x16xf32>
    %cst_113 = arith.constant 5.000000e-01 : f32
    %378 = vector.broadcast %cst_113 : f32 to vector<16x16xf32>
    %379 = arith.cmpf ogt, %0, %378 : vector<16x16xf32>
    %cst_114 = arith.constant -1.000000e+30 : f32
    %380 = vector.broadcast %cst_114 : f32 to vector<16x16xf32>
    %381 = arith.select %379, %377, %380 : vector<16x16xi1>, vector<16x16xf32>
    %cst_115 = arith.constant dense<0xFF800000> : vector<16xf32>
    %382 = vector.multi_reduction <maximumf>, %381, %cst_115 [1] : vector<16x16xf32> to vector<16xf32>
    %383 = vector.shape_cast %382 : vector<16xf32> to vector<16x1xf32>
    %384 = vector.broadcast %383 : vector<16x1xf32> to vector<16x16xf32>
    %385 = arith.subf %381, %384 : vector<16x16xf32>
    %386 = math.exp %385 : vector<16x16xf32>
    %cst_116 = arith.constant dense<0.000000e+00> : vector<16xf32>
    %387 = vector.multi_reduction <add>, %386, %cst_116 [1] : vector<16x16xf32> to vector<16xf32>
    %388 = vector.shape_cast %387 : vector<16xf32> to vector<16x1xf32>
    %389 = tpu.reciprocal %388 {approx = true} : vector<16x1xf32> -> vector<16x1xf32>
    %390 = vector.broadcast %389 : vector<16x1xf32> to vector<16x16xf32>
    %391 = arith.mulf %386, %390 : vector<16x16xf32>
    %392 = tpu.concatenate %365, %391 in 1 : vector<16x16xf32>, vector<16x16xf32> -> vector<16x32xf32>
    %393 = arith.truncf %392 : vector<16x32xf32> to vector<16x32xbf16>
    %394 = tpu.concatenate %340, %366 in 0 : vector<16x256xf32>, vector<16x256xf32> -> vector<32x256xf32>
    %395 = arith.truncf %394 : vector<32x256xf32> to vector<32x256xbf16>
    %cst_117 = arith.constant dense<0.000000e+00> : vector<16x256xf32>
    %396 = tpu.matmul %393, %395, %cst_117 {dimension_numbers = #tpu.dot_dimension_numbers<[1], [0], [0], [1], [0, 0, 1, 1], [], []>} : vector<16x32xbf16>, vector<32x256xbf16>, vector<16x256xf32> -> vector<16x256xf32>
    %cst_118 = arith.constant 5.000000e-01 : f32
    %397 = vector.broadcast %cst_118 : f32 to vector<16x256xf32>
    %398 = arith.mulf %396, %397 : vector<16x256xf32>
    %c0_119 = arith.constant 0 : index
    %c0_120 = arith.constant 0 : index
    %399 = vector.load %arg13[%c0_119, %c0_120] : memref<1x256xf32, #tpu.memory_space<vmem>>, vector<1x256xf32>
    %400 = vector.broadcast %399 : vector<1x256xf32> to vector<16x256xf32>
    %401 = arith.addf %398, %400 : vector<16x256xf32>
    %cst_121 = arith.constant 0.000000e+00 : f32
    %402 = vector.broadcast %cst_121 : f32 to vector<16x256xf32>
    %403 = arith.maximumf %401, %402 : vector<16x256xf32>
    %404 = arith.truncf %403 : vector<16x256xf32> to vector<16x256xbf16>
    %c0_122 = arith.constant 0 : index
    %c0_123 = arith.constant 0 : index
    %405 = vector.load %arg14[%c0_122, %c0_123] : memref<256x1280xbf16, #tpu.memory_space<vmem>>, vector<256x1280xbf16>
    %cst_124 = arith.constant dense<0.000000e+00> : vector<16x1280xf32>
    %406 = tpu.matmul %404, %405, %cst_124 {dimension_numbers = #tpu.dot_dimension_numbers<[1], [0], [0], [1], [0, 0, 1, 1], [], []>} : vector<16x256xbf16>, vector<256x1280xbf16>, vector<16x1280xf32> -> vector<16x1280xf32>
    %407 = vector.extract_strided_slice %406 {offsets = [0, 0], sizes = [16, 512], strides = [1, 1]} : vector<16x1280xf32> to vector<16x512xf32>
    %408 = vector.extract_strided_slice %406 {offsets = [0, 512], sizes = [16, 1], strides = [1, 1]} : vector<16x1280xf32> to vector<16x1xf32>
    %409 = vector.extract_strided_slice %406 {offsets = [0, 513], sizes = [16, 1], strides = [1, 1]} : vector<16x1280xf32> to vector<16x1xf32>
    %410 = tpu.transpose %408, [1, 0] : vector<16x1xf32> -> vector<1x16xf32>
    %411 = vector.broadcast %409 : vector<16x1xf32> to vector<16x16xf32>
    %412 = vector.broadcast %410 : vector<1x16xf32> to vector<16x16xf32>
    %413 = arith.addf %411, %412 : vector<16x16xf32>
    %cst_125 = arith.constant 0.000000e+00 : f32
    %414 = vector.broadcast %cst_125 : f32 to vector<16x16xf32>
    %415 = arith.cmpf ogt, %413, %414 : vector<16x16xf32>
    %cst_126 = arith.constant 2.000000e-01 : f32
    %416 = vector.broadcast %cst_126 : f32 to vector<16x16xf32>
    %417 = arith.mulf %416, %413 : vector<16x16xf32>
    %418 = arith.select %415, %413, %417 : vector<16x16xi1>, vector<16x16xf32>
    %cst_127 = arith.constant 5.000000e-01 : f32
    %419 = vector.broadcast %cst_127 : f32 to vector<16x16xf32>
    %420 = arith.cmpf ogt, %0, %419 : vector<16x16xf32>
    %cst_128 = arith.constant -1.000000e+30 : f32
    %421 = vector.broadcast %cst_128 : f32 to vector<16x16xf32>
    %422 = arith.select %420, %418, %421 : vector<16x16xi1>, vector<16x16xf32>
    %cst_129 = arith.constant dense<0xFF800000> : vector<16xf32>
    %423 = vector.multi_reduction <maximumf>, %422, %cst_129 [1] : vector<16x16xf32> to vector<16xf32>
    %424 = vector.shape_cast %423 : vector<16xf32> to vector<16x1xf32>
    %425 = vector.broadcast %424 : vector<16x1xf32> to vector<16x16xf32>
    %426 = arith.subf %422, %425 : vector<16x16xf32>
    %427 = math.exp %426 : vector<16x16xf32>
    %cst_130 = arith.constant dense<0.000000e+00> : vector<16xf32>
    %428 = vector.multi_reduction <add>, %427, %cst_130 [1] : vector<16x16xf32> to vector<16xf32>
    %429 = vector.shape_cast %428 : vector<16xf32> to vector<16x1xf32>
    %430 = tpu.reciprocal %429 {approx = true} : vector<16x1xf32> -> vector<16x1xf32>
    %431 = vector.broadcast %430 : vector<16x1xf32> to vector<16x16xf32>
    %432 = arith.mulf %427, %431 : vector<16x16xf32>
    %433 = vector.extract_strided_slice %406 {offsets = [0, 640], sizes = [16, 512], strides = [1, 1]} : vector<16x1280xf32> to vector<16x512xf32>
    %434 = vector.extract_strided_slice %406 {offsets = [0, 1152], sizes = [16, 1], strides = [1, 1]} : vector<16x1280xf32> to vector<16x1xf32>
    %435 = vector.extract_strided_slice %406 {offsets = [0, 1153], sizes = [16, 1], strides = [1, 1]} : vector<16x1280xf32> to vector<16x1xf32>
    %436 = tpu.transpose %434, [1, 0] : vector<16x1xf32> -> vector<1x16xf32>
    %437 = vector.broadcast %435 : vector<16x1xf32> to vector<16x16xf32>
    %438 = vector.broadcast %436 : vector<1x16xf32> to vector<16x16xf32>
    %439 = arith.addf %437, %438 : vector<16x16xf32>
    %cst_131 = arith.constant 0.000000e+00 : f32
    %440 = vector.broadcast %cst_131 : f32 to vector<16x16xf32>
    %441 = arith.cmpf ogt, %439, %440 : vector<16x16xf32>
    %cst_132 = arith.constant 2.000000e-01 : f32
    %442 = vector.broadcast %cst_132 : f32 to vector<16x16xf32>
    %443 = arith.mulf %442, %439 : vector<16x16xf32>
    %444 = arith.select %441, %439, %443 : vector<16x16xi1>, vector<16x16xf32>
    %cst_133 = arith.constant 5.000000e-01 : f32
    %445 = vector.broadcast %cst_133 : f32 to vector<16x16xf32>
    %446 = arith.cmpf ogt, %0, %445 : vector<16x16xf32>
    %cst_134 = arith.constant -1.000000e+30 : f32
    %447 = vector.broadcast %cst_134 : f32 to vector<16x16xf32>
    %448 = arith.select %446, %444, %447 : vector<16x16xi1>, vector<16x16xf32>
    %cst_135 = arith.constant dense<0xFF800000> : vector<16xf32>
    %449 = vector.multi_reduction <maximumf>, %448, %cst_135 [1] : vector<16x16xf32> to vector<16xf32>
    %450 = vector.shape_cast %449 : vector<16xf32> to vector<16x1xf32>
    %451 = vector.broadcast %450 : vector<16x1xf32> to vector<16x16xf32>
    %452 = arith.subf %448, %451 : vector<16x16xf32>
    %453 = math.exp %452 : vector<16x16xf32>
    %cst_136 = arith.constant dense<0.000000e+00> : vector<16xf32>
    %454 = vector.multi_reduction <add>, %453, %cst_136 [1] : vector<16x16xf32> to vector<16xf32>
    %455 = vector.shape_cast %454 : vector<16xf32> to vector<16x1xf32>
    %456 = tpu.reciprocal %455 {approx = true} : vector<16x1xf32> -> vector<16x1xf32>
    %457 = vector.broadcast %456 : vector<16x1xf32> to vector<16x16xf32>
    %458 = arith.mulf %453, %457 : vector<16x16xf32>
    %459 = tpu.concatenate %432, %458 in 1 : vector<16x16xf32>, vector<16x16xf32> -> vector<16x32xf32>
    %460 = arith.truncf %459 : vector<16x32xf32> to vector<16x32xbf16>
    %461 = tpu.concatenate %407, %433 in 0 : vector<16x512xf32>, vector<16x512xf32> -> vector<32x512xf32>
    %462 = arith.truncf %461 : vector<32x512xf32> to vector<32x512xbf16>
    %cst_137 = arith.constant dense<0.000000e+00> : vector<16x512xf32>
    %463 = tpu.matmul %460, %462, %cst_137 {dimension_numbers = #tpu.dot_dimension_numbers<[1], [0], [0], [1], [0, 0, 1, 1], [], []>} : vector<16x32xbf16>, vector<32x512xbf16>, vector<16x512xf32> -> vector<16x512xf32>
    %cst_138 = arith.constant 5.000000e-01 : f32
    %464 = vector.broadcast %cst_138 : f32 to vector<16x512xf32>
    %465 = arith.mulf %463, %464 : vector<16x512xf32>
    %c0_139 = arith.constant 0 : index
    %c0_140 = arith.constant 0 : index
    %466 = vector.load %arg15[%c0_139, %c0_140] : memref<1x512xf32, #tpu.memory_space<vmem>>, vector<1x512xf32>
    %467 = vector.broadcast %466 : vector<1x512xf32> to vector<16x512xf32>
    %468 = arith.addf %465, %467 : vector<16x512xf32>
    %cst_141 = arith.constant 0.000000e+00 : f32
    %469 = vector.broadcast %cst_141 : f32 to vector<16x512xf32>
    %470 = arith.maximumf %468, %469 : vector<16x512xf32>
    %471 = arith.truncf %470 : vector<16x512xf32> to vector<16x512xbf16>
    %c0_142 = arith.constant 0 : index
    %c0_143 = arith.constant 0 : index
    %472 = vector.load %arg16[%c0_142, %c0_143] : memref<512x256xbf16, #tpu.memory_space<vmem>>, vector<512x256xbf16>
    %cst_144 = arith.constant dense<0.000000e+00> : vector<16x256xf32>
    %473 = tpu.matmul %471, %472, %cst_144 {dimension_numbers = #tpu.dot_dimension_numbers<[1], [0], [0], [1], [0, 0, 1, 1], [], []>} : vector<16x512xbf16>, vector<512x256xbf16>, vector<16x256xf32> -> vector<16x256xf32>
    %474 = vector.extract_strided_slice %473 {offsets = [0, 0], sizes = [16, 2], strides = [1, 1]} : vector<16x256xf32> to vector<16x2xf32>
    %475 = vector.extract_strided_slice %473 {offsets = [0, 2], sizes = [16, 1], strides = [1, 1]} : vector<16x256xf32> to vector<16x1xf32>
    %476 = vector.extract_strided_slice %473 {offsets = [0, 3], sizes = [16, 1], strides = [1, 1]} : vector<16x256xf32> to vector<16x1xf32>
    %477 = tpu.transpose %475, [1, 0] : vector<16x1xf32> -> vector<1x16xf32>
    %478 = vector.broadcast %476 : vector<16x1xf32> to vector<16x16xf32>
    %479 = vector.broadcast %477 : vector<1x16xf32> to vector<16x16xf32>
    %480 = arith.addf %478, %479 : vector<16x16xf32>
    %cst_145 = arith.constant 0.000000e+00 : f32
    %481 = vector.broadcast %cst_145 : f32 to vector<16x16xf32>
    %482 = arith.cmpf ogt, %480, %481 : vector<16x16xf32>
    %cst_146 = arith.constant 2.000000e-01 : f32
    %483 = vector.broadcast %cst_146 : f32 to vector<16x16xf32>
    %484 = arith.mulf %483, %480 : vector<16x16xf32>
    %485 = arith.select %482, %480, %484 : vector<16x16xi1>, vector<16x16xf32>
    %cst_147 = arith.constant 5.000000e-01 : f32
    %486 = vector.broadcast %cst_147 : f32 to vector<16x16xf32>
    %487 = arith.cmpf ogt, %0, %486 : vector<16x16xf32>
    %cst_148 = arith.constant -1.000000e+30 : f32
    %488 = vector.broadcast %cst_148 : f32 to vector<16x16xf32>
    %489 = arith.select %487, %485, %488 : vector<16x16xi1>, vector<16x16xf32>
    %cst_149 = arith.constant dense<0xFF800000> : vector<16xf32>
    %490 = vector.multi_reduction <maximumf>, %489, %cst_149 [1] : vector<16x16xf32> to vector<16xf32>
    %491 = vector.shape_cast %490 : vector<16xf32> to vector<16x1xf32>
    %492 = vector.broadcast %491 : vector<16x1xf32> to vector<16x16xf32>
    %493 = arith.subf %489, %492 : vector<16x16xf32>
    %494 = math.exp %493 : vector<16x16xf32>
    %cst_150 = arith.constant dense<0.000000e+00> : vector<16xf32>
    %495 = vector.multi_reduction <add>, %494, %cst_150 [1] : vector<16x16xf32> to vector<16xf32>
    %496 = vector.shape_cast %495 : vector<16xf32> to vector<16x1xf32>
    %497 = tpu.reciprocal %496 {approx = true} : vector<16x1xf32> -> vector<16x1xf32>
    %498 = vector.broadcast %497 : vector<16x1xf32> to vector<16x16xf32>
    %499 = arith.mulf %494, %498 : vector<16x16xf32>
    %500 = vector.extract_strided_slice %473 {offsets = [0, 128], sizes = [16, 2], strides = [1, 1]} : vector<16x256xf32> to vector<16x2xf32>
    %501 = vector.extract_strided_slice %473 {offsets = [0, 130], sizes = [16, 1], strides = [1, 1]} : vector<16x256xf32> to vector<16x1xf32>
    %502 = vector.extract_strided_slice %473 {offsets = [0, 131], sizes = [16, 1], strides = [1, 1]} : vector<16x256xf32> to vector<16x1xf32>
    %503 = tpu.transpose %501, [1, 0] : vector<16x1xf32> -> vector<1x16xf32>
    %504 = vector.broadcast %502 : vector<16x1xf32> to vector<16x16xf32>
    %505 = vector.broadcast %503 : vector<1x16xf32> to vector<16x16xf32>
    %506 = arith.addf %504, %505 : vector<16x16xf32>
    %cst_151 = arith.constant 0.000000e+00 : f32
    %507 = vector.broadcast %cst_151 : f32 to vector<16x16xf32>
    %508 = arith.cmpf ogt, %506, %507 : vector<16x16xf32>
    %cst_152 = arith.constant 2.000000e-01 : f32
    %509 = vector.broadcast %cst_152 : f32 to vector<16x16xf32>
    %510 = arith.mulf %509, %506 : vector<16x16xf32>
    %511 = arith.select %508, %506, %510 : vector<16x16xi1>, vector<16x16xf32>
    %cst_153 = arith.constant 5.000000e-01 : f32
    %512 = vector.broadcast %cst_153 : f32 to vector<16x16xf32>
    %513 = arith.cmpf ogt, %0, %512 : vector<16x16xf32>
    %cst_154 = arith.constant -1.000000e+30 : f32
    %514 = vector.broadcast %cst_154 : f32 to vector<16x16xf32>
    %515 = arith.select %513, %511, %514 : vector<16x16xi1>, vector<16x16xf32>
    %cst_155 = arith.constant dense<0xFF800000> : vector<16xf32>
    %516 = vector.multi_reduction <maximumf>, %515, %cst_155 [1] : vector<16x16xf32> to vector<16xf32>
    %517 = vector.shape_cast %516 : vector<16xf32> to vector<16x1xf32>
    %518 = vector.broadcast %517 : vector<16x1xf32> to vector<16x16xf32>
    %519 = arith.subf %515, %518 : vector<16x16xf32>
    %520 = math.exp %519 : vector<16x16xf32>
    %cst_156 = arith.constant dense<0.000000e+00> : vector<16xf32>
    %521 = vector.multi_reduction <add>, %520, %cst_156 [1] : vector<16x16xf32> to vector<16xf32>
    %522 = vector.shape_cast %521 : vector<16xf32> to vector<16x1xf32>
    %523 = tpu.reciprocal %522 {approx = true} : vector<16x1xf32> -> vector<16x1xf32>
    %524 = vector.broadcast %523 : vector<16x1xf32> to vector<16x16xf32>
    %525 = arith.mulf %520, %524 : vector<16x16xf32>
    %526 = tpu.concatenate %499, %525 in 1 : vector<16x16xf32>, vector<16x16xf32> -> vector<16x32xf32>
    %527 = arith.truncf %526 : vector<16x32xf32> to vector<16x32xbf16>
    %528 = tpu.concatenate %474, %500 in 0 : vector<16x2xf32>, vector<16x2xf32> -> vector<32x2xf32>
    %529 = arith.truncf %528 : vector<32x2xf32> to vector<32x2xbf16>
    %cst_157 = arith.constant dense<0.000000e+00> : vector<16x2xf32>
    %530 = tpu.matmul %527, %529, %cst_157 {dimension_numbers = #tpu.dot_dimension_numbers<[1], [0], [0], [1], [0, 0, 1, 1], [], []>} : vector<16x32xbf16>, vector<32x2xbf16>, vector<16x2xf32> -> vector<16x2xf32>
    %cst_158 = arith.constant 5.000000e-01 : f32
    %531 = vector.broadcast %cst_158 : f32 to vector<16x2xf32>
    %532 = arith.mulf %530, %531 : vector<16x2xf32>
    %c0_159 = arith.constant 0 : index
    %c0_160 = arith.constant 0 : index
    %533 = vector.load %arg17[%c0_159, %c0_160] : memref<1x2xf32, #tpu.memory_space<vmem>>, vector<1x2xf32>
    %534 = vector.broadcast %533 : vector<1x2xf32> to vector<16x2xf32>
    %535 = arith.addf %532, %534 : vector<16x2xf32>
    %cst_161 = arith.constant dense<0xFF800000> : vector<16xf32>
    %536 = vector.multi_reduction <maximumf>, %535, %cst_161 [1] : vector<16x2xf32> to vector<16xf32>
    %537 = vector.shape_cast %536 : vector<16xf32> to vector<16x1xf32>
    %538 = vector.broadcast %537 : vector<16x1xf32> to vector<16x2xf32>
    %539 = arith.subf %535, %538 : vector<16x2xf32>
    %540 = math.exp %539 : vector<16x2xf32>
    %cst_162 = arith.constant dense<0.000000e+00> : vector<16xf32>
    %541 = vector.multi_reduction <add>, %540, %cst_162 [1] : vector<16x2xf32> to vector<16xf32>
    %542 = vector.shape_cast %541 : vector<16xf32> to vector<16x1xf32>
    %543 = tpu.reciprocal %542 : vector<16x1xf32> -> vector<16x1xf32>
    %544 = vector.broadcast %543 : vector<16x1xf32> to vector<16x2xf32>
    %545 = arith.mulf %540, %544 : vector<16x2xf32>
    %c0_163 = arith.constant 0 : index
    %c0_164 = arith.constant 0 : index
    %546 = vector.load %arg18[%c0_163, %c0_164] : memref<16x2xf32, #tpu.memory_space<vmem>>, vector<16x2xf32>
    tpu.vector_store %arg18[%c0_163, %c0_164], %545 {strides = array<i32>} : memref<16x2xf32, #tpu.memory_space<vmem>>, vector<16x2xf32>,
    return
  }
}

</mosaic_0001>

<llo_original>
// kernel: _net_forward_impl.1
$region0: #{_net_forward_impl.1}
  #allocation0 [shape = 'u32[]', space=smem, size = 0x4, offset = 0x4, fixed_abs, tag = 'smem constant byte address 0x4 - core index']
  #allocation1 [shape = 'u32[144,128]{1,0:T(1,128)}', space=vmem, size = 0x12000, scoped, tag = 'internal scratch']
  %s0 = inlined_call_operand.hbm [shape: f32[16,784], index: 0, kind: input, shape index: {}]
  %s1 = inlined_call_operand.hbm [shape: f32[16,16], index: 1, kind: input, shape index: {}]
  %s2 = inlined_call_operand.hbm [shape: bf16[784,256], index: 2, kind: input, shape index: {}]
  %s3 = inlined_call_operand.hbm [shape: f32[1,4], index: 3, kind: input, shape index: {}]
  %s4 = inlined_call_operand.vmem [shape: bf16[4,256], index: 4, kind: input, shape index: {}]
  %s5 = inlined_call_operand.hbm [shape: f32[1,16], index: 5, kind: input, shape index: {}]
  %s6 = inlined_call_operand.vmem [shape: bf16[16,256], index: 6, kind: input, shape index: {}]
  %s7 = inlined_call_operand.hbm [shape: f32[1,32], index: 7, kind: input, shape index: {}]
  %s8 = inlined_call_operand.hbm [shape: bf16[32,256], index: 8, kind: input, shape index: {}]
  %s9 = inlined_call_operand.vmem [shape: f32[1,64], index: 9, kind: input, shape index: {}]
  %s10 = inlined_call_operand.hbm [shape: bf16[64,512], index: 10, kind: input, shape index: {}]
  %s11 = inlined_call_operand.vmem [shape: f32[1,128], index: 11, kind: input, shape index: {}]
  %s12 = inlined_call_operand.hbm [shape: bf16[128,768], index: 12, kind: input, shape index: {}]
  %s13 = inlined_call_operand.vmem [shape: f32[1,256], index: 13, kind: input, shape index: {}]
  %s14 = inlined_call_operand.hbm [shape: bf16[256,1280], index: 14, kind: input, shape index: {}]
  %s15 = inlined_call_operand.vmem [shape: f32[1,512], index: 15, kind: input, shape index: {}]
  %s16 = inlined_call_operand.hbm [shape: bf16[512,256], index: 16, kind: input, shape index: {}]
  %s17 = inlined_call_operand.vmem [shape: f32[1,2], index: 17, kind: input, shape index: {}]
  %s18 = inlined_call_operand.vmem [shape: f32[16,2], index: 18, kind: output, shape index: {}]
  %s19 = sld [smem:[#allocation0]]
  $region126: #{_net_forward_impl.1} parent=0
    _
  %s21 = ssub.s32 1, %s19
  %s22 = scalar_select 0, %s21, %s19
  $region1: #{_net_forward_impl.1} parent=0
    #allocation2 [shape = 'u8[57344]{0}', space=vmem, size = 0xe000, scoped, tag = 'input window, operand 0, single buffered']
    #allocation3 [shape = 's32[1]{0}', space=sflag, size = 0x4, scoped, tag = 'scoped memory for _net_forward_impl.1']
    #allocation4 [shape = 'u8[8192]{0}', space=vmem, size = 0x2000, scoped, tag = 'input window, operand 1, single buffered']
    #allocation5 [shape = 's32[1]{0}', space=sflag, size = 0x4, scoped, tag = 'scoped memory for _net_forward_impl.1']
    #allocation6 [shape = 'u8[401408]{0}', space=vmem, size = 0x62000, scoped, tag = 'input window, operand 2, single buffered']
    #allocation7 [shape = 'u8[512]{0}', space=vmem, size = 0x400, scoped, tag = 'input window, operand 3, single buffered']
    #allocation8 [shape = 's32[1]{0}', space=sflag, size = 0x4, scoped, tag = 'scoped memory for _net_forward_impl.1']
    #allocation9 [shape = 'u8[512]{0}', space=vmem, size = 0x400, scoped, tag = 'input window, operand 5, single buffered']
    #allocation10 [shape = 'u8[512]{0}', space=vmem, size = 0x400, scoped, tag = 'input window, operand 7, single buffered']
    #allocation11 [shape = 's32[1]{0}', space=sflag, size = 0x4, scoped, tag = 'scoped memory for _net_forward_impl.1']
    #allocation12 [shape = 'u8[16384]{0}', space=vmem, size = 0x4000, scoped, tag = 'input window, operand 8, single buffered']
    #allocation13 [shape = 'u8[65536]{0}', space=vmem, size = 0x10000, scoped, tag = 'input window, operand 10, single buffered']
    #allocation14 [shape = 's32[1]{0}', space=sflag, size = 0x4, scoped, tag = 'scoped memory for _net_forward_impl.1']
    #allocation15 [shape = 'u8[196608]{0}', space=vmem, size = 0x30000, scoped, tag = 'input window, operand 12, single buffered']
    #allocation16 [shape = 'u8[655360]{0}', space=vmem, size = 0xa0000, scoped, tag = 'input window, operand 14, single buffered']
    #allocation17 [shape = 's32[1]{0}', space=sflag, size = 0x4, scoped, tag = 'scoped memory for _net_forward_impl.1']
    #allocation18 [shape = 'u8[262144]{0}', space=vmem, size = 0x40000, scoped, tag = 'input window, operand 16, single buffered']
    %23 = vsyncpa [#allocation3], 0
    %24 = vsyncpa [#allocation5], 0
    %25 = vsyncpa [#allocation8], 0
    %26 = vsyncpa [#allocation11], 0
    %27 = vsyncpa [#allocation14], 0
    %28 = vsyncpa [#allocation17], 0
    // Predicated region
    $region2: #{_net_forward_impl.1} parent=1 // pred_check
      _
    $region3: #{_net_forward_impl.1} parent=1 // pred_check_branch
      %30 = sbr.rel (0) target = $region5
    $region4: #{_net_forward_impl.1} parent=1 // pred_region
      %s32 = ssub.s32 1792, 1792
      %33 = vsyncadd [#allocation3], %s32
      %s34 = sshll.u32 [#allocation2], 4
      %s35 = int_to_ptr.vmem [resolvable:$true] %s34
      %40 = dma.hbm_to_vmem [thread:$0]  %s0, 1792, %s35, [#allocation3], 896, 896, 56
    $region5: #{_net_forward_impl.1} parent=1 // pred_fallthru
      _
    // Predicated region
    $region6: #{_net_forward_impl.1} parent=1 // pred_check
      _
    $region7: #{_net_forward_impl.1} parent=1 // pred_check_branch
      %42 = sbr.rel (0) target = $region9
    $region8: #{_net_forward_impl.1} parent=1 // pred_region
      %s44 = ssub.s32 256, 256
      %45 = vsyncadd [#allocation5], %s44
      %s46 = sshll.u32 [#allocation4], 4
      %s47 = int_to_ptr.vmem [resolvable:$true] %s46
      %52 = dma.hbm_to_vmem [thread:$0]  %s1, 256, %s47, [#allocation5], 128, 128, 8
    $region9: #{_net_forward_impl.1} parent=1 // pred_fallthru
      _
    // Predicated region
    $region10: #{_net_forward_impl.1} parent=1 // pred_check
      _
    $region11: #{_net_forward_impl.1} parent=1 // pred_check_branch
      %54 = sbr.rel (0) target = $region13
    $region12: #{_net_forward_impl.1} parent=1 // pred_region
      %s56 = ssub.s32 12544, 12544
      %57 = vsyncadd [#allocation5], %s56
      %s58 = sshll.u32 [#allocation6], 4
      %s59 = int_to_ptr.vmem [resolvable:$true] %s58
      %64 = dma.hbm_to_vmem [thread:$0]  %s2, 12544, %s59, [#allocation5], 128, 128, 8
    $region13: #{_net_forward_impl.1} parent=1 // pred_fallthru
      _
    // Predicated region
    $region14: #{_net_forward_impl.1} parent=1 // pred_check
      _
    $region15: #{_net_forward_impl.1} parent=1 // pred_check_branch
      %66 = sbr.rel (0) target = $region17
    $region16: #{_net_forward_impl.1} parent=1 // pred_region
      %s68 = ssub.s32 16, 16
      %69 = vsyncadd [#allocation8], %s68
      %s71 = sshll.u32 [#allocation7], 4
      %s72 = int_to_ptr.vmem [resolvable:$true] %s71
      %74 = dma.hbm_to_vmem [thread:$0]  %s3, 16, %s72, [#allocation8]
    $region17: #{_net_forward_impl.1} parent=1 // pred_fallthru
      _
    // Predicated region
    $region18: #{_net_forward_impl.1} parent=1 // pred_check
      _
    $region19: #{_net_forward_impl.1} parent=1 // pred_check_branch
      %76 = sbr.rel (0) target = $region21
    $region20: #{_net_forward_impl.1} parent=1 // pred_region
      _
    $region21: #{_net_forward_impl.1} parent=1 // pred_fallthru
      _
    // Predicated region
    $region22: #{_net_forward_impl.1} parent=1 // pred_check
      _
    $region23: #{_net_forward_impl.1} parent=1 // pred_check_branch
      %78 = sbr.rel (0) target = $region25
    $region24: #{_net_forward_impl.1} parent=1 // pred_region
      %s80 = ssub.s32 16, 16
      %81 = vsyncadd [#allocation8], %s80
      %s83 = sshll.u32 [#allocation9], 4
      %s84 = int_to_ptr.vmem [resolvable:$true] %s83
      %86 = dma.hbm_to_vmem [thread:$0]  %s5, 16, %s84, [#allocation8]
    $region25: #{_net_forward_impl.1} parent=1 // pred_fallthru
      _
    // Predicated region
    $region26: #{_net_forward_impl.1} parent=1 // pred_check
      _
    $region27: #{_net_forward_impl.1} parent=1 // pred_check_branch
      %88 = sbr.rel (0) target = $region29
    $region28: #{_net_forward_impl.1} parent=1 // pred_region
      _
    $region29: #{_net_forward_impl.1} parent=1 // pred_fallthru
      _
    // Predicated region
    $region30: #{_net_forward_impl.1} parent=1 // pred_check
      _
    $region31: #{_net_forward_impl.1} parent=1 // pred_check_branch
      %90 = sbr.rel (0) target = $region33
    $region32: #{_net_forward_impl.1} parent=1 // pred_region
      %s92 = ssub.s32 16, 16
      %93 = vsyncadd [#allocation11], %s92
      %s95 = sshll.u32 [#allocation10], 4
      %s96 = int_to_ptr.vmem [resolvable:$true] %s95
      %98 = dma.hbm_to_vmem [thread:$0]  %s7, 16, %s96, [#allocation11]
    $region33: #{_net_forward_impl.1} parent=1 // pred_fallthru
      _
    // Predicated region
    $region34: #{_net_forward_impl.1} parent=1 // pred_check
      _
    $region35: #{_net_forward_impl.1} parent=1 // pred_check_branch
      %100 = sbr.rel (0) target = $region37
    $region36: #{_net_forward_impl.1} parent=1 // pred_region
      %s102 = ssub.s32 512, 512
      %103 = vsyncadd [#allocation11], %s102
      %s104 = sshll.u32 [#allocation12], 4
      %s105 = int_to_ptr.vmem [resolvable:$true] %s104
      %110 = dma.hbm_to_vmem [thread:$0]  %s8, 512, %s105, [#allocation11], 128, 128, 8
    $region37: #{_net_forward_impl.1} parent=1 // pred_fallthru
      _
    // Predicated region
    $region38: #{_net_forward_impl.1} parent=1 // pred_check
      _
    $region39: #{_net_forward_impl.1} parent=1 // pred_check_branch
      %112 = sbr.rel (0) target = $region41
    $region40: #{_net_forward_impl.1} parent=1 // pred_region
      _
    $region41: #{_net_forward_impl.1} parent=1 // pred_fallthru
      _
    // Predicated region
    $region42: #{_net_forward_impl.1} parent=1 // pred_check
      _
    $region43: #{_net_forward_impl.1} parent=1 // pred_check_branch
      %114 = sbr.rel (0) target = $region45
    $region44: #{_net_forward_impl.1} parent=1 // pred_region
      %s116 = ssub.s32 2048, 2048
      %117 = vsyncadd [#allocation14], %s116
      %s118 = sshll.u32 [#allocation13], 4
      %s119 = int_to_ptr.vmem [resolvable:$true] %s118
      %124 = dma.hbm_to_vmem [thread:$0]  %s10, 2048, %s119, [#allocation14], 256, 256, 16
    $region45: #{_net_forward_impl.1} parent=1 // pred_fallthru
      _
    // Predicated region
    $region46: #{_net_forward_impl.1} parent=1 // pred_check
      _
    $region47: #{_net_forward_impl.1} parent=1 // pred_check_branch
      %126 = sbr.rel (0) target = $region49
    $region48: #{_net_forward_impl.1} parent=1 // pred_region
      _
    $region49: #{_net_forward_impl.1} parent=1 // pred_fallthru
      _
    // Predicated region
    $region50: #{_net_forward_impl.1} parent=1 // pred_check
      _
    $region51: #{_net_forward_impl.1} parent=1 // pred_check_branch
      %128 = sbr.rel (0) target = $region53
    $region52: #{_net_forward_impl.1} parent=1 // pred_region
      %s130 = ssub.s32 6144, 6144
      %131 = vsyncadd [#allocation14], %s130
      %s132 = sshll.u32 [#allocation15], 4
      %s133 = int_to_ptr.vmem [resolvable:$true] %s132
      %138 = dma.hbm_to_vmem [thread:$0]  %s12, 6144, %s133, [#allocation14], 384, 384, 24
    $region53: #{_net_forward_impl.1} parent=1 // pred_fallthru
      _
    // Predicated region
    $region54: #{_net_forward_impl.1} parent=1 // pred_check
      _
    $region55: #{_net_forward_impl.1} parent=1 // pred_check_branch
      %140 = sbr.rel (0) target = $region57
    $region56: #{_net_forward_impl.1} parent=1 // pred_region
      _
    $region57: #{_net_forward_impl.1} parent=1 // pred_fallthru
      _
    // Predicated region
    $region58: #{_net_forward_impl.1} parent=1 // pred_check
      _
    $region59: #{_net_forward_impl.1} parent=1 // pred_check_branch
      %142 = sbr.rel (0) target = $region61
    $region60: #{_net_forward_impl.1} parent=1 // pred_region
      %s144 = ssub.s32 20480, 20480
      %145 = vsyncadd [#allocation17], %s144
      %s146 = sshll.u32 [#allocation16], 4
      %s147 = int_to_ptr.vmem [resolvable:$true] %s146
      %152 = dma.hbm_to_vmem [thread:$0]  %s14, 20480, %s147, [#allocation17], 640, 640, 40
    $region61: #{_net_forward_impl.1} parent=1 // pred_fallthru
      _
    // Predicated region
    $region62: #{_net_forward_impl.1} parent=1 // pred_check
      _
    $region63: #{_net_forward_impl.1} parent=1 // pred_check_branch
      %154 = sbr.rel (0) target = $region65
    $region64: #{_net_forward_impl.1} parent=1 // pred_region
      _
    $region65: #{_net_forward_impl.1} parent=1 // pred_fallthru
      _
    // Predicated region
    $region66: #{_net_forward_impl.1} parent=1 // pred_check
      _
    $region67: #{_net_forward_impl.1} parent=1 // pred_check_branch
      %156 = sbr.rel (0) target = $region69
    $region68: #{_net_forward_impl.1} parent=1 // pred_region
      %s158 = ssub.s32 8192, 8192
      %159 = vsyncadd [#allocation17], %s158
      %s160 = sshll.u32 [#allocation18], 4
      %s161 = int_to_ptr.vmem [resolvable:$true] %s160
      %166 = dma.hbm_to_vmem [thread:$0]  %s16, 8192, %s161, [#allocation17], 128, 128, 8
    $region69: #{_net_forward_impl.1} parent=1 // pred_fallthru
      _
    // Predicated region
    $region70: #{_net_forward_impl.1} parent=1 // pred_check
      _
    $region71: #{_net_forward_impl.1} parent=1 // pred_check_branch
      %168 = sbr.rel (0) target = $region73
    $region72: #{_net_forward_impl.1} parent=1 // pred_region
      _
    $region73: #{_net_forward_impl.1} parent=1 // pred_fallthru
      _
    // Predicated region
    $region74: #{_net_forward_impl.1} parent=1 // pred_check
      _
    $region75: #{_net_forward_impl.1} parent=1 // pred_check_branch
      %170 = sbr.rel (0) target = $region77
    $region76: #{_net_forward_impl.1} parent=1 // pred_region
      %171 = dma.done [#allocation3], 1792
    $region77: #{_net_forward_impl.1} parent=1 // pred_fallthru
      _
    // Predicated region
    $region78: #{_net_forward_impl.1} parent=1 // pred_check
      _
    $region79: #{_net_forward_impl.1} parent=1 // pred_check_branch
      %173 = sbr.rel (0) target = $region81
    $region80: #{_net_forward_impl.1} parent=1 // pred_region
      %174 = dma.done [#allocation5], 256
    $region81: #{_net_forward_impl.1} parent=1 // pred_fallthru
      _
    // Predicated region
    $region82: #{_net_forward_impl.1} parent=1 // pred_check
      _
    $region83: #{_net_forward_impl.1} parent=1 // pred_check_branch
      %176 = sbr.rel (0) target = $region85
    $region84: #{_net_forward_impl.1} parent=1 // pred_region
      %177 = dma.done [#allocation5], 12544
    $region85: #{_net_forward_impl.1} parent=1 // pred_fallthru
      _
    // Predicated region
    $region86: #{_net_forward_impl.1} parent=1 // pred_check
      _
    $region87: #{_net_forward_impl.1} parent=1 // pred_check_branch
      %179 = sbr.rel (0) target = $region89
    $region88: #{_net_forward_impl.1} parent=1 // pred_region
      %180 = dma.done [#allocation8], 16
    $region89: #{_net_forward_impl.1} parent=1 // pred_fallthru
      _
    // Predicated region
    $region90: #{_net_forward_impl.1} parent=1 // pred_check
      _
    $region91: #{_net_forward_impl.1} parent=1 // pred_check_branch
      %182 = sbr.rel (0) target = $region93
    $region92: #{_net_forward_impl.1} parent=1 // pred_region
      %183 = dma.done [#allocation8], 16
    $region93: #{_net_forward_impl.1} parent=1 // pred_fallthru
      _
    // Predicated region
    $region94: #{_net_forward_impl.1} parent=1 // pred_check
      _
    $region95: #{_net_forward_impl.1} parent=1 // pred_check_branch
      %185 = sbr.rel (0) target = $region97
    $region96: #{_net_forward_impl.1} parent=1 // pred_region
      %186 = dma.done [#allocation11], 16
    $region97: #{_net_forward_impl.1} parent=1 // pred_fallthru
      _
    // Predicated region
    $region98: #{_net_forward_impl.1} parent=1 // pred_check
      _
    $region99: #{_net_forward_impl.1} parent=1 // pred_check_branch
      %188 = sbr.rel (0) target = $region101
    $region100: #{_net_forward_impl.1} parent=1 // pred_region
      %189 = dma.done [#allocation11], 512
    $region101: #{_net_forward_impl.1} parent=1 // pred_fallthru
      _
    // Predicated region
    $region102: #{_net_forward_impl.1} parent=1 // pred_check
      _
    $region103: #{_net_forward_impl.1} parent=1 // pred_check_branch
      %191 = sbr.rel (0) target = $region105
    $region104: #{_net_forward_impl.1} parent=1 // pred_region
      %192 = dma.done [#allocation14], 2048
    $region105: #{_net_forward_impl.1} parent=1 // pred_fallthru
      _
    // Predicated region
    $region106: #{_net_forward_impl.1} parent=1 // pred_check
      _
    $region107: #{_net_forward_impl.1} parent=1 // pred_check_branch
      %194 = sbr.rel (0) target = $region109
    $region108: #{_net_forward_impl.1} parent=1 // pred_region
      %195 = dma.done [#allocation14], 6144
    $region109: #{_net_forward_impl.1} parent=1 // pred_fallthru
      _
    // Predicated region
    $region110: #{_net_forward_impl.1} parent=1 // pred_check
      _
    $region111: #{_net_forward_impl.1} parent=1 // pred_check_branch
      %197 = sbr.rel (0) target = $region113
    $region112: #{_net_forward_impl.1} parent=1 // pred_region
      %198 = dma.done [#allocation17], 20480
    $region113: #{_net_forward_impl.1} parent=1 // pred_fallthru
      _
    // Predicated region
    $region114: #{_net_forward_impl.1} parent=1 // pred_check
      _
    $region115: #{_net_forward_impl.1} parent=1 // pred_check_branch
      %200 = sbr.rel (0) target = $region117
    $region116: #{_net_forward_impl.1} parent=1 // pred_region
      %201 = dma.done [#allocation17], 8192
    $region117: #{_net_forward_impl.1} parent=1 // pred_fallthru
      _
    %v203 = vld [vmem:[#allocation4] sm:$0xff]
    %v204 = vld [vmem:[#allocation4 + $0x8] sm:$0xff]
    %v205 = vld [vmem:[#allocation2] sm:$0xff]
    %v206 = vld [vmem:[#allocation2 + $0x8] sm:$0xff]
    %v207 = vld [vmem:[#allocation2 + $0x10] sm:$0xff]
    %v208 = vld [vmem:[#allocation2 + $0x18] sm:$0xff]
    %v209 = vld [vmem:[#allocation2 + $0x20] sm:$0xff]
    %v210 = vld [vmem:[#allocation2 + $0x28] sm:$0xff]
    %v211 = vld [vmem:[#allocation2 + $0x30] sm:$0xff]
    %v212 = vld [vmem:[#allocation2 + $0x38] sm:$0xff]
    %v213 = vld [vmem:[#allocation2 + $0x40] sm:$0xff]
    %v214 = vld [vmem:[#allocation2 + $0x48] sm:$0xff]
    %v215 = vld [vmem:[#allocation2 + $0x50] sm:$0xff]
    %v216 = vld [vmem:[#allocation2 + $0x58] sm:$0xff]
    %v217 = vld [vmem:[#allocation2 + $0x60] sm:$0xff]
    %v218 = vld [vmem:[#allocation2 + $0x68] sm:$0xff]
    %v219 = vpack.c.bf16 %v212, %v205
    %v220 = vpack.c.bf16 %v213, %v206
    %v221 = vpack.c.bf16 %v214, %v207
    %v222 = vpack.c.bf16 %v215, %v208
    %v223 = vpack.c.bf16 %v216, %v209
    %v224 = vpack.c.bf16 %v217, %v210
    %v225 = vpack.c.bf16 %v218, %v211
    %v226 = vld [vmem:[#allocation6] sm:$0xff]
    %v227 = vld [vmem:[#allocation6 + $0x8] sm:$0xff]
    %v228 = vld [vmem:[#allocation6 + $0x10] sm:$0xff]
    %v229 = vld [vmem:[#allocation6 + $0x18] sm:$0xff]
    %v230 = vld [vmem:[#allocation6 + $0x20] sm:$0xff]
    %v231 = vld [vmem:[#allocation6 + $0x28] sm:$0xff]
    %v232 = vld [vmem:[#allocation6 + $0x30] sm:$0xff]
    %v233 = vld [vmem:[#allocation6 + $0x38] sm:$0xff]
    %v234 = vld [vmem:[#allocation6 + $0x40] sm:$0xff]
    %v235 = vld [vmem:[#allocation6 + $0x48] sm:$0xff]
    %v236 = vld [vmem:[#allocation6 + $0x50] sm:$0xff]
    %v237 = vld [vmem:[#allocation6 + $0x58] sm:$0xff]
    %v238 = vld [vmem:[#allocation6 + $0x60] sm:$0xff]
    %v239 = vld [vmem:[#allocation6 + $0x68] sm:$0xff]
    %v240 = vld [vmem:[#allocation6 + $0x70] sm:$0xff]
    %v241 = vld [vmem:[#allocation6 + $0x78] sm:$0xff]
    %v242 = vld [vmem:[#allocation6 + $0x80] sm:$0xff]
    %v243 = vld [vmem:[#allocation6 + $0x88] sm:$0xff]
    %v244 = vld [vmem:[#allocation6 + $0x90] sm:$0xff]
    %v245 = vld [vmem:[#allocation6 + $0x98] sm:$0xff]
    %v246 = vld [vmem:[#allocation6 + $0xa0] sm:$0xff]
    %v247 = vld [vmem:[#allocation6 + $0xa8] sm:$0xff]
    %v248 = vld [vmem:[#allocation6 + $0xb0] sm:$0xff]
    %v249 = vld [vmem:[#allocation6 + $0xb8] sm:$0xff]
    %v250 = vld [vmem:[#allocation6 + $0xc0] sm:$0xff]
    %v251 = vld [vmem:[#allocation6 + $0xc8] sm:$0xff]
    %v252 = vld [vmem:[#allocation6 + $0xd0] sm:$0xff]
    %v253 = vld [vmem:[#allocation6 + $0xd8] sm:$0xff]
    %v254 = vld [vmem:[#allocation6 + $0xe0] sm:$0xff]
    %v255 = vld [vmem:[#allocation6 + $0xe8] sm:$0xff]
    %v256 = vld [vmem:[#allocation6 + $0xf0] sm:$0xff]
    %v257 = vld [vmem:[#allocation6 + $0xf8] sm:$0xff]
    %v258 = vld [vmem:[#allocation6 + $0x100] sm:$0xff]
    %v259 = vld [vmem:[#allocation6 + $0x108] sm:$0xff]
    %v260 = vld [vmem:[#allocation6 + $0x110] sm:$0xff]
    %v261 = vld [vmem:[#allocation6 + $0x118] sm:$0xff]
    %v262 = vld [vmem:[#allocation6 + $0x120] sm:$0xff]
    %v263 = vld [vmem:[#allocation6 + $0x128] sm:$0xff]
    %v264 = vld [vmem:[#allocation6 + $0x130] sm:$0xff]
    %v265 = vld [vmem:[#allocation6 + $0x138] sm:$0xff]
    %v266 = vld [vmem:[#allocation6 + $0x140] sm:$0xff]
    %v267 = vld [vmem:[#allocation6 + $0x148] sm:$0xff]
    %v268 = vld [vmem:[#allocation6 + $0x150] sm:$0xff]
    %v269 = vld [vmem:[#allocation6 + $0x158] sm:$0xff]
    %v270 = vld [vmem:[#allocation6 + $0x160] sm:$0xff]
    %v271 = vld [vmem:[#allocation6 + $0x168] sm:$0xff]
    %v272 = vld [vmem:[#allocation6 + $0x170] sm:$0xff]
    %v273 = vld [vmem:[#allocation6 + $0x178] sm:$0xff]
    %v274 = vld [vmem:[#allocation6 + $0x180] sm:$0xff]
    %v275 = vld [vmem:[#allocation6 + $0x188] sm:$0xff]
    %v276 = vld [vmem:[#allocation6 + $0x190] sm:$0xff]
    %v277 = vld [vmem:[#allocation6 + $0x198] sm:$0xff]
    %v278 = vld [vmem:[#allocation6 + $0x1a0] sm:$0xff]
    %v279 = vld [vmem:[#allocation6 + $0x1a8] sm:$0xff]
    %v280 = vld [vmem:[#allocation6 + $0x1b0] sm:$0xff]
    %v281 = vld [vmem:[#allocation6 + $0x1b8] sm:$0xff]
    %v282 = vld [vmem:[#allocation6 + $0x1c0] sm:$0xff]
    %v283 = vld [vmem:[#allocation6 + $0x1c8] sm:$0xff]
    %v284 = vld [vmem:[#allocation6 + $0x1d0] sm:$0xff]
    %v285 = vld [vmem:[#allocation6 + $0x1d8] sm:$0xff]
    %v286 = vld [vmem:[#allocation6 + $0x1e0] sm:$0xff]
    %v287 = vld [vmem:[#allocation6 + $0x1e8] sm:$0xff]
    %v288 = vld [vmem:[#allocation6 + $0x1f0] sm:$0xff]
    %v289 = vld [vmem:[#allocation6 + $0x1f8] sm:$0xff]
    %v290 = vld [vmem:[#allocation6 + $0x200] sm:$0xff]
    %v291 = vld [vmem:[#allocation6 + $0x208] sm:$0xff]
    %v292 = vld [vmem:[#allocation6 + $0x210] sm:$0xff]
    %v293 = vld [vmem:[#allocation6 + $0x218] sm:$0xff]
    %v294 = vld [vmem:[#allocation6 + $0x220] sm:$0xff]
    %v295 = vld [vmem:[#allocation6 + $0x228] sm:$0xff]
    %v296 = vld [vmem:[#allocation6 + $0x230] sm:$0xff]
    %v297 = vld [vmem:[#allocation6 + $0x238] sm:$0xff]
    %v298 = vld [vmem:[#allocation6 + $0x240] sm:$0xff]
    %v299 = vld [vmem:[#allocation6 + $0x248] sm:$0xff]
    %v300 = vld [vmem:[#allocation6 + $0x250] sm:$0xff]
    %v301 = vld [vmem:[#allocation6 + $0x258] sm:$0xff]
    %v302 = vld [vmem:[#allocation6 + $0x260] sm:$0xff]
    %v303 = vld [vmem:[#allocation6 + $0x268] sm:$0xff]
    %v304 = vld [vmem:[#allocation6 + $0x270] sm:$0xff]
    %v305 = vld [vmem:[#allocation6 + $0x278] sm:$0xff]
    %v306 = vld [vmem:[#allocation6 + $0x280] sm:$0xff]
    %v307 = vld [vmem:[#allocation6 + $0x288] sm:$0xff]
    %v308 = vld [vmem:[#allocation6 + $0x290] sm:$0xff]
    %v309 = vld [vmem:[#allocation6 + $0x298] sm:$0xff]
    %v310 = vld [vmem:[#allocation6 + $0x2a0] sm:$0xff]
    %v311 = vld [vmem:[#allocation6 + $0x2a8] sm:$0xff]
    %v312 = vld [vmem:[#allocation6 + $0x2b0] sm:$0xff]
    %v313 = vld [vmem:[#allocation6 + $0x2b8] sm:$0xff]
    %v314 = vld [vmem:[#allocation6 + $0x2c0] sm:$0xff]
    %v315 = vld [vmem:[#allocation6 + $0x2c8] sm:$0xff]
    %v316 = vld [vmem:[#allocation6 + $0x2d0] sm:$0xff]
    %v317 = vld [vmem:[#allocation6 + $0x2d8] sm:$0xff]
    %v318 = vld [vmem:[#allocation6 + $0x2e0] sm:$0xff]
    %v319 = vld [vmem:[#allocation6 + $0x2e8] sm:$0xff]
    %v320 = vld [vmem:[#allocation6 + $0x2f0] sm:$0xff]
    %v321 = vld [vmem:[#allocation6 + $0x2f8] sm:$0xff]
    %v322 = vld [vmem:[#allocation6 + $0x300] sm:$0xff]
    %v323 = vld [vmem:[#allocation6 + $0x308] sm:$0xff]
    %v422 = vunpack.c.l.b16 %v226
    %v423 = vunpack.c.h.b16 %v226
    %v424 = vunpack.c.l.b16 %v227
    %v425 = vunpack.c.h.b16 %v227
    %v426 = vunpack.c.l.b16 %v228
    %v427 = vunpack.c.h.b16 %v228
    %v428 = vunpack.c.l.b16 %v229
    %v429 = vunpack.c.h.b16 %v229
    %v430 = vunpack.c.l.b16 %v230
    %v431 = vunpack.c.h.b16 %v230
    %v432 = vunpack.c.l.b16 %v231
    %v433 = vunpack.c.h.b16 %v231
    %v434 = vunpack.c.l.b16 %v232
    %v435 = vunpack.c.h.b16 %v232
    %v436 = vunpack.c.l.b16 %v233
    %v437 = vunpack.c.h.b16 %v233
    %v438 = vunpack.c.l.b16 %v234
    %v439 = vunpack.c.h.b16 %v234
    %v440 = vunpack.c.l.b16 %v235
    %v441 = vunpack.c.h.b16 %v235
    %v442 = vunpack.c.l.b16 %v236
    %v443 = vunpack.c.h.b16 %v236
    %v444 = vunpack.c.l.b16 %v237
    %v445 = vunpack.c.h.b16 %v237
    %v446 = vunpack.c.l.b16 %v238
    %v447 = vunpack.c.h.b16 %v238
    %v448 = vunpack.c.l.b16 %v239
    %v449 = vunpack.c.h.b16 %v239
    %v450 = vunpack.c.l.b16 %v240
    %v451 = vunpack.c.h.b16 %v240
    %v452 = vunpack.c.l.b16 %v241
    %v453 = vunpack.c.h.b16 %v241
    %v454 = vunpack.c.l.b16 %v242
    %v455 = vunpack.c.h.b16 %v242
    %v456 = vunpack.c.l.b16 %v243
    %v457 = vunpack.c.h.b16 %v243
    %v458 = vunpack.c.l.b16 %v244
    %v459 = vunpack.c.h.b16 %v244
    %v460 = vunpack.c.l.b16 %v245
    %v461 = vunpack.c.h.b16 %v245
    %v462 = vunpack.c.l.b16 %v246
    %v463 = vunpack.c.h.b16 %v246
    %v464 = vunpack.c.l.b16 %v247
    %v465 = vunpack.c.h.b16 %v247
    %v466 = vunpack.c.l.b16 %v248
    %v467 = vunpack.c.h.b16 %v248
    %v468 = vunpack.c.l.b16 %v249
    %v469 = vunpack.c.h.b16 %v249
    %v470 = vunpack.c.l.b16 %v250
    %v471 = vunpack.c.h.b16 %v250
    %v472 = vunpack.c.l.b16 %v251
    %v473 = vunpack.c.h.b16 %v251
    %v474 = vunpack.c.l.b16 %v252
    %v475 = vunpack.c.h.b16 %v252
    %v476 = vunpack.c.l.b16 %v253
    %v477 = vunpack.c.h.b16 %v253
    %v478 = vunpack.c.l.b16 %v254
    %v479 = vunpack.c.h.b16 %v254
    %v480 = vunpack.c.l.b16 %v255
    %v481 = vunpack.c.h.b16 %v255
    %v482 = vunpack.c.l.b16 %v256
    %v483 = vunpack.c.h.b16 %v256
    %v484 = vunpack.c.l.b16 %v257
    %v485 = vunpack.c.h.b16 %v257
    %v486 = vunpack.c.l.b16 %v258
    %v487 = vunpack.c.h.b16 %v258
    %v488 = vunpack.c.l.b16 %v259
    %v489 = vunpack.c.h.b16 %v259
    %v490 = vunpack.c.l.b16 %v260
    %v491 = vunpack.c.h.b16 %v260
    %v492 = vunpack.c.l.b16 %v261
    %v493 = vunpack.c.h.b16 %v261
    %v494 = vunpack.c.l.b16 %v262
    %v495 = vunpack.c.h.b16 %v262
    %v496 = vunpack.c.l.b16 %v263
    %v497 = vunpack.c.h.b16 %v263
    %v498 = vunpack.c.l.b16 %v264
    %v499 = vunpack.c.h.b16 %v264
    %v500 = vunpack.c.l.b16 %v265
    %v501 = vunpack.c.h.b16 %v265
    %v502 = vunpack.c.l.b16 %v266
    %v503 = vunpack.c.h.b16 %v266
    %v504 = vunpack.c.l.b16 %v267
    %v505 = vunpack.c.h.b16 %v267
    %v506 = vunpack.c.l.b16 %v268
    %v507 = vunpack.c.h.b16 %v268
    %v508 = vunpack.c.l.b16 %v269
    %v509 = vunpack.c.h.b16 %v269
    %v510 = vunpack.c.l.b16 %v270
    %v511 = vunpack.c.h.b16 %v270
    %v512 = vunpack.c.l.b16 %v271
    %v513 = vunpack.c.h.b16 %v271
    %v514 = vunpack.c.l.b16 %v272
    %v515 = vunpack.c.h.b16 %v272
    %v516 = vunpack.c.l.b16 %v273
    %v517 = vunpack.c.h.b16 %v273
    %v518 = vunpack.c.l.b16 %v274
    %v519 = vunpack.c.h.b16 %v274
    %v520 = vunpack.c.l.b16 %v275
    %v521 = vunpack.c.h.b16 %v275
    %v522 = vunpack.c.l.b16 %v276
    %v523 = vunpack.c.h.b16 %v276
    %v524 = vunpack.c.l.b16 %v277
    %v525 = vunpack.c.h.b16 %v277
    %v526 = vunpack.c.l.b16 %v278
    %v527 = vunpack.c.h.b16 %v278
    %v528 = vunpack.c.l.b16 %v279
    %v529 = vunpack.c.h.b16 %v279
    %v530 = vunpack.c.l.b16 %v280
    %v531 = vunpack.c.h.b16 %v280
    %v532 = vunpack.c.l.b16 %v281
    %v533 = vunpack.c.h.b16 %v281
    %v534 = vunpack.c.l.b16 %v282
    %v535 = vunpack.c.h.b16 %v282
    %v536 = vunpack.c.l.b16 %v283
    %v537 = vunpack.c.h.b16 %v283
    %v538 = vunpack.c.l.b16 %v284
    %v539 = vunpack.c.h.b16 %v284
    %v540 = vunpack.c.l.b16 %v285
    %v541 = vunpack.c.h.b16 %v285
    %v542 = vunpack.c.l.b16 %v286
    %v543 = vunpack.c.h.b16 %v286
    %v544 = vunpack.c.l.b16 %v287
    %v545 = vunpack.c.h.b16 %v287
    %v546 = vunpack.c.l.b16 %v288
    %v547 = vunpack.c.h.b16 %v288
    %v548 = vunpack.c.l.b16 %v289
    %v549 = vunpack.c.h.b16 %v289
    %v550 = vunpack.c.l.b16 %v290
    %v551 = vunpack.c.h.b16 %v290
    %v552 = vunpack.c.l.b16 %v291
    %v553 = vunpack.c.h.b16 %v291
    %v554 = vunpack.c.l.b16 %v292
    %v555 = vunpack.c.h.b16 %v292
    %v556 = vunpack.c.l.b16 %v293
    %v557 = vunpack.c.h.b16 %v293
    %v558 = vunpack.c.l.b16 %v294
    %v559 = vunpack.c.h.b16 %v294
    %v560 = vunpack.c.l.b16 %v295
    %v561 = vunpack.c.h.b16 %v295
    %v562 = vunpack.c.l.b16 %v296
    %v563 = vunpack.c.h.b16 %v296
    %v564 = vunpack.c.l.b16 %v297
    %v565 = vunpack.c.h.b16 %v297
    %v566 = vunpack.c.l.b16 %v298
    %v567 = vunpack.c.h.b16 %v298
    %v568 = vunpack.c.l.b16 %v299
    %v569 = vunpack.c.h.b16 %v299
    %v570 = vunpack.c.l.b16 %v300
    %v571 = vunpack.c.h.b16 %v300
    %v572 = vunpack.c.l.b16 %v301
    %v573 = vunpack.c.h.b16 %v301
    %v574 = vunpack.c.l.b16 %v302
    %v575 = vunpack.c.h.b16 %v302
    %v576 = vunpack.c.l.b16 %v303
    %v577 = vunpack.c.h.b16 %v303
    %v578 = vunpack.c.l.b16 %v304
    %v579 = vunpack.c.h.b16 %v304
    %v580 = vunpack.c.l.b16 %v305
    %v581 = vunpack.c.h.b16 %v305
    %v582 = vunpack.c.l.b16 %v306
    %v583 = vunpack.c.h.b16 %v306
    %v584 = vunpack.c.l.b16 %v307
    %v585 = vunpack.c.h.b16 %v307
    %v586 = vunpack.c.l.b16 %v308
    %v587 = vunpack.c.h.b16 %v308
    %v588 = vunpack.c.l.b16 %v309
    %v589 = vunpack.c.h.b16 %v309
    %v590 = vunpack.c.l.b16 %v310
    %v591 = vunpack.c.h.b16 %v310
    %v592 = vunpack.c.l.b16 %v311
    %v593 = vunpack.c.h.b16 %v311
    %v594 = vunpack.c.l.b16 %v312
    %v595 = vunpack.c.h.b16 %v312
    %v596 = vunpack.c.l.b16 %v313
    %v597 = vunpack.c.h.b16 %v313
    %v598 = vunpack.c.l.b16 %v314
    %v599 = vunpack.c.h.b16 %v314
    %v600 = vunpack.c.l.b16 %v315
    %v601 = vunpack.c.h.b16 %v315
    %v602 = vunpack.c.l.b16 %v316
    %v603 = vunpack.c.h.b16 %v316
    %v604 = vunpack.c.l.b16 %v317
    %v605 = vunpack.c.h.b16 %v317
    %v606 = vunpack.c.l.b16 %v318
    %v607 = vunpack.c.h.b16 %v318
    %v608 = vunpack.c.l.b16 %v319
    %v609 = vunpack.c.h.b16 %v319
    %v610 = vunpack.c.l.b16 %v320
    %v611 = vunpack.c.h.b16 %v320
    %v612 = vunpack.c.l.b16 %v321
    %v613 = vunpack.c.h.b16 %v321
    %v614 = vunpack.c.l.b16 %v322
    %v615 = vunpack.c.h.b16 %v322
    %v616 = vunpack.c.l.b16 %v323
    %v617 = vunpack.c.h.b16 %v323
    %v618 = vpack.c.b16 %v424, %v422
    %v619 = vpack.c.b16 %v425, %v423
    %v620 = vpack.c.b16 %v428, %v426
    %v621 = vpack.c.b16 %v429, %v427
    %v622 = vpack.c.b16 %v432, %v430
    %v623 = vpack.c.b16 %v433, %v431
    %v624 = vpack.c.b16 %v436, %v434
    %v625 = vpack.c.b16 %v437, %v435
    %v626 = vpack.c.b16 %v440, %v438
    %v627 = vpack.c.b16 %v441, %v439
    %v628 = vpack.c.b16 %v444, %v442
    %v629 = vpack.c.b16 %v445, %v443
    %v630 = vpack.c.b16 %v448, %v446
    %v631 = vpack.c.b16 %v449, %v447
    %v632 = vpack.c.b16 %v452, %v450
    %v633 = vpack.c.b16 %v453, %v451
    %v634 = vpack.c.b16 %v456, %v454
    %v635 = vpack.c.b16 %v457, %v455
    %v636 = vpack.c.b16 %v460, %v458
    %v637 = vpack.c.b16 %v461, %v459
    %v638 = vpack.c.b16 %v464, %v462
    %v639 = vpack.c.b16 %v465, %v463
    %v640 = vpack.c.b16 %v468, %v466
    %v641 = vpack.c.b16 %v469, %v467
    %v642 = vpack.c.b16 %v472, %v470
    %v643 = vpack.c.b16 %v473, %v471
    %v644 = vpack.c.b16 %v476, %v474
    %v645 = vpack.c.b16 %v477, %v475
    %v646 = vpack.c.b16 %v480, %v478
    %v647 = vpack.c.b16 %v481, %v479
    %v648 = vpack.c.b16 %v484, %v482
    %v649 = vpack.c.b16 %v485, %v483
    %v650 = vpack.c.b16 %v488, %v486
    %v651 = vpack.c.b16 %v489, %v487
    %v652 = vpack.c.b16 %v492, %v490
    %v653 = vpack.c.b16 %v493, %v491
    %v654 = vpack.c.b16 %v496, %v494
    %v655 = vpack.c.b16 %v497, %v495
    %v656 = vpack.c.b16 %v500, %v498
    %v657 = vpack.c.b16 %v501, %v499
    %v658 = vpack.c.b16 %v504, %v502
    %v659 = vpack.c.b16 %v505, %v503
    %v660 = vpack.c.b16 %v508, %v506
    %v661 = vpack.c.b16 %v509, %v507
    %v662 = vpack.c.b16 %v512, %v510
    %v663 = vpack.c.b16 %v513, %v511
    %v664 = vpack.c.b16 %v516, %v514
    %v665 = vpack.c.b16 %v517, %v515
    %v666 = vpack.c.b16 %v520, %v518
    %v667 = vpack.c.b16 %v521, %v519
    %v668 = vpack.c.b16 %v524, %v522
    %v669 = vpack.c.b16 %v525, %v523
    %v670 = vpack.c.b16 %v528, %v526
    %v671 = vpack.c.b16 %v529, %v527
    %v672 = vpack.c.b16 %v532, %v530
    %v673 = vpack.c.b16 %v533, %v531
    %v674 = vpack.c.b16 %v536, %v534
    %v675 = vpack.c.b16 %v537, %v535
    %v676 = vpack.c.b16 %v540, %v538
    %v677 = vpack.c.b16 %v541, %v539
    %v678 = vpack.c.b16 %v544, %v542
    %v679 = vpack.c.b16 %v545, %v543
    %v680 = vpack.c.b16 %v548, %v546
    %v681 = vpack.c.b16 %v549, %v547
    %v682 = vpack.c.b16 %v552, %v550
    %v683 = vpack.c.b16 %v553, %v551
    %v684 = vpack.c.b16 %v556, %v554
    %v685 = vpack.c.b16 %v557, %v555
    %v686 = vpack.c.b16 %v560, %v558
    %v687 = vpack.c.b16 %v561, %v559
    %v688 = vpack.c.b16 %v564, %v562
    %v689 = vpack.c.b16 %v565, %v563
    %v690 = vpack.c.b16 %v568, %v566
    %v691 = vpack.c.b16 %v569, %v567
    %v692 = vpack.c.b16 %v572, %v570
    %v693 = vpack.c.b16 %v573, %v571
    %v694 = vpack.c.b16 %v576, %v574
    %v695 = vpack.c.b16 %v577, %v575
    %v696 = vpack.c.b16 %v580, %v578
    %v697 = vpack.c.b16 %v581, %v579
    %v698 = vpack.c.b16 %v584, %v582
    %v699 = vpack.c.b16 %v585, %v583
    %v700 = vpack.c.b16 %v588, %v586
    %v701 = vpack.c.b16 %v589, %v587
    %v702 = vpack.c.b16 %v592, %v590
    %v703 = vpack.c.b16 %v593, %v591
    %v704 = vpack.c.b16 %v596, %v594
    %v705 = vpack.c.b16 %v597, %v595
    %v706 = vpack.c.b16 %v600, %v598
    %v707 = vpack.c.b16 %v601, %v599
    %v708 = vpack.c.b16 %v604, %v602
    %v709 = vpack.c.b16 %v605, %v603
    %v710 = vpack.c.b16 %v608, %v606
    %v711 = vpack.c.b16 %v609, %v607
    %v712 = vpack.c.b16 %v612, %v610
    %v713 = vpack.c.b16 %v613, %v611
    %v714 = vpack.c.b16 %v616, %v614
    %v715 = vpack.c.b16 %v617, %v615
    %vm814 = vcmask 130048
    %v816 = vsel %vm814, %v225, 0
    %818 = vmatprep.subr.bf16.mxu0 %v619
    %819 = vmatpush1.bf16.msra.mxu0 %v618
    %820 = vmatprep.subr.bf16.mxu0 %v621
    %821 = vmatpush1.bf16.msra.mxu0 %v620
    %822 = vmatprep.subr.bf16.mxu0 %v623
    %823 = vmatpush1.bf16.msra.mxu0 %v622
    %824 = vmatprep.subr.bf16.mxu0 %v625
    %825 = vmatpush1.bf16.msra.mxu0 %v624
    %826 = vmatprep.subr.bf16.mxu0 %v627
    %827 = vmatpush1.bf16.msra.mxu0 %v626
    %828 = vmatprep.subr.bf16.mxu0 %v629
    %829 = vmatpush1.bf16.msra.mxu0 %v628
    %830 = vmatprep.subr.bf16.mxu0 %v631
    %831 = vmatpush1.bf16.msra.mxu0 %v630
    %832 = vmatprep.subr.bf16.mxu0 %v633
    %833 = vmatpush1.bf16.msra.mxu0 %v632
    %834 = vmatprep.subr.bf16.mxu0 %v635
    %835 = vmatpush1.bf16.msra.mxu0 %v634
    %836 = vmatprep.subr.bf16.mxu0 %v637
    %837 = vmatpush1.bf16.msra.mxu0 %v636
    %838 = vmatprep.subr.bf16.mxu0 %v639
    %839 = vmatpush1.bf16.msra.mxu0 %v638
    %840 = vmatprep.subr.bf16.mxu0 %v641
    %841 = vmatpush1.bf16.msra.mxu0 %v640
    %842 = vmatprep.subr.bf16.mxu0 %v643
    %843 = vmatpush1.bf16.msra.mxu0 %v642
    %844 = vmatprep.subr.bf16.mxu0 %v645
    %845 = vmatpush1.bf16.msra.mxu0 %v644
    %846 = vmatprep.subr.bf16.mxu0 %v647
    %847 = vmatpush1.bf16.msra.mxu0 %v646
    %848 = vmatprep.subr.bf16.mxu0 %v649
    %849 = vmatpush1.bf16.msra.mxu0 %v648
    %850 = vmatprep.mubr.bf16.mxu0 %v220
    %851 = vmatmul.mubr.bf16.gmra.mrb[0].mxu0 %v219
    %v852 = vpop.f32.mrb[0].mxu0
    %v853 = vadd.f32 0.0, %v852
    %v854 = vpop.f32.mrb[0].mxu0
    %v855 = vadd.f32 0.0, %v854
    %v856 = vpop.f32.mrb[0].mxu0
    %v857 = vadd.f32 0.0, %v856
    %v858 = vpop.f32.mrb[0].mxu0
    %v859 = vadd.f32 0.0, %v858
    %860 = vdwg.mxu0
    %861 = vmatprep.subr.bf16.mxu0 %v651
    %862 = vmatpush1.bf16.msra.mxu0 %v650
    %863 = vmatprep.subr.bf16.mxu0 %v653
    %864 = vmatpush1.bf16.msra.mxu0 %v652
    %865 = vmatprep.subr.bf16.mxu0 %v655
    %866 = vmatpush1.bf16.msra.mxu0 %v654
    %867 = vmatprep.subr.bf16.mxu0 %v657
    %868 = vmatpush1.bf16.msra.mxu0 %v656
    %869 = vmatprep.subr.bf16.mxu0 %v659
    %870 = vmatpush1.bf16.msra.mxu0 %v658
    %871 = vmatprep.subr.bf16.mxu0 %v661
    %872 = vmatpush1.bf16.msra.mxu0 %v660
    %873 = vmatprep.subr.bf16.mxu0 %v663
    %874 = vmatpush1.bf16.msra.mxu0 %v662
    %875 = vmatprep.subr.bf16.mxu0 %v665
    %876 = vmatpush1.bf16.msra.mxu0 %v664
    %877 = vmatprep.subr.bf16.mxu0 %v667
    %878 = vmatpush1.bf16.msra.mxu0 %v666
    %879 = vmatprep.subr.bf16.mxu0 %v669
    %880 = vmatpush1.bf16.msra.mxu0 %v668
    %881 = vmatprep.subr.bf16.mxu0 %v671
    %882 = vmatpush1.bf16.msra.mxu0 %v670
    %883 = vmatprep.subr.bf16.mxu0 %v673
    %884 = vmatpush1.bf16.msra.mxu0 %v672
    %885 = vmatprep.subr.bf16.mxu0 %v675
    %886 = vmatpush1.bf16.msra.mxu0 %v674
    %887 = vmatprep.subr.bf16.mxu0 %v677
    %888 = vmatpush1.bf16.msra.mxu0 %v676
    %889 = vmatprep.subr.bf16.mxu0 %v679
    %890 = vmatpush1.bf16.msra.mxu0 %v678
    %891 = vmatprep.subr.bf16.mxu0 %v681
    %892 = vmatpush1.bf16.msra.mxu0 %v680
    %893 = vmatprep.mubr.bf16.mxu0 %v222
    %894 = vmatmul.mubr.bf16.gmra.mrb[0].mxu0 %v221
    %v895 = vpop.f32.mrb[0].mxu0
    %v896 = vadd.f32 %v853, %v895
    %v897 = vpop.f32.mrb[0].mxu0
    %v898 = vadd.f32 %v855, %v897
    %v899 = vpop.f32.mrb[0].mxu0
    %v900 = vadd.f32 %v857, %v899
    %v901 = vpop.f32.mrb[0].mxu0
    %v902 = vadd.f32 %v859, %v901
    %903 = vdwg.mxu0
    %904 = vmatprep.subr.bf16.mxu0 %v683
    %905 = vmatpush1.bf16.msra.mxu0 %v682
    %906 = vmatprep.subr.bf16.mxu0 %v685
    %907 = vmatpush1.bf16.msra.mxu0 %v684
    %908 = vmatprep.subr.bf16.mxu0 %v687
    %909 = vmatpush1.bf16.msra.mxu0 %v686
    %910 = vmatprep.subr.bf16.mxu0 %v689
    %911 = vmatpush1.bf16.msra.mxu0 %v688
    %912 = vmatprep.subr.bf16.mxu0 %v691
    %913 = vmatpush1.bf16.msra.mxu0 %v690
    %914 = vmatprep.subr.bf16.mxu0 %v693
    %915 = vmatpush1.bf16.msra.mxu0 %v692
    %916 = vmatprep.subr.bf16.mxu0 %v695
    %917 = vmatpush1.bf16.msra.mxu0 %v694
    %918 = vmatprep.subr.bf16.mxu0 %v697
    %919 = vmatpush1.bf16.msra.mxu0 %v696
    %920 = vmatprep.subr.bf16.mxu0 %v699
    %921 = vmatpush1.bf16.msra.mxu0 %v698
    %922 = vmatprep.subr.bf16.mxu0 %v701
    %923 = vmatpush1.bf16.msra.mxu0 %v700
    %924 = vmatprep.subr.bf16.mxu0 %v703
    %925 = vmatpush1.bf16.msra.mxu0 %v702
    %926 = vmatprep.subr.bf16.mxu0 %v705
    %927 = vmatpush1.bf16.msra.mxu0 %v704
    %928 = vmatprep.subr.bf16.mxu0 %v707
    %929 = vmatpush1.bf16.msra.mxu0 %v706
    %930 = vmatprep.subr.bf16.mxu0 %v709
    %931 = vmatpush1.bf16.msra.mxu0 %v708
    %932 = vmatprep.subr.bf16.mxu0 %v711
    %933 = vmatpush1.bf16.msra.mxu0 %v710
    %934 = vmatprep.subr.bf16.mxu0 %v713
    %935 = vmatpush1.bf16.msra.mxu0 %v712
    %936 = vmatprep.mubr.bf16.mxu0 %v224
    %937 = vmatmul.mubr.bf16.gmra.mrb[0].mxu0 %v223
    %v938 = vpop.f32.mrb[0].mxu0
    %v939 = vadd.f32 %v896, %v938
    %v940 = vpop.f32.mrb[0].mxu0
    %v941 = vadd.f32 %v898, %v940
    %v942 = vpop.f32.mrb[0].mxu0
    %v943 = vadd.f32 %v900, %v942
    %v944 = vpop.f32.mrb[0].mxu0
    %v945 = vadd.f32 %v902, %v944
    %946 = vdwg.mxu0
    %947 = vmatprep.subr.bf16.mxu0 %v715
    %948 = vmatpush1.bf16.msra.mxu0 %v714
    %949 = vmatprep.subr.bf16.mxu0 0
    %950 = vmatpush1.bf16.msra.mxu0 0
    %951 = vmatprep.subr.bf16.mxu0 0
    %952 = vmatpush1.bf16.msra.mxu0 0
    %953 = vmatprep.subr.bf16.mxu0 0
    %954 = vmatpush1.bf16.msra.mxu0 0
    %955 = vmatprep.subr.bf16.mxu0 0
    %956 = vmatpush1.bf16.msra.mxu0 0
    %957 = vmatprep.subr.bf16.mxu0 0
    %958 = vmatpush1.bf16.msra.mxu0 0
    %959 = vmatprep.subr.bf16.mxu0 0
    %960 = vmatpush1.bf16.msra.mxu0 0
    %961 = vmatprep.subr.bf16.mxu0 0
    %962 = vmatpush1.bf16.msra.mxu0 0
    %963 = vmatprep.subr.bf16.mxu0 0
    %964 = vmatpush1.bf16.msra.mxu0 0
    %965 = vmatprep.subr.bf16.mxu0 0
    %966 = vmatpush1.bf16.msra.mxu0 0
    %967 = vmatprep.subr.bf16.mxu0 0
    %968 = vmatpush1.bf16.msra.mxu0 0
    %969 = vmatprep.subr.bf16.mxu0 0
    %970 = vmatpush1.bf16.msra.mxu0 0
    %971 = vmatprep.subr.bf16.mxu0 0
    %972 = vmatpush1.bf16.msra.mxu0 0
    %973 = vmatprep.subr.bf16.mxu0 0
    %974 = vmatpush1.bf16.msra.mxu0 0
    %975 = vmatprep.subr.bf16.mxu0 0
    %976 = vmatpush1.bf16.msra.mxu0 0
    %977 = vmatprep.subr.bf16.mxu0 0
    %978 = vmatpush1.bf16.msra.mxu0 0
    %979 = vmatprep.mubr.bf16.mxu0 0
    %980 = vmatmul.mubr.bf16.gmra.mrb[0].mxu0 %v816
    %v981 = vpop.f32.mrb[0].mxu0
    %v982 = vadd.f32 %v939, %v981
    %v983 = vpop.f32.mrb[0].mxu0
    %v984 = vadd.f32 %v941, %v983
    %v985 = vpop.f32.mrb[0].mxu0
    %v986 = vadd.f32 %v943, %v985
    %v987 = vpop.f32.mrb[0].mxu0
    %v988 = vadd.f32 %v945, %v987
    %989 = vdwg.mxu0
    %992 = vrot.lane.b32.xlu0 %v982, 124
    %v993 = vpop.permute.xlu0 %992
    %994 = vrot.lane.b32.xlu0 %v986, 124
    %v995 = vpop.permute.xlu0 %994
    %998 = vxpose.xlu0.b32.start [1/16] %v993, 128
    %999 = vxpose.xlu0.b32.cont [2/16] %v995, 128
    %1000 = vxpose.xlu0.b32.cont [3/16] 0.0, 128
    %1001 = vxpose.xlu0.b32.cont [4/16] 0.0, 128
    %1002 = vxpose.xlu0.b32.cont [5/16] 0.0, 128
    %1003 = vxpose.xlu0.b32.cont [6/16] 0.0, 128
    %1004 = vxpose.xlu0.b32.cont [7/16] 0.0, 128
    %1005 = vxpose.xlu0.b32.cont [8/16] 0.0, 128
    %1006 = vxpose.xlu0.b32.cont [9/16] 0.0, 128
    %1007 = vxpose.xlu0.b32.cont [10/16] 0.0, 128
    %1008 = vxpose.xlu0.b32.cont [11/16] 0.0, 128
    %1009 = vxpose.xlu0.b32.cont [12/16] 0.0, 128
    %1010 = vxpose.xlu0.b32.cont [13/16] 0.0, 128
    %1011 = vxpose.xlu0.b32.cont [14/16] 0.0, 128
    %1012 = vxpose.xlu0.b32.cont [15/16] 0.0, 128
    %1013 = vxpose.xlu0.b32.end [16/16] 0.0, 128
    %v1014 = vpop.trf.xlu0
    %v1015 = vpop.trf.xlu0
    %v1016 = vpop.trf.xlu0
    %v1017 = vpop.trf.xlu0
    %v1018 = vpop.trf.xlu0
    %v1019 = vpop.trf.xlu0
    %v1020 = vpop.trf.xlu0
    %v1021 = vpop.trf.xlu0
    %v1022 = vpop.trf.xlu0
    %v1023 = vpop.trf.xlu0
    %v1024 = vpop.trf.xlu0
    %v1025 = vpop.trf.xlu0
    %v1026 = vpop.trf.xlu0
    %v1027 = vpop.trf.xlu0
    %v1028 = vpop.trf.xlu0
    %v1029 = vpop.trf.xlu0
    %1030 = vset.pattern.permute.xlu0 5
    %1031 = vperm.xlu0 %1030, %v982
    %v1032 = vpop.permute.xlu0 %1031
    %1034 = vset.pattern.permute.xlu0 5
    %1035 = vperm.xlu0 %1034, %v986
    %v1036 = vpop.permute.xlu0 %1035
    %v1038 = vlaneseq
    %v1039 = vshrl.u32 %v1038, 7
    %v1040 = vsub.s32 0, %v1039
    %v1041 = vrot.slane %v1014, %v1040
    %v1042 = vadd.f32 %v1032, %v1041
    %v1043 = vadd.f32 %v1036, %v1041
    %vm1044 = vcmp.gt.f32.partialorder %v1042, 0.0
    %vm1045 = vcmp.gt.f32.partialorder %v1043, 0.0
    %v1046 = vmul.f32 %v1042, 0.2
    %v1047 = vmul.f32 %v1043, 0.2
    %v1048 = vsel %vm1044, %v1042, %v1046
    %v1049 = vsel %vm1045, %v1043, %v1047
    %vm1050 = vcmp.gt.f32.partialorder %v203, 0.5
    %vm1051 = vcmp.gt.f32.partialorder %v204, 0.5
    %v1052 = vsel %vm1050, %v1048, -1e+30
    %v1053 = vsel %vm1051, %v1049, -1e+30
    %v1054 = vsel %vm814, %v1052, -inf
    %1055 = vmax.xlane.f32.xlu0 %v1054
    %v1056 = vpop.xlane.xlu0 %1055
    %v1057 = vsel %vm814, %v1053, -inf
    %1058 = vmax.xlane.f32.xlu0 %v1057
    %v1059 = vpop.xlane.xlu0 %1058
    %v1060 = vsub.f32 %v1052, %v1056
    %v1061 = vsub.f32 %v1053, %v1059
    %v1062 = vmul.f32 %v1060, 1.442695
    %v1063 = vpow.pop %v1062
    %v1064 = vmul.f32 %v1061, 1.442695
    %v1065 = vpow.pop %v1064
    %v1066 = vsel %vm814, %v1063, 0.0
    %1067 = vadd.xlane.f32.xlu0 %v1066
    %v1068 = vpop.xlane.xlu0 %1067
    %v1069 = vsel %vm814, %v1065, 0.0
    %1070 = vadd.xlane.f32.xlu0 %v1069
    %v1071 = vpop.xlane.xlu0 %1070
    %v1072 = vrcp.pop %v1068
    %v1073 = vrcp.pop %v1071
    %v1074 = vmul.f32 %v1063, %v1072
    %v1075 = vmul.f32 %v1065, %v1073
    %1078 = vrot.lane.b32.xlu0 %v984, 124
    %v1079 = vpop.permute.xlu0 %1078
    %1080 = vrot.lane.b32.xlu0 %v988, 124
    %v1081 = vpop.permute.xlu0 %1080
    %1084 = vxpose.xlu0.b32.start [1/16] %v1079, 128
    %1085 = vxpose.xlu0.b32.cont [2/16] %v1081, 128
    %1086 = vxpose.xlu0.b32.cont [3/16] 0.0, 128
    %1087 = vxpose.xlu0.b32.cont [4/16] 0.0, 128
    %1088 = vxpose.xlu0.b32.cont [5/16] 0.0, 128
    %1089 = vxpose.xlu0.b32.cont [6/16] 0.0, 128
    %1090 = vxpose.xlu0.b32.cont [7/16] 0.0, 128
    %1091 = vxpose.xlu0.b32.cont [8/16] 0.0, 128
    %1092 = vxpose.xlu0.b32.cont [9/16] 0.0, 128
    %1093 = vxpose.xlu0.b32.cont [10/16] 0.0, 128
    %1094 = vxpose.xlu0.b32.cont [11/16] 0.0, 128
    %1095 = vxpose.xlu0.b32.cont [12/16] 0.0, 128
    %1096 = vxpose.xlu0.b32.cont [13/16] 0.0, 128
    %1097 = vxpose.xlu0.b32.cont [14/16] 0.0, 128
    %1098 = vxpose.xlu0.b32.cont [15/16] 0.0, 128
    %1099 = vxpose.xlu0.b32.end [16/16] 0.0, 128
    %v1100 = vpop.trf.xlu0
    %v1101 = vpop.trf.xlu0
    %v1102 = vpop.trf.xlu0
    %v1103 = vpop.trf.xlu0
    %v1104 = vpop.trf.xlu0
    %v1105 = vpop.trf.xlu0
    %v1106 = vpop.trf.xlu0
    %v1107 = vpop.trf.xlu0
    %v1108 = vpop.trf.xlu0
    %v1109 = vpop.trf.xlu0
    %v1110 = vpop.trf.xlu0
    %v1111 = vpop.trf.xlu0
    %v1112 = vpop.trf.xlu0
    %v1113 = vpop.trf.xlu0
    %v1114 = vpop.trf.xlu0
    %v1115 = vpop.trf.xlu0
    %1116 = vset.pattern.permute.xlu0 5
    %1117 = vperm.xlu0 %1116, %v984
    %v1118 = vpop.permute.xlu0 %1117
    %1120 = vset.pattern.permute.xlu0 5
    %1121 = vperm.xlu0 %1120, %v988
    %v1122 = vpop.permute.xlu0 %1121
    %v1124 = vlaneseq
    %v1125 = vshrl.u32 %v1124, 7
    %v1126 = vsub.s32 0, %v1125
    %v1127 = vrot.slane %v1100, %v1126
    %v1128 = vadd.f32 %v1118, %v1127
    %v1129 = vadd.f32 %v1122, %v1127
    %vm1130 = vcmp.gt.f32.partialorder %v1128, 0.0
    %vm1131 = vcmp.gt.f32.partialorder %v1129, 0.0
    %v1132 = vmul.f32 %v1128, 0.2
    %v1133 = vmul.f32 %v1129, 0.2
    %v1134 = vsel %vm1130, %v1128, %v1132
    %v1135 = vsel %vm1131, %v1129, %v1133
    %v1136 = vsel %vm1050, %v1134, -1e+30
    %v1137 = vsel %vm1051, %v1135, -1e+30
    %v1138 = vsel %vm814, %v1136, -inf
    %1139 = vmax.xlane.f32.xlu0 %v1138
    %v1140 = vpop.xlane.xlu0 %1139
    %v1141 = vsel %vm814, %v1137, -inf
    %1142 = vmax.xlane.f32.xlu0 %v1141
    %v1143 = vpop.xlane.xlu0 %1142
    %v1144 = vsub.f32 %v1136, %v1140
    %v1145 = vsub.f32 %v1137, %v1143
    %v1146 = vmul.f32 %v1144, 1.442695
    %v1147 = vpow.pop %v1146
    %v1148 = vmul.f32 %v1145, 1.442695
    %v1149 = vpow.pop %v1148
    %v1150 = vsel %vm814, %v1147, 0.0
    %1151 = vadd.xlane.f32.xlu0 %v1150
    %v1152 = vpop.xlane.xlu0 %1151
    %v1153 = vsel %vm814, %v1149, 0.0
    %1154 = vadd.xlane.f32.xlu0 %v1153
    %v1155 = vpop.xlane.xlu0 %1154
    %v1156 = vrcp.pop %v1152
    %v1157 = vrcp.pop %v1155
    %v1158 = vmul.f32 %v1147, %v1156
    %v1159 = vmul.f32 %v1149, %v1157
    %1162 = vrot.lane.b32.xlu0 %v1158, 16
    %v1163 = vpop.permute.xlu0 %1162
    %1164 = vrot.lane.b32.xlu0 %v1159, 16
    %v1165 = vpop.permute.xlu0 %1164
    %v1168 = vsel %vm814, %v1074, %v1163
    %v1169 = vsel %vm814, %v1075, %v1165
    %v1170 = vpack.c.bf16 %v1169, %v1168
    %v1171 = vpack.c.bf16 %v986, %v982
    %v1172 = vpack.c.bf16 %v988, %v984
    %vm1173 = vcmask 261120
    %v1175 = vsel %vm1173, %v1170, 0
    %1177 = vmatprep.subr.bf16.mxu0 0
    %1178 = vmatpush1.bf16.msra.mxu0 %v1171
    %1179 = vmatprep.subr.bf16.mxu0 0
    %1180 = vmatpush1.bf16.msra.mxu0 %v1172
    %1181 = vmatprep.subr.bf16.mxu0 0
    %1182 = vmatpush1.bf16.msra.mxu0 0
    %1183 = vmatprep.subr.bf16.mxu0 0
    %1184 = vmatpush1.bf16.msra.mxu0 0
    %1185 = vmatprep.subr.bf16.mxu0 0
    %1186 = vmatpush1.bf16.msra.mxu0 0
    %1187 = vmatprep.subr.bf16.mxu0 0
    %1188 = vmatpush1.bf16.msra.mxu0 0
    %1189 = vmatprep.subr.bf16.mxu0 0
    %1190 = vmatpush1.bf16.msra.mxu0 0
    %1191 = vmatprep.subr.bf16.mxu0 0
    %1192 = vmatpush1.bf16.msra.mxu0 0
    %1193 = vmatprep.subr.bf16.mxu0 0
    %1194 = vmatpush1.bf16.msra.mxu0 0
    %1195 = vmatprep.subr.bf16.mxu0 0
    %1196 = vmatpush1.bf16.msra.mxu0 0
    %1197 = vmatprep.subr.bf16.mxu0 0
    %1198 = vmatpush1.bf16.msra.mxu0 0
    %1199 = vmatprep.subr.bf16.mxu0 0
    %1200 = vmatpush1.bf16.msra.mxu0 0
    %1201 = vmatprep.subr.bf16.mxu0 0
    %1202 = vmatpush1.bf16.msra.mxu0 0
    %1203 = vmatprep.subr.bf16.mxu0 0
    %1204 = vmatpush1.bf16.msra.mxu0 0
    %1205 = vmatprep.subr.bf16.mxu0 0
    %1206 = vmatpush1.bf16.msra.mxu0 0
    %1207 = vmatprep.subr.bf16.mxu0 0
    %1208 = vmatpush1.bf16.msra.mxu0 0
    %1209 = vmatprep.mubr.bf16.mxu0 0
    %1210 = vmatmul.mubr.bf16.gmra.mrb[0].mxu0 %v1175
    %v1211 = vpop.f32.mrb[0].mxu0
    %v1212 = vadd.f32 0.0, %v1211
    %v1213 = vpop.f32.mrb[0].mxu0
    %v1214 = vpop.f32.mrb[0].mxu0
    %v1215 = vadd.f32 0.0, %v1214
    %v1216 = vpop.f32.mrb[0].mxu0
    %1217 = vdwg.mxu0
    %v1218 = vmul.f32 %v1212, 0.5
    %v1219 = vmul.f32 %v1215, 0.5
    %v1220 = vld [vmem:[#allocation7] sm:$0x1]
    %v1222 = vlaneseq
    %v1223 = vshrl.u32 %v1222, 7
    %v1224 = vsub.s32 0, %v1223
    %v1225 = vrot.slane %v1220, %v1224
    %v1227 = vadd.f32 %v1218, %v1225
    %v1228 = vadd.f32 %v1219, %v1225
    %v1229 = vmax.f32 %v1227, 0.0
    %v1230 = vmax.f32 %v1228, 0.0
    %v1231 = vpack.c.bf16 %v1230, %v1229
    %v1232 = vld [vmem:[%s4] sm:$0xf]
    %v1235 = vunpack.c.l.s4 1983009808
    %v1236 = vunpack.c.0.s8 %v1235
    %v1237 = vlaneseq
    %v1238 = vshrl.u32 %v1237, 7
    %v1239 = vsub.s32 %v1236, %v1238
    %v1240 = vrot.slane %v1232, %v1239
    %v1241 = vcombine.high %v1240, %v1240
    %vm1242 = vcmask 31744
    %v1244 = vsel %vm1242, %v1231, 0
    %vm1246 = vcmask 1041408
    %v1248 = vsel %vm1246, %v1240, 0
    %v1251 = vsel %vm1246, %v1241, 0
    %1253 = vmatprep.subr.bf16.mxu0 %v1251
    %1254 = vmatpush1.bf16.msra.mxu0 %v1248
    %1255 = vmatprep.subr.bf16.mxu0 0
    %1256 = vmatpush1.bf16.msra.mxu0 0
    %1257 = vmatprep.subr.bf16.mxu0 0
    %1258 = vmatpush1.bf16.msra.mxu0 0
    %1259 = vmatprep.subr.bf16.mxu0 0
    %1260 = vmatpush1.bf16.msra.mxu0 0
    %1261 = vmatprep.subr.bf16.mxu0 0
    %1262 = vmatpush1.bf16.msra.mxu0 0
    %1263 = vmatprep.subr.bf16.mxu0 0
    %1264 = vmatpush1.bf16.msra.mxu0 0
    %1265 = vmatprep.subr.bf16.mxu0 0
    %1266 = vmatpush1.bf16.msra.mxu0 0
    %1267 = vmatprep.subr.bf16.mxu0 0
    %1268 = vmatpush1.bf16.msra.mxu0 0
    %1269 = vmatprep.subr.bf16.mxu0 0
    %1270 = vmatpush1.bf16.msra.mxu0 0
    %1271 = vmatprep.subr.bf16.mxu0 0
    %1272 = vmatpush1.bf16.msra.mxu0 0
    %1273 = vmatprep.subr.bf16.mxu0 0
    %1274 = vmatpush1.bf16.msra.mxu0 0
    %1275 = vmatprep.subr.bf16.mxu0 0
    %1276 = vmatpush1.bf16.msra.mxu0 0
    %1277 = vmatprep.subr.bf16.mxu0 0
    %1278 = vmatpush1.bf16.msra.mxu0 0
    %1279 = vmatprep.subr.bf16.mxu0 0
    %1280 = vmatpush1.bf16.msra.mxu0 0
    %1281 = vmatprep.subr.bf16.mxu0 0
    %1282 = vmatpush1.bf16.msra.mxu0 0
    %1283 = vmatprep.subr.bf16.mxu0 0
    %1284 = vmatpush1.bf16.msra.mxu0 0
    %1285 = vmatprep.mubr.bf16.mxu0 0
    %1286 = vmatmul.mubr.bf16.gmra.mrb[0].mxu0 %v1244
    %v1287 = vpop.f32.mrb[0].mxu0
    %v1288 = vadd.f32 0.0, %v1287
    %v1289 = vpop.f32.mrb[0].mxu0
    %v1290 = vadd.f32 0.0, %v1289
    %v1291 = vpop.f32.mrb[0].mxu0
    %v1292 = vadd.f32 0.0, %v1291
    %v1293 = vpop.f32.mrb[0].mxu0
    %v1294 = vadd.f32 0.0, %v1293
    %1295 = vdwg.mxu0
    %1298 = vrot.lane.b32.xlu0 %v1288, 112
    %v1299 = vpop.permute.xlu0 %1298
    %1300 = vrot.lane.b32.xlu0 %v1292, 112
    %v1301 = vpop.permute.xlu0 %1300
    %1304 = vxpose.xlu0.b32.start [1/16] %v1299, 128
    %1305 = vxpose.xlu0.b32.cont [2/16] %v1301, 128
    %1306 = vxpose.xlu0.b32.cont [3/16] 0.0, 128
    %1307 = vxpose.xlu0.b32.cont [4/16] 0.0, 128
    %1308 = vxpose.xlu0.b32.cont [5/16] 0.0, 128
    %1309 = vxpose.xlu0.b32.cont [6/16] 0.0, 128
    %1310 = vxpose.xlu0.b32.cont [7/16] 0.0, 128
    %1311 = vxpose.xlu0.b32.cont [8/16] 0.0, 128
    %1312 = vxpose.xlu0.b32.cont [9/16] 0.0, 128
    %1313 = vxpose.xlu0.b32.cont [10/16] 0.0, 128
    %1314 = vxpose.xlu0.b32.cont [11/16] 0.0, 128
    %1315 = vxpose.xlu0.b32.cont [12/16] 0.0, 128
    %1316 = vxpose.xlu0.b32.cont [13/16] 0.0, 128
    %1317 = vxpose.xlu0.b32.cont [14/16] 0.0, 128
    %1318 = vxpose.xlu0.b32.cont [15/16] 0.0, 128
    %1319 = vxpose.xlu0.b32.end [16/16] 0.0, 128
    %v1320 = vpop.trf.xlu0
    %v1321 = vpop.trf.xlu0
    %v1322 = vpop.trf.xlu0
    %v1323 = vpop.trf.xlu0
    %v1324 = vpop.trf.xlu0
    %v1325 = vpop.trf.xlu0
    %v1326 = vpop.trf.xlu0
    %v1327 = vpop.trf.xlu0
    %v1328 = vpop.trf.xlu0
    %v1329 = vpop.trf.xlu0
    %v1330 = vpop.trf.xlu0
    %v1331 = vpop.trf.xlu0
    %v1332 = vpop.trf.xlu0
    %v1333 = vpop.trf.xlu0
    %v1334 = vpop.trf.xlu0
    %v1335 = vpop.trf.xlu0
    %1336 = vset.pattern.permute.xlu0 17
    %1337 = vperm.xlu0 %1336, %v1288
    %v1338 = vpop.permute.xlu0 %1337
    %1340 = vset.pattern.permute.xlu0 17
    %1341 = vperm.xlu0 %1340, %v1292
    %v1342 = vpop.permute.xlu0 %1341
    %v1344 = vlaneseq
    %v1345 = vshrl.u32 %v1344, 7
    %v1346 = vsub.s32 0, %v1345
    %v1347 = vrot.slane %v1320, %v1346
    %v1348 = vadd.f32 %v1338, %v1347
    %v1349 = vadd.f32 %v1342, %v1347
    %vm1350 = vcmp.gt.f32.partialorder %v1348, 0.0
    %vm1351 = vcmp.gt.f32.partialorder %v1349, 0.0
    %v1352 = vmul.f32 %v1348, 0.2
    %v1353 = vmul.f32 %v1349, 0.2
    %v1354 = vsel %vm1350, %v1348, %v1352
    %v1355 = vsel %vm1351, %v1349, %v1353
    %v1356 = vsel %vm1050, %v1354, -1e+30
    %v1357 = vsel %vm1051, %v1355, -1e+30
    %v1358 = vsel %vm814, %v1356, -inf
    %1359 = vmax.xlane.f32.xlu0 %v1358
    %v1360 = vpop.xlane.xlu0 %1359
    %v1361 = vsel %vm814, %v1357, -inf
    %1362 = vmax.xlane.f32.xlu0 %v1361
    %v1363 = vpop.xlane.xlu0 %1362
    %v1364 = vsub.f32 %v1356, %v1360
    %v1365 = vsub.f32 %v1357, %v1363
    %v1366 = vmul.f32 %v1364, 1.442695
    %v1367 = vpow.pop %v1366
    %v1368 = vmul.f32 %v1365, 1.442695
    %v1369 = vpow.pop %v1368
    %v1370 = vsel %vm814, %v1367, 0.0
    %1371 = vadd.xlane.f32.xlu0 %v1370
    %v1372 = vpop.xlane.xlu0 %1371
    %v1373 = vsel %vm814, %v1369, 0.0
    %1374 = vadd.xlane.f32.xlu0 %v1373
    %v1375 = vpop.xlane.xlu0 %1374
    %v1376 = vrcp.pop %v1372
    %v1377 = vrcp.pop %v1375
    %v1378 = vmul.f32 %v1367, %v1376
    %v1379 = vmul.f32 %v1369, %v1377
    %1382 = vrot.lane.b32.xlu0 %v1290, 112
    %v1383 = vpop.permute.xlu0 %1382
    %1384 = vrot.lane.b32.xlu0 %v1294, 112
    %v1385 = vpop.permute.xlu0 %1384
    %1388 = vxpose.xlu0.b32.start [1/16] %v1383, 128
    %1389 = vxpose.xlu0.b32.cont [2/16] %v1385, 128
    %1390 = vxpose.xlu0.b32.cont [3/16] 0.0, 128
    %1391 = vxpose.xlu0.b32.cont [4/16] 0.0, 128
    %1392 = vxpose.xlu0.b32.cont [5/16] 0.0, 128
    %1393 = vxpose.xlu0.b32.cont [6/16] 0.0, 128
    %1394 = vxpose.xlu0.b32.cont [7/16] 0.0, 128
    %1395 = vxpose.xlu0.b32.cont [8/16] 0.0, 128
    %1396 = vxpose.xlu0.b32.cont [9/16] 0.0, 128
    %1397 = vxpose.xlu0.b32.cont [10/16] 0.0, 128
    %1398 = vxpose.xlu0.b32.cont [11/16] 0.0, 128
    %1399 = vxpose.xlu0.b32.cont [12/16] 0.0, 128
    %1400 = vxpose.xlu0.b32.cont [13/16] 0.0, 128
    %1401 = vxpose.xlu0.b32.cont [14/16] 0.0, 128
    %1402 = vxpose.xlu0.b32.cont [15/16] 0.0, 128
    %1403 = vxpose.xlu0.b32.end [16/16] 0.0, 128
    %v1404 = vpop.trf.xlu0
    %v1405 = vpop.trf.xlu0
    %v1406 = vpop.trf.xlu0
    %v1407 = vpop.trf.xlu0
    %v1408 = vpop.trf.xlu0
    %v1409 = vpop.trf.xlu0
    %v1410 = vpop.trf.xlu0
    %v1411 = vpop.trf.xlu0
    %v1412 = vpop.trf.xlu0
    %v1413 = vpop.trf.xlu0
    %v1414 = vpop.trf.xlu0
    %v1415 = vpop.trf.xlu0
    %v1416 = vpop.trf.xlu0
    %v1417 = vpop.trf.xlu0
    %v1418 = vpop.trf.xlu0
    %v1419 = vpop.trf.xlu0
    %1420 = vset.pattern.permute.xlu0 17
    %1421 = vperm.xlu0 %1420, %v1290
    %v1422 = vpop.permute.xlu0 %1421
    %1424 = vset.pattern.permute.xlu0 17
    %1425 = vperm.xlu0 %1424, %v1294
    %v1426 = vpop.permute.xlu0 %1425
    %v1428 = vlaneseq
    %v1429 = vshrl.u32 %v1428, 7
    %v1430 = vsub.s32 0, %v1429
    %v1431 = vrot.slane %v1404, %v1430
    %v1432 = vadd.f32 %v1422, %v1431
    %v1433 = vadd.f32 %v1426, %v1431
    %vm1434 = vcmp.gt.f32.partialorder %v1432, 0.0
    %vm1435 = vcmp.gt.f32.partialorder %v1433, 0.0
    %v1436 = vmul.f32 %v1432, 0.2
    %v1437 = vmul.f32 %v1433, 0.2
    %v1438 = vsel %vm1434, %v1432, %v1436
    %v1439 = vsel %vm1435, %v1433, %v1437
    %v1440 = vsel %vm1050, %v1438, -1e+30
    %v1441 = vsel %vm1051, %v1439, -1e+30
    %v1442 = vsel %vm814, %v1440, -inf
    %1443 = vmax.xlane.f32.xlu0 %v1442
    %v1444 = vpop.xlane.xlu0 %1443
    %v1445 = vsel %vm814, %v1441, -inf
    %1446 = vmax.xlane.f32.xlu0 %v1445
    %v1447 = vpop.xlane.xlu0 %1446
    %v1448 = vsub.f32 %v1440, %v1444
    %v1449 = vsub.f32 %v1441, %v1447
    %v1450 = vmul.f32 %v1448, 1.442695
    %v1451 = vpow.pop %v1450
    %v1452 = vmul.f32 %v1449, 1.442695
    %v1453 = vpow.pop %v1452
    %v1454 = vsel %vm814, %v1451, 0.0
    %1455 = vadd.xlane.f32.xlu0 %v1454
    %v1456 = vpop.xlane.xlu0 %1455
    %v1457 = vsel %vm814, %v1453, 0.0
    %1458 = vadd.xlane.f32.xlu0 %v1457
    %v1459 = vpop.xlane.xlu0 %1458
    %v1460 = vrcp.pop %v1456
    %v1461 = vrcp.pop %v1459
    %v1462 = vmul.f32 %v1451, %v1460
    %v1463 = vmul.f32 %v1453, %v1461
    %1466 = vrot.lane.b32.xlu0 %v1462, 16
    %v1467 = vpop.permute.xlu0 %1466
    %1468 = vrot.lane.b32.xlu0 %v1463, 16
    %v1469 = vpop.permute.xlu0 %1468
    %v1472 = vsel %vm814, %v1378, %v1467
    %v1473 = vsel %vm814, %v1379, %v1469
    %v1474 = vpack.c.bf16 %v1473, %v1472
    %v1475 = vpack.c.bf16 %v1292, %v1288
    %v1476 = vpack.c.bf16 %v1294, %v1290
    %v1478 = vsel %vm1173, %v1474, 0
    %1480 = vmatprep.subr.bf16.mxu0 0
    %1481 = vmatpush1.bf16.msra.mxu0 %v1475
    %1482 = vmatprep.subr.bf16.mxu0 0
    %1483 = vmatpush1.bf16.msra.mxu0 %v1476
    %1484 = vmatprep.subr.bf16.mxu0 0
    %1485 = vmatpush1.bf16.msra.mxu0 0
    %1486 = vmatprep.subr.bf16.mxu0 0
    %1487 = vmatpush1.bf16.msra.mxu0 0
    %1488 = vmatprep.subr.bf16.mxu0 0
    %1489 = vmatpush1.bf16.msra.mxu0 0
    %1490 = vmatprep.subr.bf16.mxu0 0
    %1491 = vmatpush1.bf16.msra.mxu0 0
    %1492 = vmatprep.subr.bf16.mxu0 0
    %1493 = vmatpush1.bf16.msra.mxu0 0
    %1494 = vmatprep.subr.bf16.mxu0 0
    %1495 = vmatpush1.bf16.msra.mxu0 0
    %1496 = vmatprep.subr.bf16.mxu0 0
    %1497 = vmatpush1.bf16.msra.mxu0 0
    %1498 = vmatprep.subr.bf16.mxu0 0
    %1499 = vmatpush1.bf16.msra.mxu0 0
    %1500 = vmatprep.subr.bf16.mxu0 0
    %1501 = vmatpush1.bf16.msra.mxu0 0
    %1502 = vmatprep.subr.bf16.mxu0 0
    %1503 = vmatpush1.bf16.msra.mxu0 0
    %1504 = vmatprep.subr.bf16.mxu0 0
    %1505 = vmatpush1.bf16.msra.mxu0 0
    %1506 = vmatprep.subr.bf16.mxu0 0
    %1507 = vmatpush1.bf16.msra.mxu0 0
    %1508 = vmatprep.subr.bf16.mxu0 0
    %1509 = vmatpush1.bf16.msra.mxu0 0
    %1510 = vmatprep.subr.bf16.mxu0 0
    %1511 = vmatpush1.bf16.msra.mxu0 0
    %1512 = vmatprep.mubr.bf16.mxu0 0
    %1513 = vmatmul.mubr.bf16.gmra.mrb[0].mxu0 %v1478
    %v1514 = vpop.f32.mrb[0].mxu0
    %v1515 = vadd.f32 0.0, %v1514
    %v1516 = vpop.f32.mrb[0].mxu0
    %v1517 = vpop.f32.mrb[0].mxu0
    %v1518 = vadd.f32 0.0, %v1517
    %v1519 = vpop.f32.mrb[0].mxu0
    %1520 = vdwg.mxu0
    %v1521 = vmul.f32 %v1515, 0.5
    %v1522 = vmul.f32 %v1518, 0.5
    %v1523 = vld [vmem:[#allocation9] sm:$0x1]
    %v1525 = vlaneseq
    %v1526 = vshrl.u32 %v1525, 7
    %v1527 = vsub.s32 0, %v1526
    %v1528 = vrot.slane %v1523, %v1527
    %v1530 = vadd.f32 %v1521, %v1528
    %v1531 = vadd.f32 %v1522, %v1528
    %v1532 = vmax.f32 %v1530, 0.0
    %v1533 = vmax.f32 %v1531, 0.0
    %v1534 = vpack.c.bf16 %v1533, %v1532
    %v1535 = vld [vmem:[%s6] sm:$0xff]
    %v1536 = vld [vmem:[%s6 + $0x8] sm:$0xff]
    %v1539 = vunpack.c.l.b16 %v1535
    %v1540 = vunpack.c.h.b16 %v1535
    %v1541 = vunpack.c.l.b16 %v1536
    %v1542 = vunpack.c.h.b16 %v1536
    %v1543 = vpack.c.b16 %v1541, %v1539
    %v1544 = vpack.c.b16 %v1542, %v1540
    %v1548 = vsel %vm814, %v1534, 0
    %1550 = vmatprep.subr.bf16.mxu0 %v1544
    %1551 = vmatpush1.bf16.msra.mxu0 %v1543
    %1552 = vmatprep.subr.bf16.mxu0 0
    %1553 = vmatpush1.bf16.msra.mxu0 0
    %1554 = vmatprep.subr.bf16.mxu0 0
    %1555 = vmatpush1.bf16.msra.mxu0 0
    %1556 = vmatprep.subr.bf16.mxu0 0
    %1557 = vmatpush1.bf16.msra.mxu0 0
    %1558 = vmatprep.subr.bf16.mxu0 0
    %1559 = vmatpush1.bf16.msra.mxu0 0
    %1560 = vmatprep.subr.bf16.mxu0 0
    %1561 = vmatpush1.bf16.msra.mxu0 0
    %1562 = vmatprep.subr.bf16.mxu0 0
    %1563 = vmatpush1.bf16.msra.mxu0 0
    %1564 = vmatprep.subr.bf16.mxu0 0
    %1565 = vmatpush1.bf16.msra.mxu0 0
    %1566 = vmatprep.subr.bf16.mxu0 0
    %1567 = vmatpush1.bf16.msra.mxu0 0
    %1568 = vmatprep.subr.bf16.mxu0 0
    %1569 = vmatpush1.bf16.msra.mxu0 0
    %1570 = vmatprep.subr.bf16.mxu0 0
    %1571 = vmatpush1.bf16.msra.mxu0 0
    %1572 = vmatprep.subr.bf16.mxu0 0
    %1573 = vmatpush1.bf16.msra.mxu0 0
    %1574 = vmatprep.subr.bf16.mxu0 0
    %1575 = vmatpush1.bf16.msra.mxu0 0
    %1576 = vmatprep.subr.bf16.mxu0 0
    %1577 = vmatpush1.bf16.msra.mxu0 0
    %1578 = vmatprep.subr.bf16.mxu0 0
    %1579 = vmatpush1.bf16.msra.mxu0 0
    %1580 = vmatprep.subr.bf16.mxu0 0
    %1581 = vmatpush1.bf16.msra.mxu0 0
    %1582 = vmatprep.mubr.bf16.mxu0 0
    %1583 = vmatmul.mubr.bf16.gmra.mrb[0].mxu0 %v1548
    %v1584 = vpop.f32.mrb[0].mxu0
    %v1585 = vadd.f32 0.0, %v1584
    %v1586 = vpop.f32.mrb[0].mxu0
    %v1587 = vadd.f32 0.0, %v1586
    %v1588 = vpop.f32.mrb[0].mxu0
    %v1589 = vadd.f32 0.0, %v1588
    %v1590 = vpop.f32.mrb[0].mxu0
    %v1591 = vadd.f32 0.0, %v1590
    %1592 = vdwg.mxu0
    %1595 = vrot.lane.b32.xlu0 %v1585, 96
    %v1596 = vpop.permute.xlu0 %1595
    %1597 = vrot.lane.b32.xlu0 %v1589, 96
    %v1598 = vpop.permute.xlu0 %1597
    %1601 = vxpose.xlu0.b32.start [1/16] %v1596, 128
    %1602 = vxpose.xlu0.b32.cont [2/16] %v1598, 128
    %1603 = vxpose.xlu0.b32.cont [3/16] 0.0, 128
    %1604 = vxpose.xlu0.b32.cont [4/16] 0.0, 128
    %1605 = vxpose.xlu0.b32.cont [5/16] 0.0, 128
    %1606 = vxpose.xlu0.b32.cont [6/16] 0.0, 128
    %1607 = vxpose.xlu0.b32.cont [7/16] 0.0, 128
    %1608 = vxpose.xlu0.b32.cont [8/16] 0.0, 128
    %1609 = vxpose.xlu0.b32.cont [9/16] 0.0, 128
    %1610 = vxpose.xlu0.b32.cont [10/16] 0.0, 128
    %1611 = vxpose.xlu0.b32.cont [11/16] 0.0, 128
    %1612 = vxpose.xlu0.b32.cont [12/16] 0.0, 128
    %1613 = vxpose.xlu0.b32.cont [13/16] 0.0, 128
    %1614 = vxpose.xlu0.b32.cont [14/16] 0.0, 128
    %1615 = vxpose.xlu0.b32.cont [15/16] 0.0, 128
    %1616 = vxpose.xlu0.b32.end [16/16] 0.0, 128
    %v1617 = vpop.trf.xlu0
    %v1618 = vpop.trf.xlu0
    %v1619 = vpop.trf.xlu0
    %v1620 = vpop.trf.xlu0
    %v1621 = vpop.trf.xlu0
    %v1622 = vpop.trf.xlu0
    %v1623 = vpop.trf.xlu0
    %v1624 = vpop.trf.xlu0
    %v1625 = vpop.trf.xlu0
    %v1626 = vpop.trf.xlu0
    %v1627 = vpop.trf.xlu0
    %v1628 = vpop.trf.xlu0
    %v1629 = vpop.trf.xlu0
    %v1630 = vpop.trf.xlu0
    %v1631 = vpop.trf.xlu0
    %v1632 = vpop.trf.xlu0
    %1633 = vset.pattern.permute.xlu0 33
    %1634 = vperm.xlu0 %1633, %v1585
    %v1635 = vpop.permute.xlu0 %1634
    %1637 = vset.pattern.permute.xlu0 33
    %1638 = vperm.xlu0 %1637, %v1589
    %v1639 = vpop.permute.xlu0 %1638
    %v1641 = vlaneseq
    %v1642 = vshrl.u32 %v1641, 7
    %v1643 = vsub.s32 0, %v1642
    %v1644 = vrot.slane %v1617, %v1643
    %v1645 = vadd.f32 %v1635, %v1644
    %v1646 = vadd.f32 %v1639, %v1644
    %vm1647 = vcmp.gt.f32.partialorder %v1645, 0.0
    %vm1648 = vcmp.gt.f32.partialorder %v1646, 0.0
    %v1649 = vmul.f32 %v1645, 0.2
    %v1650 = vmul.f32 %v1646, 0.2
    %v1651 = vsel %vm1647, %v1645, %v1649
    %v1652 = vsel %vm1648, %v1646, %v1650
    %v1653 = vsel %vm1050, %v1651, -1e+30
    %v1654 = vsel %vm1051, %v1652, -1e+30
    %v1655 = vsel %vm814, %v1653, -inf
    %1656 = vmax.xlane.f32.xlu0 %v1655
    %v1657 = vpop.xlane.xlu0 %1656
    %v1658 = vsel %vm814, %v1654, -inf
    %1659 = vmax.xlane.f32.xlu0 %v1658
    %v1660 = vpop.xlane.xlu0 %1659
    %v1661 = vsub.f32 %v1653, %v1657
    %v1662 = vsub.f32 %v1654, %v1660
    %v1663 = vmul.f32 %v1661, 1.442695
    %v1664 = vpow.pop %v1663
    %v1665 = vmul.f32 %v1662, 1.442695
    %v1666 = vpow.pop %v1665
    %v1667 = vsel %vm814, %v1664, 0.0
    %1668 = vadd.xlane.f32.xlu0 %v1667
    %v1669 = vpop.xlane.xlu0 %1668
    %v1670 = vsel %vm814, %v1666, 0.0
    %1671 = vadd.xlane.f32.xlu0 %v1670
    %v1672 = vpop.xlane.xlu0 %1671
    %v1673 = vrcp.pop %v1669
    %v1674 = vrcp.pop %v1672
    %v1675 = vmul.f32 %v1664, %v1673
    %v1676 = vmul.f32 %v1666, %v1674
    %1679 = vrot.lane.b32.xlu0 %v1587, 96
    %v1680 = vpop.permute.xlu0 %1679
    %1681 = vrot.lane.b32.xlu0 %v1591, 96
    %v1682 = vpop.permute.xlu0 %1681
    %1685 = vxpose.xlu0.b32.start [1/16] %v1680, 128
    %1686 = vxpose.xlu0.b32.cont [2/16] %v1682, 128
    %1687 = vxpose.xlu0.b32.cont [3/16] 0.0, 128
    %1688 = vxpose.xlu0.b32.cont [4/16] 0.0, 128
    %1689 = vxpose.xlu0.b32.cont [5/16] 0.0, 128
    %1690 = vxpose.xlu0.b32.cont [6/16] 0.0, 128
    %1691 = vxpose.xlu0.b32.cont [7/16] 0.0, 128
    %1692 = vxpose.xlu0.b32.cont [8/16] 0.0, 128
    %1693 = vxpose.xlu0.b32.cont [9/16] 0.0, 128
    %1694 = vxpose.xlu0.b32.cont [10/16] 0.0, 128
    %1695 = vxpose.xlu0.b32.cont [11/16] 0.0, 128
    %1696 = vxpose.xlu0.b32.cont [12/16] 0.0, 128
    %1697 = vxpose.xlu0.b32.cont [13/16] 0.0, 128
    %1698 = vxpose.xlu0.b32.cont [14/16] 0.0, 128
    %1699 = vxpose.xlu0.b32.cont [15/16] 0.0, 128
    %1700 = vxpose.xlu0.b32.end [16/16] 0.0, 128
    %v1701 = vpop.trf.xlu0
    %v1702 = vpop.trf.xlu0
    %v1703 = vpop.trf.xlu0
    %v1704 = vpop.trf.xlu0
    %v1705 = vpop.trf.xlu0
    %v1706 = vpop.trf.xlu0
    %v1707 = vpop.trf.xlu0
    %v1708 = vpop.trf.xlu0
    %v1709 = vpop.trf.xlu0
    %v1710 = vpop.trf.xlu0
    %v1711 = vpop.trf.xlu0
    %v1712 = vpop.trf.xlu0
    %v1713 = vpop.trf.xlu0
    %v1714 = vpop.trf.xlu0
    %v1715 = vpop.trf.xlu0
    %v1716 = vpop.trf.xlu0
    %1717 = vset.pattern.permute.xlu0 33
    %1718 = vperm.xlu0 %1717, %v1587
    %v1719 = vpop.permute.xlu0 %1718
    %1721 = vset.pattern.permute.xlu0 33
    %1722 = vperm.xlu0 %1721, %v1591
    %v1723 = vpop.permute.xlu0 %1722
    %v1725 = vlaneseq
    %v1726 = vshrl.u32 %v1725, 7
    %v1727 = vsub.s32 0, %v1726
    %v1728 = vrot.slane %v1701, %v1727
    %v1729 = vadd.f32 %v1719, %v1728
    %v1730 = vadd.f32 %v1723, %v1728
    %vm1731 = vcmp.gt.f32.partialorder %v1729, 0.0
    %vm1732 = vcmp.gt.f32.partialorder %v1730, 0.0
    %v1733 = vmul.f32 %v1729, 0.2
    %v1734 = vmul.f32 %v1730, 0.2
    %v1735 = vsel %vm1731, %v1729, %v1733
    %v1736 = vsel %vm1732, %v1730, %v1734
    %v1737 = vsel %vm1050, %v1735, -1e+30
    %v1738 = vsel %vm1051, %v1736, -1e+30
    %v1739 = vsel %vm814, %v1737, -inf
    %1740 = vmax.xlane.f32.xlu0 %v1739
    %v1741 = vpop.xlane.xlu0 %1740
    %v1742 = vsel %vm814, %v1738, -inf
    %1743 = vmax.xlane.f32.xlu0 %v1742
    %v1744 = vpop.xlane.xlu0 %1743
    %v1745 = vsub.f32 %v1737, %v1741
    %v1746 = vsub.f32 %v1738, %v1744
    %v1747 = vmul.f32 %v1745, 1.442695
    %v1748 = vpow.pop %v1747
    %v1749 = vmul.f32 %v1746, 1.442695
    %v1750 = vpow.pop %v1749
    %v1751 = vsel %vm814, %v1748, 0.0
    %1752 = vadd.xlane.f32.xlu0 %v1751
    %v1753 = vpop.xlane.xlu0 %1752
    %v1754 = vsel %vm814, %v1750, 0.0
    %1755 = vadd.xlane.f32.xlu0 %v1754
    %v1756 = vpop.xlane.xlu0 %1755
    %v1757 = vrcp.pop %v1753
    %v1758 = vrcp.pop %v1756
    %v1759 = vmul.f32 %v1748, %v1757
    %v1760 = vmul.f32 %v1750, %v1758
    %1763 = vrot.lane.b32.xlu0 %v1759, 16
    %v1764 = vpop.permute.xlu0 %1763
    %1765 = vrot.lane.b32.xlu0 %v1760, 16
    %v1766 = vpop.permute.xlu0 %1765
    %v1769 = vsel %vm814, %v1675, %v1764
    %v1770 = vsel %vm814, %v1676, %v1766
    %v1771 = vpack.c.bf16 %v1770, %v1769
    %v1772 = vpack.c.bf16 %v1589, %v1585
    %v1773 = vpack.c.bf16 %v1591, %v1587
    %v1775 = vsel %vm1173, %v1771, 0
    %1777 = vmatprep.subr.bf16.mxu0 0
    %1778 = vmatpush1.bf16.msra.mxu0 %v1772
    %1779 = vmatprep.subr.bf16.mxu0 0
    %1780 = vmatpush1.bf16.msra.mxu0 %v1773
    %1781 = vmatprep.subr.bf16.mxu0 0
    %1782 = vmatpush1.bf16.msra.mxu0 0
    %1783 = vmatprep.subr.bf16.mxu0 0
    %1784 = vmatpush1.bf16.msra.mxu0 0
    %1785 = vmatprep.subr.bf16.mxu0 0
    %1786 = vmatpush1.bf16.msra.mxu0 0
    %1787 = vmatprep.subr.bf16.mxu0 0
    %1788 = vmatpush1.bf16.msra.mxu0 0
    %1789 = vmatprep.subr.bf16.mxu0 0
    %1790 = vmatpush1.bf16.msra.mxu0 0
    %1791 = vmatprep.subr.bf16.mxu0 0
    %1792 = vmatpush1.bf16.msra.mxu0 0
    %1793 = vmatprep.subr.bf16.mxu0 0
    %1794 = vmatpush1.bf16.msra.mxu0 0
    %1795 = vmatprep.subr.bf16.mxu0 0
    %1796 = vmatpush1.bf16.msra.mxu0 0
    %1797 = vmatprep.subr.bf16.mxu0 0
    %1798 = vmatpush1.bf16.msra.mxu0 0
    %1799 = vmatprep.subr.bf16.mxu0 0
    %1800 = vmatpush1.bf16.msra.mxu0 0
    %1801 = vmatprep.subr.bf16.mxu0 0
    %1802 = vmatpush1.bf16.msra.mxu0 0
    %1803 = vmatprep.subr.bf16.mxu0 0
    %1804 = vmatpush1.bf16.msra.mxu0 0
    %1805 = vmatprep.subr.bf16.mxu0 0
    %1806 = vmatpush1.bf16.msra.mxu0 0
    %1807 = vmatprep.subr.bf16.mxu0 0
    %1808 = vmatpush1.bf16.msra.mxu0 0
    %1809 = vmatprep.mubr.bf16.mxu0 0
    %1810 = vmatmul.mubr.bf16.gmra.mrb[0].mxu0 %v1775
    %v1811 = vpop.f32.mrb[0].mxu0
    %v1812 = vadd.f32 0.0, %v1811
    %v1813 = vpop.f32.mrb[0].mxu0
    %v1814 = vpop.f32.mrb[0].mxu0
    %v1815 = vadd.f32 0.0, %v1814
    %v1816 = vpop.f32.mrb[0].mxu0
    %1817 = vdwg.mxu0
    %v1818 = vmul.f32 %v1812, 0.5
    %v1819 = vmul.f32 %v1815, 0.5
    %v1820 = vld [vmem:[#allocation10] sm:$0x1]
    %v1822 = vlaneseq
    %v1823 = vshrl.u32 %v1822, 7
    %v1824 = vsub.s32 0, %v1823
    %v1825 = vrot.slane %v1820, %v1824
    %v1827 = vadd.f32 %v1818, %v1825
    %v1828 = vadd.f32 %v1819, %v1825
    %v1829 = vmax.f32 %v1827, 0.0
    %v1830 = vmax.f32 %v1828, 0.0
    %v1831 = vpack.c.bf16 %v1830, %v1829
    %v1832 = vld [vmem:[#allocation12] sm:$0xff]
    %v1833 = vld [vmem:[#allocation12 + $0x8] sm:$0xff]
    %v1834 = vld [vmem:[#allocation12 + $0x10] sm:$0xff]
    %v1835 = vld [vmem:[#allocation12 + $0x18] sm:$0xff]
    %v1840 = vunpack.c.l.b16 %v1832
    %v1841 = vunpack.c.h.b16 %v1832
    %v1842 = vunpack.c.l.b16 %v1833
    %v1843 = vunpack.c.h.b16 %v1833
    %v1844 = vunpack.c.l.b16 %v1834
    %v1845 = vunpack.c.h.b16 %v1834
    %v1846 = vunpack.c.l.b16 %v1835
    %v1847 = vunpack.c.h.b16 %v1835
    %v1848 = vpack.c.b16 %v1842, %v1840
    %v1849 = vpack.c.b16 %v1843, %v1841
    %v1850 = vpack.c.b16 %v1846, %v1844
    %v1851 = vpack.c.b16 %v1847, %v1845
    %v1857 = vsel %vm1173, %v1831, 0
    %1859 = vmatprep.subr.bf16.mxu0 %v1849
    %1860 = vmatpush1.bf16.msra.mxu0 %v1848
    %1861 = vmatprep.subr.bf16.mxu0 %v1851
    %1862 = vmatpush1.bf16.msra.mxu0 %v1850
    %1863 = vmatprep.subr.bf16.mxu0 0
    %1864 = vmatpush1.bf16.msra.mxu0 0
    %1865 = vmatprep.subr.bf16.mxu0 0
    %1866 = vmatpush1.bf16.msra.mxu0 0
    %1867 = vmatprep.subr.bf16.mxu0 0
    %1868 = vmatpush1.bf16.msra.mxu0 0
    %1869 = vmatprep.subr.bf16.mxu0 0
    %1870 = vmatpush1.bf16.msra.mxu0 0
    %1871 = vmatprep.subr.bf16.mxu0 0
    %1872 = vmatpush1.bf16.msra.mxu0 0
    %1873 = vmatprep.subr.bf16.mxu0 0
    %1874 = vmatpush1.bf16.msra.mxu0 0
    %1875 = vmatprep.subr.bf16.mxu0 0
    %1876 = vmatpush1.bf16.msra.mxu0 0
    %1877 = vmatprep.subr.bf16.mxu0 0
    %1878 = vmatpush1.bf16.msra.mxu0 0
    %1879 = vmatprep.subr.bf16.mxu0 0
    %1880 = vmatpush1.bf16.msra.mxu0 0
    %1881 = vmatprep.subr.bf16.mxu0 0
    %1882 = vmatpush1.bf16.msra.mxu0 0
    %1883 = vmatprep.subr.bf16.mxu0 0
    %1884 = vmatpush1.bf16.msra.mxu0 0
    %1885 = vmatprep.subr.bf16.mxu0 0
    %1886 = vmatpush1.bf16.msra.mxu0 0
    %1887 = vmatprep.subr.bf16.mxu0 0
    %1888 = vmatpush1.bf16.msra.mxu0 0
    %1889 = vmatprep.subr.bf16.mxu0 0
    %1890 = vmatpush1.bf16.msra.mxu0 0
    %1891 = vmatprep.mubr.bf16.mxu0 0
    %1892 = vmatmul.mubr.bf16.gmra.mrb[0].mxu0 %v1857
    %v1893 = vpop.f32.mrb[0].mxu0
    %v1894 = vadd.f32 0.0, %v1893
    %v1895 = vpop.f32.mrb[0].mxu0
    %v1896 = vadd.f32 0.0, %v1895
    %v1897 = vpop.f32.mrb[0].mxu0
    %v1898 = vadd.f32 0.0, %v1897
    %v1899 = vpop.f32.mrb[0].mxu0
    %v1900 = vadd.f32 0.0, %v1899
    %1901 = vdwg.mxu0
    %1904 = vrot.lane.b32.xlu0 %v1894, 64
    %v1905 = vpop.permute.xlu0 %1904
    %1906 = vrot.lane.b32.xlu0 %v1898, 64
    %v1907 = vpop.permute.xlu0 %1906
    %1910 = vxpose.xlu0.b32.start [1/16] %v1905, 128
    %1911 = vxpose.xlu0.b32.cont [2/16] %v1907, 128
    %1912 = vxpose.xlu0.b32.cont [3/16] 0.0, 128
    %1913 = vxpose.xlu0.b32.cont [4/16] 0.0, 128
    %1914 = vxpose.xlu0.b32.cont [5/16] 0.0, 128
    %1915 = vxpose.xlu0.b32.cont [6/16] 0.0, 128
    %1916 = vxpose.xlu0.b32.cont [7/16] 0.0, 128
    %1917 = vxpose.xlu0.b32.cont [8/16] 0.0, 128
    %1918 = vxpose.xlu0.b32.cont [9/16] 0.0, 128
    %1919 = vxpose.xlu0.b32.cont [10/16] 0.0, 128
    %1920 = vxpose.xlu0.b32.cont [11/16] 0.0, 128
    %1921 = vxpose.xlu0.b32.cont [12/16] 0.0, 128
    %1922 = vxpose.xlu0.b32.cont [13/16] 0.0, 128
    %1923 = vxpose.xlu0.b32.cont [14/16] 0.0, 128
    %1924 = vxpose.xlu0.b32.cont [15/16] 0.0, 128
    %1925 = vxpose.xlu0.b32.end [16/16] 0.0, 128
    %v1926 = vpop.trf.xlu0
    %v1927 = vpop.trf.xlu0
    %v1928 = vpop.trf.xlu0
    %v1929 = vpop.trf.xlu0
    %v1930 = vpop.trf.xlu0
    %v1931 = vpop.trf.xlu0
    %v1932 = vpop.trf.xlu0
    %v1933 = vpop.trf.xlu0
    %v1934 = vpop.trf.xlu0
    %v1935 = vpop.trf.xlu0
    %v1936 = vpop.trf.xlu0
    %v1937 = vpop.trf.xlu0
    %v1938 = vpop.trf.xlu0
    %v1939 = vpop.trf.xlu0
    %v1940 = vpop.trf.xlu0
    %v1941 = vpop.trf.xlu0
    %1942 = vset.pattern.permute.xlu0 65
    %1943 = vperm.xlu0 %1942, %v1894
    %v1944 = vpop.permute.xlu0 %1943
    %1946 = vset.pattern.permute.xlu0 65
    %1947 = vperm.xlu0 %1946, %v1898
    %v1948 = vpop.permute.xlu0 %1947
    %v1950 = vlaneseq
    %v1951 = vshrl.u32 %v1950, 7
    %v1952 = vsub.s32 0, %v1951
    %v1953 = vrot.slane %v1926, %v1952
    %v1954 = vadd.f32 %v1944, %v1953
    %v1955 = vadd.f32 %v1948, %v1953
    %vm1956 = vcmp.gt.f32.partialorder %v1954, 0.0
    %vm1957 = vcmp.gt.f32.partialorder %v1955, 0.0
    %v1958 = vmul.f32 %v1954, 0.2
    %v1959 = vmul.f32 %v1955, 0.2
    %v1960 = vsel %vm1956, %v1954, %v1958
    %v1961 = vsel %vm1957, %v1955, %v1959
    %v1962 = vsel %vm1050, %v1960, -1e+30
    %v1963 = vsel %vm1051, %v1961, -1e+30
    %v1964 = vsel %vm814, %v1962, -inf
    %1965 = vmax.xlane.f32.xlu0 %v1964
    %v1966 = vpop.xlane.xlu0 %1965
    %v1967 = vsel %vm814, %v1963, -inf
    %1968 = vmax.xlane.f32.xlu0 %v1967
    %v1969 = vpop.xlane.xlu0 %1968
    %v1970 = vsub.f32 %v1962, %v1966
    %v1971 = vsub.f32 %v1963, %v1969
    %v1972 = vmul.f32 %v1970, 1.442695
    %v1973 = vpow.pop %v1972
    %v1974 = vmul.f32 %v1971, 1.442695
    %v1975 = vpow.pop %v1974
    %v1976 = vsel %vm814, %v1973, 0.0
    %1977 = vadd.xlane.f32.xlu0 %v1976
    %v1978 = vpop.xlane.xlu0 %1977
    %v1979 = vsel %vm814, %v1975, 0.0
    %1980 = vadd.xlane.f32.xlu0 %v1979
    %v1981 = vpop.xlane.xlu0 %1980
    %v1982 = vrcp.pop %v1978
    %v1983 = vrcp.pop %v1981
    %v1984 = vmul.f32 %v1973, %v1982
    %v1985 = vmul.f32 %v1975, %v1983
    %1988 = vrot.lane.b32.xlu0 %v1896, 64
    %v1989 = vpop.permute.xlu0 %1988
    %1990 = vrot.lane.b32.xlu0 %v1900, 64
    %v1991 = vpop.permute.xlu0 %1990
    %1994 = vxpose.xlu0.b32.start [1/16] %v1989, 128
    %1995 = vxpose.xlu0.b32.cont [2/16] %v1991, 128
    %1996 = vxpose.xlu0.b32.cont [3/16] 0.0, 128
    %1997 = vxpose.xlu0.b32.cont [4/16] 0.0, 128
    %1998 = vxpose.xlu0.b32.cont [5/16] 0.0, 128
    %1999 = vxpose.xlu0.b32.cont [6/16] 0.0, 128
    %2000 = vxpose.xlu0.b32.cont [7/16] 0.0, 128
    %2001 = vxpose.xlu0.b32.cont [8/16] 0.0, 128
    %2002 = vxpose.xlu0.b32.cont [9/16] 0.0, 128
    %2003 = vxpose.xlu0.b32.cont [10/16] 0.0, 128
    %2004 = vxpose.xlu0.b32.cont [11/16] 0.0, 128
    %2005 = vxpose.xlu0.b32.cont [12/16] 0.0, 128
    %2006 = vxpose.xlu0.b32.cont [13/16] 0.0, 128
    %2007 = vxpose.xlu0.b32.cont [14/16] 0.0, 128
    %2008 = vxpose.xlu0.b32.cont [15/16] 0.0, 128
    %2009 = vxpose.xlu0.b32.end [16/16] 0.0, 128
    %v2010 = vpop.trf.xlu0
    %v2011 = vpop.trf.xlu0
    %v2012 = vpop.trf.xlu0
    %v2013 = vpop.trf.xlu0
    %v2014 = vpop.trf.xlu0
    %v2015 = vpop.trf.xlu0
    %v2016 = vpop.trf.xlu0
    %v2017 = vpop.trf.xlu0
    %v2018 = vpop.trf.xlu0
    %v2019 = vpop.trf.xlu0
    %v2020 = vpop.trf.xlu0
    %v2021 = vpop.trf.xlu0
    %v2022 = vpop.trf.xlu0
    %v2023 = vpop.trf.xlu0
    %v2024 = vpop.trf.xlu0
    %v2025 = vpop.trf.xlu0
    %2026 = vset.pattern.permute.xlu0 65
    %2027 = vperm.xlu0 %2026, %v1896
    %v2028 = vpop.permute.xlu0 %2027
    %2030 = vset.pattern.permute.xlu0 65
    %2031 = vperm.xlu0 %2030, %v1900
    %v2032 = vpop.permute.xlu0 %2031
    %v2034 = vlaneseq
    %v2035 = vshrl.u32 %v2034, 7
    %v2036 = vsub.s32 0, %v2035
    %v2037 = vrot.slane %v2010, %v2036
    %v2038 = vadd.f32 %v2028, %v2037
    %v2039 = vadd.f32 %v2032, %v2037
    %vm2040 = vcmp.gt.f32.partialorder %v2038, 0.0
    %vm2041 = vcmp.gt.f32.partialorder %v2039, 0.0
    %v2042 = vmul.f32 %v2038, 0.2
    %v2043 = vmul.f32 %v2039, 0.2
    %v2044 = vsel %vm2040, %v2038, %v2042
    %v2045 = vsel %vm2041, %v2039, %v2043
    %v2046 = vsel %vm1050, %v2044, -1e+30
    %v2047 = vsel %vm1051, %v2045, -1e+30
    %v2048 = vsel %vm814, %v2046, -inf
    %2049 = vmax.xlane.f32.xlu0 %v2048
    %v2050 = vpop.xlane.xlu0 %2049
    %v2051 = vsel %vm814, %v2047, -inf
    %2052 = vmax.xlane.f32.xlu0 %v2051
    %v2053 = vpop.xlane.xlu0 %2052
    %v2054 = vsub.f32 %v2046, %v2050
    %v2055 = vsub.f32 %v2047, %v2053
    %v2056 = vmul.f32 %v2054, 1.442695
    %v2057 = vpow.pop %v2056
    %v2058 = vmul.f32 %v2055, 1.442695
    %v2059 = vpow.pop %v2058
    %v2060 = vsel %vm814, %v2057, 0.0
    %2061 = vadd.xlane.f32.xlu0 %v2060
    %v2062 = vpop.xlane.xlu0 %2061
    %v2063 = vsel %vm814, %v2059, 0.0
    %2064 = vadd.xlane.f32.xlu0 %v2063
    %v2065 = vpop.xlane.xlu0 %2064
    %v2066 = vrcp.pop %v2062
    %v2067 = vrcp.pop %v2065
    %v2068 = vmul.f32 %v2057, %v2066
    %v2069 = vmul.f32 %v2059, %v2067
    %2072 = vrot.lane.b32.xlu0 %v2068, 16
    %v2073 = vpop.permute.xlu0 %2072
    %2074 = vrot.lane.b32.xlu0 %v2069, 16
    %v2075 = vpop.permute.xlu0 %2074
    %v2078 = vsel %vm814, %v1984, %v2073
    %v2079 = vsel %vm814, %v1985, %v2075
    %v2080 = vpack.c.bf16 %v2079, %v2078
    %v2081 = vpack.c.bf16 %v1898, %v1894
    %v2082 = vpack.c.bf16 %v1900, %v1896
    %v2084 = vsel %vm1173, %v2080, 0
    %2086 = vmatprep.subr.bf16.mxu0 0
    %2087 = vmatpush1.bf16.msra.mxu0 %v2081
    %2088 = vmatprep.subr.bf16.mxu0 0
    %2089 = vmatpush1.bf16.msra.mxu0 %v2082
    %2090 = vmatprep.subr.bf16.mxu0 0
    %2091 = vmatpush1.bf16.msra.mxu0 0
    %2092 = vmatprep.subr.bf16.mxu0 0
    %2093 = vmatpush1.bf16.msra.mxu0 0
    %2094 = vmatprep.subr.bf16.mxu0 0
    %2095 = vmatpush1.bf16.msra.mxu0 0
    %2096 = vmatprep.subr.bf16.mxu0 0
    %2097 = vmatpush1.bf16.msra.mxu0 0
    %2098 = vmatprep.subr.bf16.mxu0 0
    %2099 = vmatpush1.bf16.msra.mxu0 0
    %2100 = vmatprep.subr.bf16.mxu0 0
    %2101 = vmatpush1.bf16.msra.mxu0 0
    %2102 = vmatprep.subr.bf16.mxu0 0
    %2103 = vmatpush1.bf16.msra.mxu0 0
    %2104 = vmatprep.subr.bf16.mxu0 0
    %2105 = vmatpush1.bf16.msra.mxu0 0
    %2106 = vmatprep.subr.bf16.mxu0 0
    %2107 = vmatpush1.bf16.msra.mxu0 0
    %2108 = vmatprep.subr.bf16.mxu0 0
    %2109 = vmatpush1.bf16.msra.mxu0 0
    %2110 = vmatprep.subr.bf16.mxu0 0
    %2111 = vmatpush1.bf16.msra.mxu0 0
    %2112 = vmatprep.subr.bf16.mxu0 0
    %2113 = vmatpush1.bf16.msra.mxu0 0
    %2114 = vmatprep.subr.bf16.mxu0 0
    %2115 = vmatpush1.bf16.msra.mxu0 0
    %2116 = vmatprep.subr.bf16.mxu0 0
    %2117 = vmatpush1.bf16.msra.mxu0 0
    %2118 = vmatprep.mubr.bf16.mxu0 0
    %2119 = vmatmul.mubr.bf16.gmra.mrb[0].mxu0 %v2084
    %v2120 = vpop.f32.mrb[0].mxu0
    %v2121 = vadd.f32 0.0, %v2120
    %v2122 = vpop.f32.mrb[0].mxu0
    %v2123 = vpop.f32.mrb[0].mxu0
    %v2124 = vadd.f32 0.0, %v2123
    %v2125 = vpop.f32.mrb[0].mxu0
    %2126 = vdwg.mxu0
    %v2127 = vmul.f32 %v2121, 0.5
    %v2128 = vmul.f32 %v2124, 0.5
    %v2129 = vld [vmem:[%s9] sm:$0x1]
    %v2131 = vlaneseq
    %v2132 = vshrl.u32 %v2131, 7
    %v2133 = vsub.s32 0, %v2132
    %v2134 = vrot.slane %v2129, %v2133
    %v2136 = vadd.f32 %v2127, %v2134
    %v2137 = vadd.f32 %v2128, %v2134
    %v2138 = vmax.f32 %v2136, 0.0
    %v2139 = vmax.f32 %v2137, 0.0
    %v2140 = vpack.c.bf16 %v2139, %v2138
    %v2141 = vld [vmem:[#allocation13] sm:$0xff]
    %v2142 = vld [vmem:[#allocation13 + $0x8] sm:$0xff]
    %v2143 = vld [vmem:[#allocation13 + $0x10] sm:$0xff]
    %v2144 = vld [vmem:[#allocation13 + $0x18] sm:$0xff]
    %v2145 = vld [vmem:[#allocation13 + $0x20] sm:$0xff]
    %v2146 = vld [vmem:[#allocation13 + $0x28] sm:$0xff]
    %v2147 = vld [vmem:[#allocation13 + $0x30] sm:$0xff]
    %v2148 = vld [vmem:[#allocation13 + $0x38] sm:$0xff]
    %v2149 = vld [vmem:[#allocation13 + $0x40] sm:$0xff]
    %v2150 = vld [vmem:[#allocation13 + $0x48] sm:$0xff]
    %v2151 = vld [vmem:[#allocation13 + $0x50] sm:$0xff]
    %v2152 = vld [vmem:[#allocation13 + $0x58] sm:$0xff]
    %v2153 = vld [vmem:[#allocation13 + $0x60] sm:$0xff]
    %v2154 = vld [vmem:[#allocation13 + $0x68] sm:$0xff]
    %v2155 = vld [vmem:[#allocation13 + $0x70] sm:$0xff]
    %v2156 = vld [vmem:[#allocation13 + $0x78] sm:$0xff]
    %v2173 = vunpack.c.l.b16 %v2141
    %v2174 = vunpack.c.h.b16 %v2141
    %v2175 = vunpack.c.l.b16 %v2142
    %v2176 = vunpack.c.h.b16 %v2142
    %v2177 = vunpack.c.l.b16 %v2143
    %v2178 = vunpack.c.h.b16 %v2143
    %v2179 = vunpack.c.l.b16 %v2144
    %v2180 = vunpack.c.h.b16 %v2144
    %v2181 = vunpack.c.l.b16 %v2145
    %v2182 = vunpack.c.h.b16 %v2145
    %v2183 = vunpack.c.l.b16 %v2146
    %v2184 = vunpack.c.h.b16 %v2146
    %v2185 = vunpack.c.l.b16 %v2147
    %v2186 = vunpack.c.h.b16 %v2147
    %v2187 = vunpack.c.l.b16 %v2148
    %v2188 = vunpack.c.h.b16 %v2148
    %v2189 = vunpack.c.l.b16 %v2149
    %v2190 = vunpack.c.h.b16 %v2149
    %v2191 = vunpack.c.l.b16 %v2150
    %v2192 = vunpack.c.h.b16 %v2150
    %v2193 = vunpack.c.l.b16 %v2151
    %v2194 = vunpack.c.h.b16 %v2151
    %v2195 = vunpack.c.l.b16 %v2152
    %v2196 = vunpack.c.h.b16 %v2152
    %v2197 = vunpack.c.l.b16 %v2153
    %v2198 = vunpack.c.h.b16 %v2153
    %v2199 = vunpack.c.l.b16 %v2154
    %v2200 = vunpack.c.h.b16 %v2154
    %v2201 = vunpack.c.l.b16 %v2155
    %v2202 = vunpack.c.h.b16 %v2155
    %v2203 = vunpack.c.l.b16 %v2156
    %v2204 = vunpack.c.h.b16 %v2156
    %v2205 = vpack.c.b16 %v2177, %v2173
    %v2206 = vpack.c.b16 %v2178, %v2174
    %v2207 = vpack.c.b16 %v2179, %v2175
    %v2208 = vpack.c.b16 %v2180, %v2176
    %v2209 = vpack.c.b16 %v2185, %v2181
    %v2210 = vpack.c.b16 %v2186, %v2182
    %v2211 = vpack.c.b16 %v2187, %v2183
    %v2212 = vpack.c.b16 %v2188, %v2184
    %v2213 = vpack.c.b16 %v2193, %v2189
    %v2214 = vpack.c.b16 %v2194, %v2190
    %v2215 = vpack.c.b16 %v2195, %v2191
    %v2216 = vpack.c.b16 %v2196, %v2192
    %v2217 = vpack.c.b16 %v2201, %v2197
    %v2218 = vpack.c.b16 %v2202, %v2198
    %v2219 = vpack.c.b16 %v2203, %v2199
    %v2220 = vpack.c.b16 %v2204, %v2200
    %vm2237 = vcmask 523264
    %v2239 = vsel %vm2237, %v2140, 0
    %2241 = vmatprep.subr.bf16.mxu0 %v2206
    %2242 = vmatpush1.bf16.msra.mxu0 %v2205
    %2243 = vmatprep.subr.bf16.mxu0 %v2210
    %2244 = vmatpush1.bf16.msra.mxu0 %v2209
    %2245 = vmatprep.subr.bf16.mxu0 %v2214
    %2246 = vmatpush1.bf16.msra.mxu0 %v2213
    %2247 = vmatprep.subr.bf16.mxu0 %v2218
    %2248 = vmatpush1.bf16.msra.mxu0 %v2217
    %2249 = vmatprep.subr.bf16.mxu0 0
    %2250 = vmatpush1.bf16.msra.mxu0 0
    %2251 = vmatprep.subr.bf16.mxu0 0
    %2252 = vmatpush1.bf16.msra.mxu0 0
    %2253 = vmatprep.subr.bf16.mxu0 0
    %2254 = vmatpush1.bf16.msra.mxu0 0
    %2255 = vmatprep.subr.bf16.mxu0 0
    %2256 = vmatpush1.bf16.msra.mxu0 0
    %2257 = vmatprep.subr.bf16.mxu0 0
    %2258 = vmatpush1.bf16.msra.mxu0 0
    %2259 = vmatprep.subr.bf16.mxu0 0
    %2260 = vmatpush1.bf16.msra.mxu0 0
    %2261 = vmatprep.subr.bf16.mxu0 0
    %2262 = vmatpush1.bf16.msra.mxu0 0
    %2263 = vmatprep.subr.bf16.mxu0 0
    %2264 = vmatpush1.bf16.msra.mxu0 0
    %2265 = vmatprep.subr.bf16.mxu0 0
    %2266 = vmatpush1.bf16.msra.mxu0 0
    %2267 = vmatprep.subr.bf16.mxu0 0
    %2268 = vmatpush1.bf16.msra.mxu0 0
    %2269 = vmatprep.subr.bf16.mxu0 0
    %2270 = vmatpush1.bf16.msra.mxu0 0
    %2271 = vmatprep.subr.bf16.mxu0 0
    %2272 = vmatpush1.bf16.msra.mxu0 0
    %2273 = vmatprep.mubr.bf16.mxu0 0
    %2274 = vmatmul.mubr.bf16.gmra.mrb[0].mxu0 %v2239
    %v2275 = vpop.f32.mrb[0].mxu0
    %v2276 = vadd.f32 0.0, %v2275
    %v2277 = vpop.f32.mrb[0].mxu0
    %v2278 = vadd.f32 0.0, %v2277
    %v2279 = vpop.f32.mrb[0].mxu0
    %v2280 = vadd.f32 0.0, %v2279
    %v2281 = vpop.f32.mrb[0].mxu0
    %v2282 = vadd.f32 0.0, %v2281
    %2283 = vdwg.mxu0
    %2284 = vmatprep.subr.bf16.mxu0 %v2208
    %2285 = vmatpush1.bf16.msra.mxu0 %v2207
    %2286 = vmatprep.subr.bf16.mxu0 %v2212
    %2287 = vmatpush1.bf16.msra.mxu0 %v2211
    %2288 = vmatprep.subr.bf16.mxu0 %v2216
    %2289 = vmatpush1.bf16.msra.mxu0 %v2215
    %2290 = vmatprep.subr.bf16.mxu0 %v2220
    %2291 = vmatpush1.bf16.msra.mxu0 %v2219
    %2292 = vmatprep.subr.bf16.mxu0 0
    %2293 = vmatpush1.bf16.msra.mxu0 0
    %2294 = vmatprep.subr.bf16.mxu0 0
    %2295 = vmatpush1.bf16.msra.mxu0 0
    %2296 = vmatprep.subr.bf16.mxu0 0
    %2297 = vmatpush1.bf16.msra.mxu0 0
    %2298 = vmatprep.subr.bf16.mxu0 0
    %2299 = vmatpush1.bf16.msra.mxu0 0
    %2300 = vmatprep.subr.bf16.mxu0 0
    %2301 = vmatpush1.bf16.msra.mxu0 0
    %2302 = vmatprep.subr.bf16.mxu0 0
    %2303 = vmatpush1.bf16.msra.mxu0 0
    %2304 = vmatprep.subr.bf16.mxu0 0
    %2305 = vmatpush1.bf16.msra.mxu0 0
    %2306 = vmatprep.subr.bf16.mxu0 0
    %2307 = vmatpush1.bf16.msra.mxu0 0
    %2308 = vmatprep.subr.bf16.mxu0 0
    %2309 = vmatpush1.bf16.msra.mxu0 0
    %2310 = vmatprep.subr.bf16.mxu0 0
    %2311 = vmatpush1.bf16.msra.mxu0 0
    %2312 = vmatprep.subr.bf16.mxu0 0
    %2313 = vmatpush1.bf16.msra.mxu0 0
    %2314 = vmatprep.subr.bf16.mxu0 0
    %2315 = vmatpush1.bf16.msra.mxu0 0
    %2316 = vmatprep.mubr.bf16.mxu0 0
    %2317 = vmatmul.mubr.bf16.gmra.mrb[0].mxu0 %v2239
    %v2318 = vpop.f32.mrb[0].mxu0
    %v2319 = vadd.f32 0.0, %v2318
    %v2320 = vpop.f32.mrb[0].mxu0
    %v2321 = vadd.f32 0.0, %v2320
    %v2322 = vpop.f32.mrb[0].mxu0
    %v2323 = vadd.f32 0.0, %v2322
    %v2324 = vpop.f32.mrb[0].mxu0
    %v2325 = vadd.f32 0.0, %v2324
    %2326 = vdwg.mxu0
    %2327 = vxpose.xlu0.b32.start [1/16] %v2278, 128
    %2328 = vxpose.xlu0.b32.cont [2/16] %v2282, 128
    %2329 = vxpose.xlu0.b32.cont [3/16] 0.0, 128
    %2330 = vxpose.xlu0.b32.cont [4/16] 0.0, 128
    %2331 = vxpose.xlu0.b32.cont [5/16] 0.0, 128
    %2332 = vxpose.xlu0.b32.cont [6/16] 0.0, 128
    %2333 = vxpose.xlu0.b32.cont [7/16] 0.0, 128
    %2334 = vxpose.xlu0.b32.cont [8/16] 0.0, 128
    %2335 = vxpose.xlu0.b32.cont [9/16] 0.0, 128
    %2336 = vxpose.xlu0.b32.cont [10/16] 0.0, 128
    %2337 = vxpose.xlu0.b32.cont [11/16] 0.0, 128
    %2338 = vxpose.xlu0.b32.cont [12/16] 0.0, 128
    %2339 = vxpose.xlu0.b32.cont [13/16] 0.0, 128
    %2340 = vxpose.xlu0.b32.cont [14/16] 0.0, 128
    %2341 = vxpose.xlu0.b32.cont [15/16] 0.0, 128
    %2342 = vxpose.xlu0.b32.end [16/16] 0.0, 128
    %v2343 = vpop.trf.xlu0
    %v2344 = vpop.trf.xlu0
    %v2345 = vpop.trf.xlu0
    %v2346 = vpop.trf.xlu0
    %v2347 = vpop.trf.xlu0
    %v2348 = vpop.trf.xlu0
    %v2349 = vpop.trf.xlu0
    %v2350 = vpop.trf.xlu0
    %v2351 = vpop.trf.xlu0
    %v2352 = vpop.trf.xlu0
    %v2353 = vpop.trf.xlu0
    %v2354 = vpop.trf.xlu0
    %v2355 = vpop.trf.xlu0
    %v2356 = vpop.trf.xlu0
    %v2357 = vpop.trf.xlu0
    %v2358 = vpop.trf.xlu0
    %2360 = vset.pattern.permute.xlu0 1
    %2361 = vperm.xlu0 %2360, %v2278
    %v2362 = vpop.permute.xlu0 %2361
    %2365 = vset.pattern.permute.xlu0 1
    %2366 = vperm.xlu0 %2365, %v2282
    %v2367 = vpop.permute.xlu0 %2366
    %v2369 = vlaneseq
    %v2370 = vshrl.u32 %v2369, 7
    %v2371 = vsub.s32 0, %v2370
    %v2372 = vrot.slane %v2343, %v2371
    %v2373 = vadd.f32 %v2362, %v2372
    %v2374 = vadd.f32 %v2367, %v2372
    %vm2375 = vcmp.gt.f32.partialorder %v2373, 0.0
    %vm2376 = vcmp.gt.f32.partialorder %v2374, 0.0
    %v2377 = vmul.f32 %v2373, 0.2
    %v2378 = vmul.f32 %v2374, 0.2
    %v2379 = vsel %vm2375, %v2373, %v2377
    %v2380 = vsel %vm2376, %v2374, %v2378
    %v2381 = vsel %vm1050, %v2379, -1e+30
    %v2382 = vsel %vm1051, %v2380, -1e+30
    %v2383 = vsel %vm814, %v2381, -inf
    %2384 = vmax.xlane.f32.xlu0 %v2383
    %v2385 = vpop.xlane.xlu0 %2384
    %v2386 = vsel %vm814, %v2382, -inf
    %2387 = vmax.xlane.f32.xlu0 %v2386
    %v2388 = vpop.xlane.xlu0 %2387
    %v2389 = vsub.f32 %v2381, %v2385
    %v2390 = vsub.f32 %v2382, %v2388
    %v2391 = vmul.f32 %v2389, 1.442695
    %v2392 = vpow.pop %v2391
    %v2393 = vmul.f32 %v2390, 1.442695
    %v2394 = vpow.pop %v2393
    %v2395 = vsel %vm814, %v2392, 0.0
    %2396 = vadd.xlane.f32.xlu0 %v2395
    %v2397 = vpop.xlane.xlu0 %2396
    %v2398 = vsel %vm814, %v2394, 0.0
    %2399 = vadd.xlane.f32.xlu0 %v2398
    %v2400 = vpop.xlane.xlu0 %2399
    %v2401 = vrcp.pop %v2397
    %v2402 = vrcp.pop %v2400
    %v2403 = vmul.f32 %v2392, %v2401
    %v2404 = vmul.f32 %v2394, %v2402
    %2405 = vxpose.xlu0.b32.start [1/16] %v2321, 128
    %2406 = vxpose.xlu0.b32.cont [2/16] %v2325, 128
    %2407 = vxpose.xlu0.b32.cont [3/16] 0.0, 128
    %2408 = vxpose.xlu0.b32.cont [4/16] 0.0, 128
    %2409 = vxpose.xlu0.b32.cont [5/16] 0.0, 128
    %2410 = vxpose.xlu0.b32.cont [6/16] 0.0, 128
    %2411 = vxpose.xlu0.b32.cont [7/16] 0.0, 128
    %2412 = vxpose.xlu0.b32.cont [8/16] 0.0, 128
    %2413 = vxpose.xlu0.b32.cont [9/16] 0.0, 128
    %2414 = vxpose.xlu0.b32.cont [10/16] 0.0, 128
    %2415 = vxpose.xlu0.b32.cont [11/16] 0.0, 128
    %2416 = vxpose.xlu0.b32.cont [12/16] 0.0, 128
    %2417 = vxpose.xlu0.b32.cont [13/16] 0.0, 128
    %2418 = vxpose.xlu0.b32.cont [14/16] 0.0, 128
    %2419 = vxpose.xlu0.b32.cont [15/16] 0.0, 128
    %2420 = vxpose.xlu0.b32.end [16/16] 0.0, 128
    %v2421 = vpop.trf.xlu0
    %v2422 = vpop.trf.xlu0
    %v2423 = vpop.trf.xlu0
    %v2424 = vpop.trf.xlu0
    %v2425 = vpop.trf.xlu0
    %v2426 = vpop.trf.xlu0
    %v2427 = vpop.trf.xlu0
    %v2428 = vpop.trf.xlu0
    %v2429 = vpop.trf.xlu0
    %v2430 = vpop.trf.xlu0
    %v2431 = vpop.trf.xlu0
    %v2432 = vpop.trf.xlu0
    %v2433 = vpop.trf.xlu0
    %v2434 = vpop.trf.xlu0
    %v2435 = vpop.trf.xlu0
    %v2436 = vpop.trf.xlu0
    %2438 = vset.pattern.permute.xlu0 1
    %2439 = vperm.xlu0 %2438, %v2321
    %v2440 = vpop.permute.xlu0 %2439
    %2443 = vset.pattern.permute.xlu0 1
    %2444 = vperm.xlu0 %2443, %v2325
    %v2445 = vpop.permute.xlu0 %2444
    %v2447 = vlaneseq
    %v2448 = vshrl.u32 %v2447, 7
    %v2449 = vsub.s32 0, %v2448
    %v2450 = vrot.slane %v2421, %v2449
    %v2451 = vadd.f32 %v2440, %v2450
    %v2452 = vadd.f32 %v2445, %v2450
    %vm2453 = vcmp.gt.f32.partialorder %v2451, 0.0
    %vm2454 = vcmp.gt.f32.partialorder %v2452, 0.0
    %v2455 = vmul.f32 %v2451, 0.2
    %v2456 = vmul.f32 %v2452, 0.2
    %v2457 = vsel %vm2453, %v2451, %v2455
    %v2458 = vsel %vm2454, %v2452, %v2456
    %v2459 = vsel %vm1050, %v2457, -1e+30
    %v2460 = vsel %vm1051, %v2458, -1e+30
    %v2461 = vsel %vm814, %v2459, -inf
    %2462 = vmax.xlane.f32.xlu0 %v2461
    %v2463 = vpop.xlane.xlu0 %2462
    %v2464 = vsel %vm814, %v2460, -inf
    %2465 = vmax.xlane.f32.xlu0 %v2464
    %v2466 = vpop.xlane.xlu0 %2465
    %v2467 = vsub.f32 %v2459, %v2463
    %v2468 = vsub.f32 %v2460, %v2466
    %v2469 = vmul.f32 %v2467, 1.442695
    %v2470 = vpow.pop %v2469
    %v2471 = vmul.f32 %v2468, 1.442695
    %v2472 = vpow.pop %v2471
    %v2473 = vsel %vm814, %v2470, 0.0
    %2474 = vadd.xlane.f32.xlu0 %v2473
    %v2475 = vpop.xlane.xlu0 %2474
    %v2476 = vsel %vm814, %v2472, 0.0
    %2477 = vadd.xlane.f32.xlu0 %v2476
    %v2478 = vpop.xlane.xlu0 %2477
    %v2479 = vrcp.pop %v2475
    %v2480 = vrcp.pop %v2478
    %v2481 = vmul.f32 %v2470, %v2479
    %v2482 = vmul.f32 %v2472, %v2480
    %2485 = vrot.lane.b32.xlu0 %v2481, 16
    %v2486 = vpop.permute.xlu0 %2485
    %2487 = vrot.lane.b32.xlu0 %v2482, 16
    %v2488 = vpop.permute.xlu0 %2487
    %v2491 = vsel %vm814, %v2403, %v2486
    %v2492 = vsel %vm814, %v2404, %v2488
    %v2493 = vpack.c.bf16 %v2492, %v2491
    %v2494 = vpack.c.bf16 %v2280, %v2276
    %v2495 = vpack.c.bf16 %v2323, %v2319
    %v2497 = vsel %vm1173, %v2493, 0
    %2499 = vmatprep.subr.bf16.mxu0 0
    %2500 = vmatpush1.bf16.msra.mxu0 %v2494
    %2501 = vmatprep.subr.bf16.mxu0 0
    %2502 = vmatpush1.bf16.msra.mxu0 %v2495
    %2503 = vmatprep.subr.bf16.mxu0 0
    %2504 = vmatpush1.bf16.msra.mxu0 0
    %2505 = vmatprep.subr.bf16.mxu0 0
    %2506 = vmatpush1.bf16.msra.mxu0 0
    %2507 = vmatprep.subr.bf16.mxu0 0
    %2508 = vmatpush1.bf16.msra.mxu0 0
    %2509 = vmatprep.subr.bf16.mxu0 0
    %2510 = vmatpush1.bf16.msra.mxu0 0
    %2511 = vmatprep.subr.bf16.mxu0 0
    %2512 = vmatpush1.bf16.msra.mxu0 0
    %2513 = vmatprep.subr.bf16.mxu0 0
    %2514 = vmatpush1.bf16.msra.mxu0 0
    %2515 = vmatprep.subr.bf16.mxu0 0
    %2516 = vmatpush1.bf16.msra.mxu0 0
    %2517 = vmatprep.subr.bf16.mxu0 0
    %2518 = vmatpush1.bf16.msra.mxu0 0
    %2519 = vmatprep.subr.bf16.mxu0 0
    %2520 = vmatpush1.bf16.msra.mxu0 0
    %2521 = vmatprep.subr.bf16.mxu0 0
    %2522 = vmatpush1.bf16.msra.mxu0 0
    %2523 = vmatprep.subr.bf16.mxu0 0
    %2524 = vmatpush1.bf16.msra.mxu0 0
    %2525 = vmatprep.subr.bf16.mxu0 0
    %2526 = vmatpush1.bf16.msra.mxu0 0
    %2527 = vmatprep.subr.bf16.mxu0 0
    %2528 = vmatpush1.bf16.msra.mxu0 0
    %2529 = vmatprep.subr.bf16.mxu0 0
    %2530 = vmatpush1.bf16.msra.mxu0 0
    %2531 = vmatprep.mubr.bf16.mxu0 0
    %2532 = vmatmul.mubr.bf16.gmra.mrb[0].mxu0 %v2497
    %v2533 = vpop.f32.mrb[0].mxu0
    %v2534 = vadd.f32 0.0, %v2533
    %v2535 = vpop.f32.mrb[0].mxu0
    %v2536 = vpop.f32.mrb[0].mxu0
    %v2537 = vadd.f32 0.0, %v2536
    %v2538 = vpop.f32.mrb[0].mxu0
    %2539 = vdwg.mxu0
    %v2540 = vmul.f32 %v2534, 0.5
    %v2541 = vmul.f32 %v2537, 0.5
    %v2542 = vld [vmem:[%s11] sm:$0x1]
    %v2544 = vlaneseq
    %v2545 = vshrl.u32 %v2544, 7
    %v2546 = vsub.s32 0, %v2545
    %v2547 = vrot.slane %v2542, %v2546
    %v2549 = vadd.f32 %v2540, %v2547
    %v2550 = vadd.f32 %v2541, %v2547
    %v2551 = vmax.f32 %v2549, 0.0
    %v2552 = vmax.f32 %v2550, 0.0
    %v2553 = vpack.c.bf16 %v2552, %v2551
    %v2554 = vld [vmem:[#allocation15] sm:$0xff]
    %v2555 = vld [vmem:[#allocation15 + $0x8] sm:$0xff]
    %v2556 = vld [vmem:[#allocation15 + $0x10] sm:$0xff]
    %v2557 = vld [vmem:[#allocation15 + $0x18] sm:$0xff]
    %v2558 = vld [vmem:[#allocation15 + $0x20] sm:$0xff]
    %v2559 = vld [vmem:[#allocation15 + $0x28] sm:$0xff]
    %v2560 = vld [vmem:[#allocation15 + $0x30] sm:$0xff]
    %v2561 = vld [vmem:[#allocation15 + $0x38] sm:$0xff]
    %v2562 = vld [vmem:[#allocation15 + $0x40] sm:$0xff]
    %v2563 = vld [vmem:[#allocation15 + $0x48] sm:$0xff]
    %v2564 = vld [vmem:[#allocation15 + $0x50] sm:$0xff]
    %v2565 = vld [vmem:[#allocation15 + $0x58] sm:$0xff]
    %v2566 = vld [vmem:[#allocation15 + $0x60] sm:$0xff]
    %v2567 = vld [vmem:[#allocation15 + $0x68] sm:$0xff]
    %v2568 = vld [vmem:[#allocation15 + $0x70] sm:$0xff]
    %v2569 = vld [vmem:[#allocation15 + $0x78] sm:$0xff]
    %v2570 = vld [vmem:[#allocation15 + $0x80] sm:$0xff]
    %v2571 = vld [vmem:[#allocation15 + $0x88] sm:$0xff]
    %v2572 = vld [vmem:[#allocation15 + $0x90] sm:$0xff]
    %v2573 = vld [vmem:[#allocation15 + $0x98] sm:$0xff]
    %v2574 = vld [vmem:[#allocation15 + $0xa0] sm:$0xff]
    %v2575 = vld [vmem:[#allocation15 + $0xa8] sm:$0xff]
    %v2576 = vld [vmem:[#allocation15 + $0xb0] sm:$0xff]
    %v2577 = vld [vmem:[#allocation15 + $0xb8] sm:$0xff]
    %v2578 = vld [vmem:[#allocation15 + $0xc0] sm:$0xff]
    %v2579 = vld [vmem:[#allocation15 + $0xc8] sm:$0xff]
    %v2580 = vld [vmem:[#allocation15 + $0xd0] sm:$0xff]
    %v2581 = vld [vmem:[#allocation15 + $0xd8] sm:$0xff]
    %v2582 = vld [vmem:[#allocation15 + $0xe0] sm:$0xff]
    %v2583 = vld [vmem:[#allocation15 + $0xe8] sm:$0xff]
    %v2584 = vld [vmem:[#allocation15 + $0xf0] sm:$0xff]
    %v2585 = vld [vmem:[#allocation15 + $0xf8] sm:$0xff]
    %v2586 = vld [vmem:[#allocation15 + $0x100] sm:$0xff]
    %v2587 = vld [vmem:[#allocation15 + $0x108] sm:$0xff]
    %v2588 = vld [vmem:[#allocation15 + $0x110] sm:$0xff]
    %v2589 = vld [vmem:[#allocation15 + $0x118] sm:$0xff]
    %v2590 = vld [vmem:[#allocation15 + $0x120] sm:$0xff]
    %v2591 = vld [vmem:[#allocation15 + $0x128] sm:$0xff]
    %v2592 = vld [vmem:[#allocation15 + $0x130] sm:$0xff]
    %v2593 = vld [vmem:[#allocation15 + $0x138] sm:$0xff]
    %v2594 = vld [vmem:[#allocation15 + $0x140] sm:$0xff]
    %v2595 = vld [vmem:[#allocation15 + $0x148] sm:$0xff]
    %v2596 = vld [vmem:[#allocation15 + $0x150] sm:$0xff]
    %v2597 = vld [vmem:[#allocation15 + $0x158] sm:$0xff]
    %v2598 = vld [vmem:[#allocation15 + $0x160] sm:$0xff]
    %v2599 = vld [vmem:[#allocation15 + $0x168] sm:$0xff]
    %v2600 = vld [vmem:[#allocation15 + $0x170] sm:$0xff]
    %v2601 = vld [vmem:[#allocation15 + $0x178] sm:$0xff]
    %v2650 = vunpack.c.l.b16 %v2554
    %v2651 = vunpack.c.h.b16 %v2554
    %v2652 = vunpack.c.l.b16 %v2555
    %v2653 = vunpack.c.h.b16 %v2555
    %v2654 = vunpack.c.l.b16 %v2556
    %v2655 = vunpack.c.h.b16 %v2556
    %v2656 = vunpack.c.l.b16 %v2557
    %v2657 = vunpack.c.h.b16 %v2557
    %v2658 = vunpack.c.l.b16 %v2558
    %v2659 = vunpack.c.h.b16 %v2558
    %v2660 = vunpack.c.l.b16 %v2559
    %v2661 = vunpack.c.h.b16 %v2559
    %v2662 = vunpack.c.l.b16 %v2560
    %v2663 = vunpack.c.h.b16 %v2560
    %v2664 = vunpack.c.l.b16 %v2561
    %v2665 = vunpack.c.h.b16 %v2561
    %v2666 = vunpack.c.l.b16 %v2562
    %v2667 = vunpack.c.h.b16 %v2562
    %v2668 = vunpack.c.l.b16 %v2563
    %v2669 = vunpack.c.h.b16 %v2563
    %v2670 = vunpack.c.l.b16 %v2564
    %v2671 = vunpack.c.h.b16 %v2564
    %v2672 = vunpack.c.l.b16 %v2565
    %v2673 = vunpack.c.h.b16 %v2565
    %v2674 = vunpack.c.l.b16 %v2566
    %v2675 = vunpack.c.h.b16 %v2566
    %v2676 = vunpack.c.l.b16 %v2567
    %v2677 = vunpack.c.h.b16 %v2567
    %v2678 = vunpack.c.l.b16 %v2568
    %v2679 = vunpack.c.h.b16 %v2568
    %v2680 = vunpack.c.l.b16 %v2569
    %v2681 = vunpack.c.h.b16 %v2569
    %v2682 = vunpack.c.l.b16 %v2570
    %v2683 = vunpack.c.h.b16 %v2570
    %v2684 = vunpack.c.l.b16 %v2571
    %v2685 = vunpack.c.h.b16 %v2571
    %v2686 = vunpack.c.l.b16 %v2572
    %v2687 = vunpack.c.h.b16 %v2572
    %v2688 = vunpack.c.l.b16 %v2573
    %v2689 = vunpack.c.h.b16 %v2573
    %v2690 = vunpack.c.l.b16 %v2574
    %v2691 = vunpack.c.h.b16 %v2574
    %v2692 = vunpack.c.l.b16 %v2575
    %v2693 = vunpack.c.h.b16 %v2575
    %v2694 = vunpack.c.l.b16 %v2576
    %v2695 = vunpack.c.h.b16 %v2576
    %v2696 = vunpack.c.l.b16 %v2577
    %v2697 = vunpack.c.h.b16 %v2577
    %v2698 = vunpack.c.l.b16 %v2578
    %v2699 = vunpack.c.h.b16 %v2578
    %v2700 = vunpack.c.l.b16 %v2579
    %v2701 = vunpack.c.h.b16 %v2579
    %v2702 = vunpack.c.l.b16 %v2580
    %v2703 = vunpack.c.h.b16 %v2580
    %v2704 = vunpack.c.l.b16 %v2581
    %v2705 = vunpack.c.h.b16 %v2581
    %v2706 = vunpack.c.l.b16 %v2582
    %v2707 = vunpack.c.h.b16 %v2582
    %v2708 = vunpack.c.l.b16 %v2583
    %v2709 = vunpack.c.h.b16 %v2583
    %v2710 = vunpack.c.l.b16 %v2584
    %v2711 = vunpack.c.h.b16 %v2584
    %v2712 = vunpack.c.l.b16 %v2585
    %v2713 = vunpack.c.h.b16 %v2585
    %v2714 = vunpack.c.l.b16 %v2586
    %v2715 = vunpack.c.h.b16 %v2586
    %v2716 = vunpack.c.l.b16 %v2587
    %v2717 = vunpack.c.h.b16 %v2587
    %v2718 = vunpack.c.l.b16 %v2588
    %v2719 = vunpack.c.h.b16 %v2588
    %v2720 = vunpack.c.l.b16 %v2589
    %v2721 = vunpack.c.h.b16 %v2589
    %v2722 = vunpack.c.l.b16 %v2590
    %v2723 = vunpack.c.h.b16 %v2590
    %v2724 = vunpack.c.l.b16 %v2591
    %v2725 = vunpack.c.h.b16 %v2591
    %v2726 = vunpack.c.l.b16 %v2592
    %v2727 = vunpack.c.h.b16 %v2592
    %v2728 = vunpack.c.l.b16 %v2593
    %v2729 = vunpack.c.h.b16 %v2593
    %v2730 = vunpack.c.l.b16 %v2594
    %v2731 = vunpack.c.h.b16 %v2594
    %v2732 = vunpack.c.l.b16 %v2595
    %v2733 = vunpack.c.h.b16 %v2595
    %v2734 = vunpack.c.l.b16 %v2596
    %v2735 = vunpack.c.h.b16 %v2596
    %v2736 = vunpack.c.l.b16 %v2597
    %v2737 = vunpack.c.h.b16 %v2597
    %v2738 = vunpack.c.l.b16 %v2598
    %v2739 = vunpack.c.h.b16 %v2598
    %v2740 = vunpack.c.l.b16 %v2599
    %v2741 = vunpack.c.h.b16 %v2599
    %v2742 = vunpack.c.l.b16 %v2600
    %v2743 = vunpack.c.h.b16 %v2600
    %v2744 = vunpack.c.l.b16 %v2601
    %v2745 = vunpack.c.h.b16 %v2601
    %v2746 = vpack.c.b16 %v2656, %v2650
    %v2747 = vpack.c.b16 %v2657, %v2651
    %v2748 = vpack.c.b16 %v2658, %v2652
    %v2749 = vpack.c.b16 %v2659, %v2653
    %v2750 = vpack.c.b16 %v2660, %v2654
    %v2751 = vpack.c.b16 %v2661, %v2655
    %v2752 = vpack.c.b16 %v2668, %v2662
    %v2753 = vpack.c.b16 %v2669, %v2663
    %v2754 = vpack.c.b16 %v2670, %v2664
    %v2755 = vpack.c.b16 %v2671, %v2665
    %v2756 = vpack.c.b16 %v2672, %v2666
    %v2757 = vpack.c.b16 %v2673, %v2667
    %v2758 = vpack.c.b16 %v2680, %v2674
    %v2759 = vpack.c.b16 %v2681, %v2675
    %v2760 = vpack.c.b16 %v2682, %v2676
    %v2761 = vpack.c.b16 %v2683, %v2677
    %v2762 = vpack.c.b16 %v2684, %v2678
    %v2763 = vpack.c.b16 %v2685, %v2679
    %v2764 = vpack.c.b16 %v2692, %v2686
    %v2765 = vpack.c.b16 %v2693, %v2687
    %v2766 = vpack.c.b16 %v2694, %v2688
    %v2767 = vpack.c.b16 %v2695, %v2689
    %v2768 = vpack.c.b16 %v2696, %v2690
    %v2769 = vpack.c.b16 %v2697, %v2691
    %v2770 = vpack.c.b16 %v2704, %v2698
    %v2771 = vpack.c.b16 %v2705, %v2699
    %v2772 = vpack.c.b16 %v2706, %v2700
    %v2773 = vpack.c.b16 %v2707, %v2701
    %v2774 = vpack.c.b16 %v2708, %v2702
    %v2775 = vpack.c.b16 %v2709, %v2703
    %v2776 = vpack.c.b16 %v2716, %v2710
    %v2777 = vpack.c.b16 %v2717, %v2711
    %v2778 = vpack.c.b16 %v2718, %v2712
    %v2779 = vpack.c.b16 %v2719, %v2713
    %v2780 = vpack.c.b16 %v2720, %v2714
    %v2781 = vpack.c.b16 %v2721, %v2715
    %v2782 = vpack.c.b16 %v2728, %v2722
    %v2783 = vpack.c.b16 %v2729, %v2723
    %v2784 = vpack.c.b16 %v2730, %v2724
    %v2785 = vpack.c.b16 %v2731, %v2725
    %v2786 = vpack.c.b16 %v2732, %v2726
    %v2787 = vpack.c.b16 %v2733, %v2727
    %v2788 = vpack.c.b16 %v2740, %v2734
    %v2789 = vpack.c.b16 %v2741, %v2735
    %v2790 = vpack.c.b16 %v2742, %v2736
    %v2791 = vpack.c.b16 %v2743, %v2737
    %v2792 = vpack.c.b16 %v2744, %v2738
    %v2793 = vpack.c.b16 %v2745, %v2739
    %2842 = vmatprep.subr.bf16.mxu0 %v2747
    %2843 = vmatpush1.bf16.msra.mxu0 %v2746
    %2844 = vmatprep.subr.bf16.mxu0 %v2753
    %2845 = vmatpush1.bf16.msra.mxu0 %v2752
    %2846 = vmatprep.subr.bf16.mxu0 %v2759
    %2847 = vmatpush1.bf16.msra.mxu0 %v2758
    %2848 = vmatprep.subr.bf16.mxu0 %v2765
    %2849 = vmatpush1.bf16.msra.mxu0 %v2764
    %2850 = vmatprep.subr.bf16.mxu0 %v2771
    %2851 = vmatpush1.bf16.msra.mxu0 %v2770
    %2852 = vmatprep.subr.bf16.mxu0 %v2777
    %2853 = vmatpush1.bf16.msra.mxu0 %v2776
    %2854 = vmatprep.subr.bf16.mxu0 %v2783
    %2855 = vmatpush1.bf16.msra.mxu0 %v2782
    %2856 = vmatprep.subr.bf16.mxu0 %v2789
    %2857 = vmatpush1.bf16.msra.mxu0 %v2788
    %2858 = vmatprep.subr.bf16.mxu0 0
    %2859 = vmatpush1.bf16.msra.mxu0 0
    %2860 = vmatprep.subr.bf16.mxu0 0
    %2861 = vmatpush1.bf16.msra.mxu0 0
    %2862 = vmatprep.subr.bf16.mxu0 0
    %2863 = vmatpush1.bf16.msra.mxu0 0
    %2864 = vmatprep.subr.bf16.mxu0 0
    %2865 = vmatpush1.bf16.msra.mxu0 0
    %2866 = vmatprep.subr.bf16.mxu0 0
    %2867 = vmatpush1.bf16.msra.mxu0 0
    %2868 = vmatprep.subr.bf16.mxu0 0
    %2869 = vmatpush1.bf16.msra.mxu0 0
    %2870 = vmatprep.subr.bf16.mxu0 0
    %2871 = vmatpush1.bf16.msra.mxu0 0
    %2872 = vmatprep.subr.bf16.mxu0 0
    %2873 = vmatpush1.bf16.msra.mxu0 0
    %2874 = vmatprep.mubr.bf16.mxu0 0
    %2875 = vmatmul.mubr.bf16.gmra.mrb[0].mxu0 %v2553
    %v2876 = vpop.f32.mrb[0].mxu0
    %v2877 = vadd.f32 0.0, %v2876
    %v2878 = vpop.f32.mrb[0].mxu0
    %v2879 = vadd.f32 0.0, %v2878
    %v2880 = vpop.f32.mrb[0].mxu0
    %v2881 = vadd.f32 0.0, %v2880
    %v2882 = vpop.f32.mrb[0].mxu0
    %v2883 = vadd.f32 0.0, %v2882
    %2884 = vdwg.mxu0
    %2885 = vmatprep.subr.bf16.mxu0 %v2749
    %2886 = vmatpush1.bf16.msra.mxu0 %v2748
    %2887 = vmatprep.subr.bf16.mxu0 %v2755
    %2888 = vmatpush1.bf16.msra.mxu0 %v2754
    %2889 = vmatprep.subr.bf16.mxu0 %v2761
    %2890 = vmatpush1.bf16.msra.mxu0 %v2760
    %2891 = vmatprep.subr.bf16.mxu0 %v2767
    %2892 = vmatpush1.bf16.msra.mxu0 %v2766
    %2893 = vmatprep.subr.bf16.mxu0 %v2773
    %2894 = vmatpush1.bf16.msra.mxu0 %v2772
    %2895 = vmatprep.subr.bf16.mxu0 %v2779
    %2896 = vmatpush1.bf16.msra.mxu0 %v2778
    %2897 = vmatprep.subr.bf16.mxu0 %v2785
    %2898 = vmatpush1.bf16.msra.mxu0 %v2784
    %2899 = vmatprep.subr.bf16.mxu0 %v2791
    %2900 = vmatpush1.bf16.msra.mxu0 %v2790
    %2901 = vmatprep.subr.bf16.mxu0 0
    %2902 = vmatpush1.bf16.msra.mxu0 0
    %2903 = vmatprep.subr.bf16.mxu0 0
    %2904 = vmatpush1.bf16.msra.mxu0 0
    %2905 = vmatprep.subr.bf16.mxu0 0
    %2906 = vmatpush1.bf16.msra.mxu0 0
    %2907 = vmatprep.subr.bf16.mxu0 0
    %2908 = vmatpush1.bf16.msra.mxu0 0
    %2909 = vmatprep.subr.bf16.mxu0 0
    %2910 = vmatpush1.bf16.msra.mxu0 0
    %2911 = vmatprep.subr.bf16.mxu0 0
    %2912 = vmatpush1.bf16.msra.mxu0 0
    %2913 = vmatprep.subr.bf16.mxu0 0
    %2914 = vmatpush1.bf16.msra.mxu0 0
    %2915 = vmatprep.subr.bf16.mxu0 0
    %2916 = vmatpush1.bf16.msra.mxu0 0
    %2917 = vmatprep.mubr.bf16.mxu0 0
    %2918 = vmatmul.mubr.bf16.gmra.mrb[0].mxu0 %v2553
    %v2919 = vpop.f32.mrb[0].mxu0
    %v2920 = vadd.f32 0.0, %v2919
    %v2921 = vpop.f32.mrb[0].mxu0
    %v2922 = vadd.f32 0.0, %v2921
    %v2923 = vpop.f32.mrb[0].mxu0
    %v2924 = vadd.f32 0.0, %v2923
    %v2925 = vpop.f32.mrb[0].mxu0
    %v2926 = vadd.f32 0.0, %v2925
    %2927 = vdwg.mxu0
    %2928 = vmatprep.subr.bf16.mxu0 %v2751
    %2929 = vmatpush1.bf16.msra.mxu0 %v2750
    %2930 = vmatprep.subr.bf16.mxu0 %v2757
    %2931 = vmatpush1.bf16.msra.mxu0 %v2756
    %2932 = vmatprep.subr.bf16.mxu0 %v2763
    %2933 = vmatpush1.bf16.msra.mxu0 %v2762
    %2934 = vmatprep.subr.bf16.mxu0 %v2769
    %2935 = vmatpush1.bf16.msra.mxu0 %v2768
    %2936 = vmatprep.subr.bf16.mxu0 %v2775
    %2937 = vmatpush1.bf16.msra.mxu0 %v2774
    %2938 = vmatprep.subr.bf16.mxu0 %v2781
    %2939 = vmatpush1.bf16.msra.mxu0 %v2780
    %2940 = vmatprep.subr.bf16.mxu0 %v2787
    %2941 = vmatpush1.bf16.msra.mxu0 %v2786
    %2942 = vmatprep.subr.bf16.mxu0 %v2793
    %2943 = vmatpush1.bf16.msra.mxu0 %v2792
    %2944 = vmatprep.subr.bf16.mxu0 0
    %2945 = vmatpush1.bf16.msra.mxu0 0
    %2946 = vmatprep.subr.bf16.mxu0 0
    %2947 = vmatpush1.bf16.msra.mxu0 0
    %2948 = vmatprep.subr.bf16.mxu0 0
    %2949 = vmatpush1.bf16.msra.mxu0 0
    %2950 = vmatprep.subr.bf16.mxu0 0
    %2951 = vmatpush1.bf16.msra.mxu0 0
    %2952 = vmatprep.subr.bf16.mxu0 0
    %2953 = vmatpush1.bf16.msra.mxu0 0
    %2954 = vmatprep.subr.bf16.mxu0 0
    %2955 = vmatpush1.bf16.msra.mxu0 0
    %2956 = vmatprep.subr.bf16.mxu0 0
    %2957 = vmatpush1.bf16.msra.mxu0 0
    %2958 = vmatprep.subr.bf16.mxu0 0
    %2959 = vmatpush1.bf16.msra.mxu0 0
    %2960 = vmatprep.mubr.bf16.mxu0 0
    %2961 = vmatmul.mubr.bf16.gmra.mrb[0].mxu0 %v2553
    %v2962 = vpop.f32.mrb[0].mxu0
    %v2963 = vadd.f32 0.0, %v2962
    %v2964 = vpop.f32.mrb[0].mxu0
    %v2965 = vadd.f32 0.0, %v2964
    %v2966 = vpop.f32.mrb[0].mxu0
    %v2967 = vadd.f32 0.0, %v2966
    %v2968 = vpop.f32.mrb[0].mxu0
    %v2969 = vadd.f32 0.0, %v2968
    %2970 = vdwg.mxu0
    %2971 = vxpose.xlu0.b32.start [1/16] %v2920, 128
    %2972 = vxpose.xlu0.b32.cont [2/16] %v2924, 128
    %2973 = vxpose.xlu0.b32.cont [3/16] 0.0, 128
    %2974 = vxpose.xlu0.b32.cont [4/16] 0.0, 128
    %2975 = vxpose.xlu0.b32.cont [5/16] 0.0, 128
    %2976 = vxpose.xlu0.b32.cont [6/16] 0.0, 128
    %2977 = vxpose.xlu0.b32.cont [7/16] 0.0, 128
    %2978 = vxpose.xlu0.b32.cont [8/16] 0.0, 128
    %2979 = vxpose.xlu0.b32.cont [9/16] 0.0, 128
    %2980 = vxpose.xlu0.b32.cont [10/16] 0.0, 128
    %2981 = vxpose.xlu0.b32.cont [11/16] 0.0, 128
    %2982 = vxpose.xlu0.b32.cont [12/16] 0.0, 128
    %2983 = vxpose.xlu0.b32.cont [13/16] 0.0, 128
    %2984 = vxpose.xlu0.b32.cont [14/16] 0.0, 128
    %2985 = vxpose.xlu0.b32.cont [15/16] 0.0, 128
    %2986 = vxpose.xlu0.b32.end [16/16] 0.0, 128
    %v2987 = vpop.trf.xlu0
    %v2988 = vpop.trf.xlu0
    %v2989 = vpop.trf.xlu0
    %v2990 = vpop.trf.xlu0
    %v2991 = vpop.trf.xlu0
    %v2992 = vpop.trf.xlu0
    %v2993 = vpop.trf.xlu0
    %v2994 = vpop.trf.xlu0
    %v2995 = vpop.trf.xlu0
    %v2996 = vpop.trf.xlu0
    %v2997 = vpop.trf.xlu0
    %v2998 = vpop.trf.xlu0
    %v2999 = vpop.trf.xlu0
    %v3000 = vpop.trf.xlu0
    %v3001 = vpop.trf.xlu0
    %v3002 = vpop.trf.xlu0
    %3004 = vset.pattern.permute.xlu0 1
    %3005 = vperm.xlu0 %3004, %v2920
    %v3006 = vpop.permute.xlu0 %3005
    %3009 = vset.pattern.permute.xlu0 1
    %3010 = vperm.xlu0 %3009, %v2924
    %v3011 = vpop.permute.xlu0 %3010
    %v3013 = vlaneseq
    %v3014 = vshrl.u32 %v3013, 7
    %v3015 = vsub.s32 0, %v3014
    %v3016 = vrot.slane %v2987, %v3015
    %v3017 = vadd.f32 %v3006, %v3016
    %v3018 = vadd.f32 %v3011, %v3016
    %vm3019 = vcmp.gt.f32.partialorder %v3017, 0.0
    %vm3020 = vcmp.gt.f32.partialorder %v3018, 0.0
    %v3021 = vmul.f32 %v3017, 0.2
    %v3022 = vmul.f32 %v3018, 0.2
    %v3023 = vsel %vm3019, %v3017, %v3021
    %v3024 = vsel %vm3020, %v3018, %v3022
    %v3025 = vsel %vm1050, %v3023, -1e+30
    %v3026 = vsel %vm1051, %v3024, -1e+30
    %v3027 = vsel %vm814, %v3025, -inf
    %3028 = vmax.xlane.f32.xlu0 %v3027
    %v3029 = vpop.xlane.xlu0 %3028
    %v3030 = vsel %vm814, %v3026, -inf
    %3031 = vmax.xlane.f32.xlu0 %v3030
    %v3032 = vpop.xlane.xlu0 %3031
    %v3033 = vsub.f32 %v3025, %v3029
    %v3034 = vsub.f32 %v3026, %v3032
    %v3035 = vmul.f32 %v3033, 1.442695
    %v3036 = vpow.pop %v3035
    %v3037 = vmul.f32 %v3034, 1.442695
    %v3038 = vpow.pop %v3037
    %v3039 = vsel %vm814, %v3036, 0.0
    %3040 = vadd.xlane.f32.xlu0 %v3039
    %v3041 = vpop.xlane.xlu0 %3040
    %v3042 = vsel %vm814, %v3038, 0.0
    %3043 = vadd.xlane.f32.xlu0 %v3042
    %v3044 = vpop.xlane.xlu0 %3043
    %v3045 = vrcp.pop %v3041
    %v3046 = vrcp.pop %v3044
    %v3047 = vmul.f32 %v3036, %v3045
    %v3048 = vmul.f32 %v3038, %v3046
    %3049 = vxpose.xlu0.b32.start [1/16] %v2965, 128
    %3050 = vxpose.xlu0.b32.cont [2/16] %v2969, 128
    %3051 = vxpose.xlu0.b32.cont [3/16] 0.0, 128
    %3052 = vxpose.xlu0.b32.cont [4/16] 0.0, 128
    %3053 = vxpose.xlu0.b32.cont [5/16] 0.0, 128
    %3054 = vxpose.xlu0.b32.cont [6/16] 0.0, 128
    %3055 = vxpose.xlu0.b32.cont [7/16] 0.0, 128
    %3056 = vxpose.xlu0.b32.cont [8/16] 0.0, 128
    %3057 = vxpose.xlu0.b32.cont [9/16] 0.0, 128
    %3058 = vxpose.xlu0.b32.cont [10/16] 0.0, 128
    %3059 = vxpose.xlu0.b32.cont [11/16] 0.0, 128
    %3060 = vxpose.xlu0.b32.cont [12/16] 0.0, 128
    %3061 = vxpose.xlu0.b32.cont [13/16] 0.0, 128
    %3062 = vxpose.xlu0.b32.cont [14/16] 0.0, 128
    %3063 = vxpose.xlu0.b32.cont [15/16] 0.0, 128
    %3064 = vxpose.xlu0.b32.end [16/16] 0.0, 128
    %v3065 = vpop.trf.xlu0
    %v3066 = vpop.trf.xlu0
    %v3067 = vpop.trf.xlu0
    %v3068 = vpop.trf.xlu0
    %v3069 = vpop.trf.xlu0
    %v3070 = vpop.trf.xlu0
    %v3071 = vpop.trf.xlu0
    %v3072 = vpop.trf.xlu0
    %v3073 = vpop.trf.xlu0
    %v3074 = vpop.trf.xlu0
    %v3075 = vpop.trf.xlu0
    %v3076 = vpop.trf.xlu0
    %v3077 = vpop.trf.xlu0
    %v3078 = vpop.trf.xlu0
    %v3079 = vpop.trf.xlu0
    %v3080 = vpop.trf.xlu0
    %3082 = vset.pattern.permute.xlu0 1
    %3083 = vperm.xlu0 %3082, %v2965
    %v3084 = vpop.permute.xlu0 %3083
    %3087 = vset.pattern.permute.xlu0 1
    %3088 = vperm.xlu0 %3087, %v2969
    %v3089 = vpop.permute.xlu0 %3088
    %v3091 = vlaneseq
    %v3092 = vshrl.u32 %v3091, 7
    %v3093 = vsub.s32 0, %v3092
    %v3094 = vrot.slane %v3065, %v3093
    %v3095 = vadd.f32 %v3084, %v3094
    %v3096 = vadd.f32 %v3089, %v3094
    %vm3097 = vcmp.gt.f32.partialorder %v3095, 0.0
    %vm3098 = vcmp.gt.f32.partialorder %v3096, 0.0
    %v3099 = vmul.f32 %v3095, 0.2
    %v3100 = vmul.f32 %v3096, 0.2
    %v3101 = vsel %vm3097, %v3095, %v3099
    %v3102 = vsel %vm3098, %v3096, %v3100
    %v3103 = vsel %vm1050, %v3101, -1e+30
    %v3104 = vsel %vm1051, %v3102, -1e+30
    %v3105 = vsel %vm814, %v3103, -inf
    %3106 = vmax.xlane.f32.xlu0 %v3105
    %v3107 = vpop.xlane.xlu0 %3106
    %v3108 = vsel %vm814, %v3104, -inf
    %3109 = vmax.xlane.f32.xlu0 %v3108
    %v3110 = vpop.xlane.xlu0 %3109
    %v3111 = vsub.f32 %v3103, %v3107
    %v3112 = vsub.f32 %v3104, %v3110
    %v3113 = vmul.f32 %v3111, 1.442695
    %v3114 = vpow.pop %v3113
    %v3115 = vmul.f32 %v3112, 1.442695
    %v3116 = vpow.pop %v3115
    %v3117 = vsel %vm814, %v3114, 0.0
    %3118 = vadd.xlane.f32.xlu0 %v3117
    %v3119 = vpop.xlane.xlu0 %3118
    %v3120 = vsel %vm814, %v3116, 0.0
    %3121 = vadd.xlane.f32.xlu0 %v3120
    %v3122 = vpop.xlane.xlu0 %3121
    %v3123 = vrcp.pop %v3119
    %v3124 = vrcp.pop %v3122
    %v3125 = vmul.f32 %v3114, %v3123
    %v3126 = vmul.f32 %v3116, %v3124
    %3129 = vrot.lane.b32.xlu0 %v3125, 16
    %v3130 = vpop.permute.xlu0 %3129
    %3131 = vrot.lane.b32.xlu0 %v3126, 16
    %v3132 = vpop.permute.xlu0 %3131
    %v3135 = vsel %vm814, %v3047, %v3130
    %v3136 = vsel %vm814, %v3048, %v3132
    %v3137 = vpack.c.bf16 %v3136, %v3135
    %v3138 = vpack.c.bf16 %v2881, %v2877
    %v3139 = vpack.c.bf16 %v2883, %v2879
    %v3140 = vpack.c.bf16 %v2926, %v2922
    %v3141 = vpack.c.bf16 %v2967, %v2963
    %v3143 = vsel %vm1173, %v3137, 0
    %3145 = vmatprep.subr.bf16.mxu0 %v3139
    %3146 = vmatpush1.bf16.msra.mxu0 %v3138
    %3147 = vmatprep.subr.bf16.mxu0 %v3141
    %3148 = vmatpush1.bf16.msra.mxu0 %v3140
    %3149 = vmatprep.subr.bf16.mxu0 0
    %3150 = vmatpush1.bf16.msra.mxu0 0
    %3151 = vmatprep.subr.bf16.mxu0 0
    %3152 = vmatpush1.bf16.msra.mxu0 0
    %3153 = vmatprep.subr.bf16.mxu0 0
    %3154 = vmatpush1.bf16.msra.mxu0 0
    %3155 = vmatprep.subr.bf16.mxu0 0
    %3156 = vmatpush1.bf16.msra.mxu0 0
    %3157 = vmatprep.subr.bf16.mxu0 0
    %3158 = vmatpush1.bf16.msra.mxu0 0
    %3159 = vmatprep.subr.bf16.mxu0 0
    %3160 = vmatpush1.bf16.msra.mxu0 0
    %3161 = vmatprep.subr.bf16.mxu0 0
    %3162 = vmatpush1.bf16.msra.mxu0 0
    %3163 = vmatprep.subr.bf16.mxu0 0
    %3164 = vmatpush1.bf16.msra.mxu0 0
    %3165 = vmatprep.subr.bf16.mxu0 0
    %3166 = vmatpush1.bf16.msra.mxu0 0
    %3167 = vmatprep.subr.bf16.mxu0 0
    %3168 = vmatpush1.bf16.msra.mxu0 0
    %3169 = vmatprep.subr.bf16.mxu0 0
    %3170 = vmatpush1.bf16.msra.mxu0 0
    %3171 = vmatprep.subr.bf16.mxu0 0
    %3172 = vmatpush1.bf16.msra.mxu0 0
    %3173 = vmatprep.subr.bf16.mxu0 0
    %3174 = vmatpush1.bf16.msra.mxu0 0
    %3175 = vmatprep.subr.bf16.mxu0 0
    %3176 = vmatpush1.bf16.msra.mxu0 0
    %3177 = vmatprep.mubr.bf16.mxu0 0
    %3178 = vmatmul.mubr.bf16.gmra.mrb[0].mxu0 %v3143
    %v3179 = vpop.f32.mrb[0].mxu0
    %v3180 = vadd.f32 0.0, %v3179
    %v3181 = vpop.f32.mrb[0].mxu0
    %v3182 = vadd.f32 0.0, %v3181
    %v3183 = vpop.f32.mrb[0].mxu0
    %v3184 = vadd.f32 0.0, %v3183
    %v3185 = vpop.f32.mrb[0].mxu0
    %v3186 = vadd.f32 0.0, %v3185
    %3187 = vdwg.mxu0
    %v3188 = vmul.f32 %v3180, 0.5
    %v3189 = vmul.f32 %v3182, 0.5
    %v3190 = vmul.f32 %v3184, 0.5
    %v3191 = vmul.f32 %v3186, 0.5
    %v3192 = vld [vmem:[%s13] sm:$0x3]
    %v3194 = vlaneseq
    %v3195 = vshrl.u32 %v3194, 7
    %v3196 = vsub.s32 0, %v3195
    %v3197 = vrot.slane %v3192, %v3196
    %v3198 = vlaneseq
    %v3199 = vshrl.u32 %v3198, 7
    %v3200 = vsub.s32 1, %v3199
    %v3201 = vrot.slane %v3192, %v3200
    %v3204 = vadd.f32 %v3188, %v3197
    %v3205 = vadd.f32 %v3189, %v3201
    %v3206 = vadd.f32 %v3190, %v3197
    %v3207 = vadd.f32 %v3191, %v3201
    %v3208 = vmax.f32 %v3204, 0.0
    %v3209 = vmax.f32 %v3205, 0.0
    %v3210 = vmax.f32 %v3206, 0.0
    %v3211 = vmax.f32 %v3207, 0.0
    %v3212 = vpack.c.bf16 %v3210, %v3208
    %v3213 = vpack.c.bf16 %v3211, %v3209
    %v3214 = vld [vmem:[#allocation16] sm:$0xff]
    %v3215 = vld [vmem:[#allocation16 + $0x8] sm:$0xff]
    %v3216 = vld [vmem:[#allocation16 + $0x10] sm:$0xff]
    %v3217 = vld [vmem:[#allocation16 + $0x18] sm:$0xff]
    %v3218 = vld [vmem:[#allocation16 + $0x20] sm:$0xff]
    %v3219 = vld [vmem:[#allocation16 + $0x28] sm:$0xff]
    %v3220 = vld [vmem:[#allocation16 + $0x30] sm:$0xff]
    %v3221 = vld [vmem:[#allocation16 + $0x38] sm:$0xff]
    %v3222 = vld [vmem:[#allocation16 + $0x40] sm:$0xff]
    %v3223 = vld [vmem:[#allocation16 + $0x48] sm:$0xff]
    %v3224 = vld [vmem:[#allocation16 + $0x50] sm:$0xff]
    %v3225 = vld [vmem:[#allocation16 + $0x58] sm:$0xff]
    %v3226 = vld [vmem:[#allocation16 + $0x60] sm:$0xff]
    %v3227 = vld [vmem:[#allocation16 + $0x68] sm:$0xff]
    %v3228 = vld [vmem:[#allocation16 + $0x70] sm:$0xff]
    %v3229 = vld [vmem:[#allocation16 + $0x78] sm:$0xff]
    %v3230 = vld [vmem:[#allocation16 + $0x80] sm:$0xff]
    %v3231 = vld [vmem:[#allocation16 + $0x88] sm:$0xff]
    %v3232 = vld [vmem:[#allocation16 + $0x90] sm:$0xff]
    %v3233 = vld [vmem:[#allocation16 + $0x98] sm:$0xff]
    %v3234 = vld [vmem:[#allocation16 + $0xa0] sm:$0xff]
    %v3235 = vld [vmem:[#allocation16 + $0xa8] sm:$0xff]
    %v3236 = vld [vmem:[#allocation16 + $0xb0] sm:$0xff]
    %v3237 = vld [vmem:[#allocation16 + $0xb8] sm:$0xff]
    %v3238 = vld [vmem:[#allocation16 + $0xc0] sm:$0xff]
    %v3239 = vld [vmem:[#allocation16 + $0xc8] sm:$0xff]
    %v3240 = vld [vmem:[#allocation16 + $0xd0] sm:$0xff]
    %v3241 = vld [vmem:[#allocation16 + $0xd8] sm:$0xff]
    %v3242 = vld [vmem:[#allocation16 + $0xe0] sm:$0xff]
    %v3243 = vld [vmem:[#allocation16 + $0xe8] sm:$0xff]
    %v3244 = vld [vmem:[#allocation16 + $0xf0] sm:$0xff]
    %v3245 = vld [vmem:[#allocation16 + $0xf8] sm:$0xff]
    %v3246 = vld [vmem:[#allocation16 + $0x100] sm:$0xff]
    %v3247 = vld [vmem:[#allocation16 + $0x108] sm:$0xff]
    %v3248 = vld [vmem:[#allocation16 + $0x110] sm:$0xff]
    %v3249 = vld [vmem:[#allocation16 + $0x118] sm:$0xff]
    %v3250 = vld [vmem:[#allocation16 + $0x120] sm:$0xff]
    %v3251 = vld [vmem:[#allocation16 + $0x128] sm:$0xff]
    %v3252 = vld [vmem:[#allocation16 + $0x130] sm:$0xff]
    %v3253 = vld [vmem:[#allocation16 + $0x138] sm:$0xff]
    %v3254 = vld [vmem:[#allocation16 + $0x140] sm:$0xff]
    %v3255 = vld [vmem:[#allocation16 + $0x148] sm:$0xff]
    %v3256 = vld [vmem:[#allocation16 + $0x150] sm:$0xff]
    %v3257 = vld [vmem:[#allocation16 + $0x158] sm:$0xff]
    %v3258 = vld [vmem:[#allocation16 + $0x160] sm:$0xff]
    %v3259 = vld [vmem:[#allocation16 + $0x168] sm:$0xff]
    %v3260 = vld [vmem:[#allocation16 + $0x170] sm:$0xff]
    %v3261 = vld [vmem:[#allocation16 + $0x178] sm:$0xff]
    %v3262 = vld [vmem:[#allocation16 + $0x180] sm:$0xff]
    %v3263 = vld [vmem:[#allocation16 + $0x188] sm:$0xff]
    %v3264 = vld [vmem:[#allocation16 + $0x190] sm:$0xff]
    %v3265 = vld [vmem:[#allocation16 + $0x198] sm:$0xff]
    %v3266 = vld [vmem:[#allocation16 + $0x1a0] sm:$0xff]
    %v3267 = vld [vmem:[#allocation16 + $0x1a8] sm:$0xff]
    %v3268 = vld [vmem:[#allocation16 + $0x1b0] sm:$0xff]
    %v3269 = vld [vmem:[#allocation16 + $0x1b8] sm:$0xff]
    %v3270 = vld [vmem:[#allocation16 + $0x1c0] sm:$0xff]
    %v3271 = vld [vmem:[#allocation16 + $0x1c8] sm:$0xff]
    %v3272 = vld [vmem:[#allocation16 + $0x1d0] sm:$0xff]
    %v3273 = vld [vmem:[#allocation16 + $0x1d8] sm:$0xff]
    %v3274 = vld [vmem:[#allocation16 + $0x1e0] sm:$0xff]
    %v3275 = vld [vmem:[#allocation16 + $0x1e8] sm:$0xff]
    %v3276 = vld [vmem:[#allocation16 + $0x1f0] sm:$0xff]
    %v3277 = vld [vmem:[#allocation16 + $0x1f8] sm:$0xff]
    %v3278 = vld [vmem:[#allocation16 + $0x200] sm:$0xff]
    %v3279 = vld [vmem:[#allocation16 + $0x208] sm:$0xff]
    %v3280 = vld [vmem:[#allocation16 + $0x210] sm:$0xff]
    %v3281 = vld [vmem:[#allocation16 + $0x218] sm:$0xff]
    %v3282 = vld [vmem:[#allocation16 + $0x220] sm:$0xff]
    %v3283 = vld [vmem:[#allocation16 + $0x228] sm:$0xff]
    %v3284 = vld [vmem:[#allocation16 + $0x230] sm:$0xff]
    %v3285 = vld [vmem:[#allocation16 + $0x238] sm:$0xff]
    %v3286 = vld [vmem:[#allocation16 + $0x240] sm:$0xff]
    %v3287 = vld [vmem:[#allocation16 + $0x248] sm:$0xff]
    %v3288 = vld [vmem:[#allocation16 + $0x250] sm:$0xff]
    %v3289 = vld [vmem:[#allocation16 + $0x258] sm:$0xff]
    %v3290 = vld [vmem:[#allocation16 + $0x260] sm:$0xff]
    %v3291 = vld [vmem:[#allocation16 + $0x268] sm:$0xff]
    %v3292 = vld [vmem:[#allocation16 + $0x270] sm:$0xff]
    %v3293 = vld [vmem:[#allocation16 + $0x278] sm:$0xff]
    %v3294 = vld [vmem:[#allocation16 + $0x280] sm:$0xff]
    %v3295 = vld [vmem:[#allocation16 + $0x288] sm:$0xff]
    %v3296 = vld [vmem:[#allocation16 + $0x290] sm:$0xff]
    %v3297 = vld [vmem:[#allocation16 + $0x298] sm:$0xff]
    %v3298 = vld [vmem:[#allocation16 + $0x2a0] sm:$0xff]
    %v3299 = vld [vmem:[#allocation16 + $0x2a8] sm:$0xff]
    %v3300 = vld [vmem:[#allocation16 + $0x2b0] sm:$0xff]
    %v3301 = vld [vmem:[#allocation16 + $0x2b8] sm:$0xff]
    %v3302 = vld [vmem:[#allocation16 + $0x2c0] sm:$0xff]
    %v3303 = vld [vmem:[#allocation16 + $0x2c8] sm:$0xff]
    %v3304 = vld [vmem:[#allocation16 + $0x2d0] sm:$0xff]
    %v3305 = vld [vmem:[#allocation16 + $0x2d8] sm:$0xff]
    %v3306 = vld [vmem:[#allocation16 + $0x2e0] sm:$0xff]
    %v3307 = vld [vmem:[#allocation16 + $0x2e8] sm:$0xff]
    %v3308 = vld [vmem:[#allocation16 + $0x2f0] sm:$0xff]
    %v3309 = vld [vmem:[#allocation16 + $0x2f8] sm:$0xff]
    %v3310 = vld [vmem:[#allocation16 + $0x300] sm:$0xff]
    %v3311 = vld [vmem:[#allocation16 + $0x308] sm:$0xff]
    %v3312 = vld [vmem:[#allocation16 + $0x310] sm:$0xff]
    %v3313 = vld [vmem:[#allocation16 + $0x318] sm:$0xff]
    %v3314 = vld [vmem:[#allocation16 + $0x320] sm:$0xff]
    %v3315 = vld [vmem:[#allocation16 + $0x328] sm:$0xff]
    %v3316 = vld [vmem:[#allocation16 + $0x330] sm:$0xff]
    %v3317 = vld [vmem:[#allocation16 + $0x338] sm:$0xff]
    %v3318 = vld [vmem:[#allocation16 + $0x340] sm:$0xff]
    %v3319 = vld [vmem:[#allocation16 + $0x348] sm:$0xff]
    %v3320 = vld [vmem:[#allocation16 + $0x350] sm:$0xff]
    %v3321 = vld [vmem:[#allocation16 + $0x358] sm:$0xff]
    %v3322 = vld [vmem:[#allocation16 + $0x360] sm:$0xff]
    %v3323 = vld [vmem:[#allocation16 + $0x368] sm:$0xff]
    %v3324 = vld [vmem:[#allocation16 + $0x370] sm:$0xff]
    %v3325 = vld [vmem:[#allocation16 + $0x378] sm:$0xff]
    %v3326 = vld [vmem:[#allocation16 + $0x380] sm:$0xff]
    %v3327 = vld [vmem:[#allocation16 + $0x388] sm:$0xff]
    %v3328 = vld [vmem:[#allocation16 + $0x390] sm:$0xff]
    %v3329 = vld [vmem:[#allocation16 + $0x398] sm:$0xff]
    %v3330 = vld [vmem:[#allocation16 + $0x3a0] sm:$0xff]
    %v3331 = vld [vmem:[#allocation16 + $0x3a8] sm:$0xff]
    %v3332 = vld [vmem:[#allocation16 + $0x3b0] sm:$0xff]
    %v3333 = vld [vmem:[#allocation16 + $0x3b8] sm:$0xff]
    %v3334 = vld [vmem:[#allocation16 + $0x3c0] sm:$0xff]
    %v3335 = vld [vmem:[#allocation16 + $0x3c8] sm:$0xff]
    %v3336 = vld [vmem:[#allocation16 + $0x3d0] sm:$0xff]
    %v3337 = vld [vmem:[#allocation16 + $0x3d8] sm:$0xff]
    %v3338 = vld [vmem:[#allocation16 + $0x3e0] sm:$0xff]
    %v3339 = vld [vmem:[#allocation16 + $0x3e8] sm:$0xff]
    %v3340 = vld [vmem:[#allocation16 + $0x3f0] sm:$0xff]
    %v3341 = vld [vmem:[#allocation16 + $0x3f8] sm:$0xff]
    %v3342 = vld [vmem:[#allocation16 + $0x400] sm:$0xff]
    %v3343 = vld [vmem:[#allocation16 + $0x408] sm:$0xff]
    %v3344 = vld [vmem:[#allocation16 + $0x410] sm:$0xff]
    %v3345 = vld [vmem:[#allocation16 + $0x418] sm:$0xff]
    %v3346 = vld [vmem:[#allocation16 + $0x420] sm:$0xff]
    %v3347 = vld [vmem:[#allocation16 + $0x428] sm:$0xff]
    %v3348 = vld [vmem:[#allocation16 + $0x430] sm:$0xff]
    %v3349 = vld [vmem:[#allocation16 + $0x438] sm:$0xff]
    %v3350 = vld [vmem:[#allocation16 + $0x440] sm:$0xff]
    %v3351 = vld [vmem:[#allocation16 + $0x448] sm:$0xff]
    %v3352 = vld [vmem:[#allocation16 + $0x450] sm:$0xff]
    %v3353 = vld [vmem:[#allocation16 + $0x458] sm:$0xff]
    %v3354 = vld [vmem:[#allocation16 + $0x460] sm:$0xff]
    %v3355 = vld [vmem:[#allocation16 + $0x468] sm:$0xff]
    %v3356 = vld [vmem:[#allocation16 + $0x470] sm:$0xff]
    %v3357 = vld [vmem:[#allocation16 + $0x478] sm:$0xff]
    %v3358 = vld [vmem:[#allocation16 + $0x480] sm:$0xff]
    %v3359 = vld [vmem:[#allocation16 + $0x488] sm:$0xff]
    %v3360 = vld [vmem:[#allocation16 + $0x490] sm:$0xff]
    %v3361 = vld [vmem:[#allocation16 + $0x498] sm:$0xff]
    %v3362 = vld [vmem:[#allocation16 + $0x4a0] sm:$0xff]
    %v3363 = vld [vmem:[#allocation16 + $0x4a8] sm:$0xff]
    %v3364 = vld [vmem:[#allocation16 + $0x4b0] sm:$0xff]
    %v3365 = vld [vmem:[#allocation16 + $0x4b8] sm:$0xff]
    %v3366 = vld [vmem:[#allocation16 + $0x4c0] sm:$0xff]
    %v3367 = vld [vmem:[#allocation16 + $0x4c8] sm:$0xff]
    %v3368 = vld [vmem:[#allocation16 + $0x4d0] sm:$0xff]
    %v3369 = vld [vmem:[#allocation16 + $0x4d8] sm:$0xff]
    %v3370 = vld [vmem:[#allocation16 + $0x4e0] sm:$0xff]
    %v3371 = vld [vmem:[#allocation16 + $0x4e8] sm:$0xff]
    %v3372 = vld [vmem:[#allocation16 + $0x4f0] sm:$0xff]
    %v3373 = vld [vmem:[#allocation16 + $0x4f8] sm:$0xff]
    %v3534 = vunpack.c.l.b16 %v3214
    %v3535 = vunpack.c.h.b16 %v3214
    %v3536 = vunpack.c.l.b16 %v3215
    %v3537 = vunpack.c.h.b16 %v3215
    %v3538 = vunpack.c.l.b16 %v3216
    %v3539 = vunpack.c.h.b16 %v3216
    %v3540 = vunpack.c.l.b16 %v3217
    %v3541 = vunpack.c.h.b16 %v3217
    %v3542 = vunpack.c.l.b16 %v3218
    %v3543 = vunpack.c.h.b16 %v3218
    %v3544 = vunpack.c.l.b16 %v3219
    %v3545 = vunpack.c.h.b16 %v3219
    %v3546 = vunpack.c.l.b16 %v3220
    %v3547 = vunpack.c.h.b16 %v3220
    %v3548 = vunpack.c.l.b16 %v3221
    %v3549 = vunpack.c.h.b16 %v3221
    %v3550 = vunpack.c.l.b16 %v3222
    %v3551 = vunpack.c.h.b16 %v3222
    %v3552 = vunpack.c.l.b16 %v3223
    %v3553 = vunpack.c.h.b16 %v3223
    %v3554 = vunpack.c.l.b16 %v3224
    %v3555 = vunpack.c.h.b16 %v3224
    %v3556 = vunpack.c.l.b16 %v3225
    %v3557 = vunpack.c.h.b16 %v3225
    %v3558 = vunpack.c.l.b16 %v3226
    %v3559 = vunpack.c.h.b16 %v3226
    %v3560 = vunpack.c.l.b16 %v3227
    %v3561 = vunpack.c.h.b16 %v3227
    %v3562 = vunpack.c.l.b16 %v3228
    %v3563 = vunpack.c.h.b16 %v3228
    %v3564 = vunpack.c.l.b16 %v3229
    %v3565 = vunpack.c.h.b16 %v3229
    %v3566 = vunpack.c.l.b16 %v3230
    %v3567 = vunpack.c.h.b16 %v3230
    %v3568 = vunpack.c.l.b16 %v3231
    %v3569 = vunpack.c.h.b16 %v3231
    %v3570 = vunpack.c.l.b16 %v3232
    %v3571 = vunpack.c.h.b16 %v3232
    %v3572 = vunpack.c.l.b16 %v3233
    %v3573 = vunpack.c.h.b16 %v3233
    %v3574 = vunpack.c.l.b16 %v3234
    %v3575 = vunpack.c.h.b16 %v3234
    %v3576 = vunpack.c.l.b16 %v3235
    %v3577 = vunpack.c.h.b16 %v3235
    %v3578 = vunpack.c.l.b16 %v3236
    %v3579 = vunpack.c.h.b16 %v3236
    %v3580 = vunpack.c.l.b16 %v3237
    %v3581 = vunpack.c.h.b16 %v3237
    %v3582 = vunpack.c.l.b16 %v3238
    %v3583 = vunpack.c.h.b16 %v3238
    %v3584 = vunpack.c.l.b16 %v3239
    %v3585 = vunpack.c.h.b16 %v3239
    %v3586 = vunpack.c.l.b16 %v3240
    %v3587 = vunpack.c.h.b16 %v3240
    %v3588 = vunpack.c.l.b16 %v3241
    %v3589 = vunpack.c.h.b16 %v3241
    %v3590 = vunpack.c.l.b16 %v3242
    %v3591 = vunpack.c.h.b16 %v3242
    %v3592 = vunpack.c.l.b16 %v3243
    %v3593 = vunpack.c.h.b16 %v3243
    %v3594 = vunpack.c.l.b16 %v3244
    %v3595 = vunpack.c.h.b16 %v3244
    %v3596 = vunpack.c.l.b16 %v3245
    %v3597 = vunpack.c.h.b16 %v3245
    %v3598 = vunpack.c.l.b16 %v3246
    %v3599 = vunpack.c.h.b16 %v3246
    %v3600 = vunpack.c.l.b16 %v3247
    %v3601 = vunpack.c.h.b16 %v3247
    %v3602 = vunpack.c.l.b16 %v3248
    %v3603 = vunpack.c.h.b16 %v3248
    %v3604 = vunpack.c.l.b16 %v3249
    %v3605 = vunpack.c.h.b16 %v3249
    %v3606 = vunpack.c.l.b16 %v3250
    %v3607 = vunpack.c.h.b16 %v3250
    %v3608 = vunpack.c.l.b16 %v3251
    %v3609 = vunpack.c.h.b16 %v3251
    %v3610 = vunpack.c.l.b16 %v3252
    %v3611 = vunpack.c.h.b16 %v3252
    %v3612 = vunpack.c.l.b16 %v3253
    %v3613 = vunpack.c.h.b16 %v3253
    %v3614 = vunpack.c.l.b16 %v3254
    %v3615 = vunpack.c.h.b16 %v3254
    %v3616 = vunpack.c.l.b16 %v3255
    %v3617 = vunpack.c.h.b16 %v3255
    %v3618 = vunpack.c.l.b16 %v3256
    %v3619 = vunpack.c.h.b16 %v3256
    %v3620 = vunpack.c.l.b16 %v3257
    %v3621 = vunpack.c.h.b16 %v3257
    %v3622 = vunpack.c.l.b16 %v3258
    %v3623 = vunpack.c.h.b16 %v3258
    %v3624 = vunpack.c.l.b16 %v3259
    %v3625 = vunpack.c.h.b16 %v3259
    %v3626 = vunpack.c.l.b16 %v3260
    %v3627 = vunpack.c.h.b16 %v3260
    %v3628 = vunpack.c.l.b16 %v3261
    %v3629 = vunpack.c.h.b16 %v3261
    %v3630 = vunpack.c.l.b16 %v3262
    %v3631 = vunpack.c.h.b16 %v3262
    %v3632 = vunpack.c.l.b16 %v3263
    %v3633 = vunpack.c.h.b16 %v3263
    %v3634 = vunpack.c.l.b16 %v3264
    %v3635 = vunpack.c.h.b16 %v3264
    %v3636 = vunpack.c.l.b16 %v3265
    %v3637 = vunpack.c.h.b16 %v3265
    %v3638 = vunpack.c.l.b16 %v3266
    %v3639 = vunpack.c.h.b16 %v3266
    %v3640 = vunpack.c.l.b16 %v3267
    %v3641 = vunpack.c.h.b16 %v3267
    %v3642 = vunpack.c.l.b16 %v3268
    %v3643 = vunpack.c.h.b16 %v3268
    %v3644 = vunpack.c.l.b16 %v3269
    %v3645 = vunpack.c.h.b16 %v3269
    %v3646 = vunpack.c.l.b16 %v3270
    %v3647 = vunpack.c.h.b16 %v3270
    %v3648 = vunpack.c.l.b16 %v3271
    %v3649 = vunpack.c.h.b16 %v3271
    %v3650 = vunpack.c.l.b16 %v3272
    %v3651 = vunpack.c.h.b16 %v3272
    %v3652 = vunpack.c.l.b16 %v3273
    %v3653 = vunpack.c.h.b16 %v3273
    %v3654 = vunpack.c.l.b16 %v3274
    %v3655 = vunpack.c.h.b16 %v3274
    %v3656 = vunpack.c.l.b16 %v3275
    %v3657 = vunpack.c.h.b16 %v3275
    %v3658 = vunpack.c.l.b16 %v3276
    %v3659 = vunpack.c.h.b16 %v3276
    %v3660 = vunpack.c.l.b16 %v3277
    %v3661 = vunpack.c.h.b16 %v3277
    %v3662 = vunpack.c.l.b16 %v3278
    %v3663 = vunpack.c.h.b16 %v3278
    %v3664 = vunpack.c.l.b16 %v3279
    %v3665 = vunpack.c.h.b16 %v3279
    %v3666 = vunpack.c.l.b16 %v3280
    %v3667 = vunpack.c.h.b16 %v3280
    %v3668 = vunpack.c.l.b16 %v3281
    %v3669 = vunpack.c.h.b16 %v3281
    %v3670 = vunpack.c.l.b16 %v3282
    %v3671 = vunpack.c.h.b16 %v3282
    %v3672 = vunpack.c.l.b16 %v3283
    %v3673 = vunpack.c.h.b16 %v3283
    %v3674 = vunpack.c.l.b16 %v3284
    %v3675 = vunpack.c.h.b16 %v3284
    %v3676 = vunpack.c.l.b16 %v3285
    %v3677 = vunpack.c.h.b16 %v3285
    %v3678 = vunpack.c.l.b16 %v3286
    %v3679 = vunpack.c.h.b16 %v3286
    %v3680 = vunpack.c.l.b16 %v3287
    %v3681 = vunpack.c.h.b16 %v3287
    %v3682 = vunpack.c.l.b16 %v3288
    %v3683 = vunpack.c.h.b16 %v3288
    %v3684 = vunpack.c.l.b16 %v3289
    %v3685 = vunpack.c.h.b16 %v3289
    %v3686 = vunpack.c.l.b16 %v3290
    %v3687 = vunpack.c.h.b16 %v3290
    %v3688 = vunpack.c.l.b16 %v3291
    %v3689 = vunpack.c.h.b16 %v3291
    %v3690 = vunpack.c.l.b16 %v3292
    %v3691 = vunpack.c.h.b16 %v3292
    %v3692 = vunpack.c.l.b16 %v3293
    %v3693 = vunpack.c.h.b16 %v3293
    %v3694 = vunpack.c.l.b16 %v3294
    %v3695 = vunpack.c.h.b16 %v3294
    %v3696 = vunpack.c.l.b16 %v3295
    %v3697 = vunpack.c.h.b16 %v3295
    %v3698 = vunpack.c.l.b16 %v3296
    %v3699 = vunpack.c.h.b16 %v3296
    %v3700 = vunpack.c.l.b16 %v3297
    %v3701 = vunpack.c.h.b16 %v3297
    %v3702 = vunpack.c.l.b16 %v3298
    %v3703 = vunpack.c.h.b16 %v3298
    %v3704 = vunpack.c.l.b16 %v3299
    %v3705 = vunpack.c.h.b16 %v3299
    %v3706 = vunpack.c.l.b16 %v3300
    %v3707 = vunpack.c.h.b16 %v3300
    %v3708 = vunpack.c.l.b16 %v3301
    %v3709 = vunpack.c.h.b16 %v3301
    %v3710 = vunpack.c.l.b16 %v3302
    %v3711 = vunpack.c.h.b16 %v3302
    %v3712 = vunpack.c.l.b16 %v3303
    %v3713 = vunpack.c.h.b16 %v3303
    %v3714 = vunpack.c.l.b16 %v3304
    %v3715 = vunpack.c.h.b16 %v3304
    %v3716 = vunpack.c.l.b16 %v3305
    %v3717 = vunpack.c.h.b16 %v3305
    %v3718 = vunpack.c.l.b16 %v3306
    %v3719 = vunpack.c.h.b16 %v3306
    %v3720 = vunpack.c.l.b16 %v3307
    %v3721 = vunpack.c.h.b16 %v3307
    %v3722 = vunpack.c.l.b16 %v3308
    %v3723 = vunpack.c.h.b16 %v3308
    %v3724 = vunpack.c.l.b16 %v3309
    %v3725 = vunpack.c.h.b16 %v3309
    %v3726 = vunpack.c.l.b16 %v3310
    %v3727 = vunpack.c.h.b16 %v3310
    %v3728 = vunpack.c.l.b16 %v3311
    %v3729 = vunpack.c.h.b16 %v3311
    %v3730 = vunpack.c.l.b16 %v3312
    %v3731 = vunpack.c.h.b16 %v3312
    %v3732 = vunpack.c.l.b16 %v3313
    %v3733 = vunpack.c.h.b16 %v3313
    %v3734 = vunpack.c.l.b16 %v3314
    %v3735 = vunpack.c.h.b16 %v3314
    %v3736 = vunpack.c.l.b16 %v3315
    %v3737 = vunpack.c.h.b16 %v3315
    %v3738 = vunpack.c.l.b16 %v3316
    %v3739 = vunpack.c.h.b16 %v3316
    %v3740 = vunpack.c.l.b16 %v3317
    %v3741 = vunpack.c.h.b16 %v3317
    %v3742 = vunpack.c.l.b16 %v3318
    %v3743 = vunpack.c.h.b16 %v3318
    %v3744 = vunpack.c.l.b16 %v3319
    %v3745 = vunpack.c.h.b16 %v3319
    %v3746 = vunpack.c.l.b16 %v3320
    %v3747 = vunpack.c.h.b16 %v3320
    %v3748 = vunpack.c.l.b16 %v3321
    %v3749 = vunpack.c.h.b16 %v3321
    %v3750 = vunpack.c.l.b16 %v3322
    %v3751 = vunpack.c.h.b16 %v3322
    %v3752 = vunpack.c.l.b16 %v3323
    %v3753 = vunpack.c.h.b16 %v3323
    %v3754 = vunpack.c.l.b16 %v3324
    %v3755 = vunpack.c.h.b16 %v3324
    %v3756 = vunpack.c.l.b16 %v3325
    %v3757 = vunpack.c.h.b16 %v3325
    %v3758 = vunpack.c.l.b16 %v3326
    %v3759 = vunpack.c.h.b16 %v3326
    %v3760 = vunpack.c.l.b16 %v3327
    %v3761 = vunpack.c.h.b16 %v3327
    %v3762 = vunpack.c.l.b16 %v3328
    %v3763 = vunpack.c.h.b16 %v3328
    %v3764 = vunpack.c.l.b16 %v3329
    %v3765 = vunpack.c.h.b16 %v3329
    %v3766 = vunpack.c.l.b16 %v3330
    %v3767 = vunpack.c.h.b16 %v3330
    %v3768 = vunpack.c.l.b16 %v3331
    %v3769 = vunpack.c.h.b16 %v3331
    %v3770 = vunpack.c.l.b16 %v3332
    %v3771 = vunpack.c.h.b16 %v3332
    %v3772 = vunpack.c.l.b16 %v3333
    %v3773 = vunpack.c.h.b16 %v3333
    %v3774 = vunpack.c.l.b16 %v3334
    %v3775 = vunpack.c.h.b16 %v3334
    %v3776 = vunpack.c.l.b16 %v3335
    %v3777 = vunpack.c.h.b16 %v3335
    %v3778 = vunpack.c.l.b16 %v3336
    %v3779 = vunpack.c.h.b16 %v3336
    %v3780 = vunpack.c.l.b16 %v3337
    %v3781 = vunpack.c.h.b16 %v3337
    %v3782 = vunpack.c.l.b16 %v3338
    %v3783 = vunpack.c.h.b16 %v3338
    %v3784 = vunpack.c.l.b16 %v3339
    %v3785 = vunpack.c.h.b16 %v3339
    %v3786 = vunpack.c.l.b16 %v3340
    %v3787 = vunpack.c.h.b16 %v3340
    %v3788 = vunpack.c.l.b16 %v3341
    %v3789 = vunpack.c.h.b16 %v3341
    %v3790 = vunpack.c.l.b16 %v3342
    %v3791 = vunpack.c.h.b16 %v3342
    %v3792 = vunpack.c.l.b16 %v3343
    %v3793 = vunpack.c.h.b16 %v3343
    %v3794 = vunpack.c.l.b16 %v3344
    %v3795 = vunpack.c.h.b16 %v3344
    %v3796 = vunpack.c.l.b16 %v3345
    %v3797 = vunpack.c.h.b16 %v3345
    %v3798 = vunpack.c.l.b16 %v3346
    %v3799 = vunpack.c.h.b16 %v3346
    %v3800 = vunpack.c.l.b16 %v3347
    %v3801 = vunpack.c.h.b16 %v3347
    %v3802 = vunpack.c.l.b16 %v3348
    %v3803 = vunpack.c.h.b16 %v3348
    %v3804 = vunpack.c.l.b16 %v3349
    %v3805 = vunpack.c.h.b16 %v3349
    %v3806 = vunpack.c.l.b16 %v3350
    %v3807 = vunpack.c.h.b16 %v3350
    %v3808 = vunpack.c.l.b16 %v3351
    %v3809 = vunpack.c.h.b16 %v3351
    %v3810 = vunpack.c.l.b16 %v3352
    %v3811 = vunpack.c.h.b16 %v3352
    %v3812 = vunpack.c.l.b16 %v3353
    %v3813 = vunpack.c.h.b16 %v3353
    %v3814 = vunpack.c.l.b16 %v3354
    %v3815 = vunpack.c.h.b16 %v3354
    %v3816 = vunpack.c.l.b16 %v3355
    %v3817 = vunpack.c.h.b16 %v3355
    %v3818 = vunpack.c.l.b16 %v3356
    %v3819 = vunpack.c.h.b16 %v3356
    %v3820 = vunpack.c.l.b16 %v3357
    %v3821 = vunpack.c.h.b16 %v3357
    %v3822 = vunpack.c.l.b16 %v3358
    %v3823 = vunpack.c.h.b16 %v3358
    %v3824 = vunpack.c.l.b16 %v3359
    %v3825 = vunpack.c.h.b16 %v3359
    %v3826 = vunpack.c.l.b16 %v3360
    %v3827 = vunpack.c.h.b16 %v3360
    %v3828 = vunpack.c.l.b16 %v3361
    %v3829 = vunpack.c.h.b16 %v3361
    %v3830 = vunpack.c.l.b16 %v3362
    %v3831 = vunpack.c.h.b16 %v3362
    %v3832 = vunpack.c.l.b16 %v3363
    %v3833 = vunpack.c.h.b16 %v3363
    %v3834 = vunpack.c.l.b16 %v3364
    %v3835 = vunpack.c.h.b16 %v3364
    %v3836 = vunpack.c.l.b16 %v3365
    %v3837 = vunpack.c.h.b16 %v3365
    %v3838 = vunpack.c.l.b16 %v3366
    %v3839 = vunpack.c.h.b16 %v3366
    %v3840 = vunpack.c.l.b16 %v3367
    %v3841 = vunpack.c.h.b16 %v3367
    %v3842 = vunpack.c.l.b16 %v3368
    %v3843 = vunpack.c.h.b16 %v3368
    %v3844 = vunpack.c.l.b16 %v3369
    %v3845 = vunpack.c.h.b16 %v3369
    %v3846 = vunpack.c.l.b16 %v3370
    %v3847 = vunpack.c.h.b16 %v3370
    %v3848 = vunpack.c.l.b16 %v3371
    %v3849 = vunpack.c.h.b16 %v3371
    %v3850 = vunpack.c.l.b16 %v3372
    %v3851 = vunpack.c.h.b16 %v3372
    %v3852 = vunpack.c.l.b16 %v3373
    %v3853 = vunpack.c.h.b16 %v3373
    %v3854 = vpack.c.b16 %v3544, %v3534
    %v3855 = vpack.c.b16 %v3545, %v3535
    %v3856 = vpack.c.b16 %v3546, %v3536
    %v3857 = vpack.c.b16 %v3547, %v3537
    %v3858 = vpack.c.b16 %v3548, %v3538
    %v3859 = vpack.c.b16 %v3549, %v3539
    %v3860 = vpack.c.b16 %v3550, %v3540
    %v3861 = vpack.c.b16 %v3551, %v3541
    %v3862 = vpack.c.b16 %v3552, %v3542
    %v3863 = vpack.c.b16 %v3553, %v3543
    %v3864 = vpack.c.b16 %v3564, %v3554
    %v3865 = vpack.c.b16 %v3565, %v3555
    %v3866 = vpack.c.b16 %v3566, %v3556
    %v3867 = vpack.c.b16 %v3567, %v3557
    %v3868 = vpack.c.b16 %v3568, %v3558
    %v3869 = vpack.c.b16 %v3569, %v3559
    %v3870 = vpack.c.b16 %v3570, %v3560
    %v3871 = vpack.c.b16 %v3571, %v3561
    %v3872 = vpack.c.b16 %v3572, %v3562
    %v3873 = vpack.c.b16 %v3573, %v3563
    %v3874 = vpack.c.b16 %v3584, %v3574
    %v3875 = vpack.c.b16 %v3585, %v3575
    %v3876 = vpack.c.b16 %v3586, %v3576
    %v3877 = vpack.c.b16 %v3587, %v3577
    %v3878 = vpack.c.b16 %v3588, %v3578
    %v3879 = vpack.c.b16 %v3589, %v3579
    %v3880 = vpack.c.b16 %v3590, %v3580
    %v3881 = vpack.c.b16 %v3591, %v3581
    %v3882 = vpack.c.b16 %v3592, %v3582
    %v3883 = vpack.c.b16 %v3593, %v3583
    %v3884 = vpack.c.b16 %v3604, %v3594
    %v3885 = vpack.c.b16 %v3605, %v3595
    %v3886 = vpack.c.b16 %v3606, %v3596
    %v3887 = vpack.c.b16 %v3607, %v3597
    %v3888 = vpack.c.b16 %v3608, %v3598
    %v3889 = vpack.c.b16 %v3609, %v3599
    %v3890 = vpack.c.b16 %v3610, %v3600
    %v3891 = vpack.c.b16 %v3611, %v3601
    %v3892 = vpack.c.b16 %v3612, %v3602
    %v3893 = vpack.c.b16 %v3613, %v3603
    %v3894 = vpack.c.b16 %v3624, %v3614
    %v3895 = vpack.c.b16 %v3625, %v3615
    %v3896 = vpack.c.b16 %v3626, %v3616
    %v3897 = vpack.c.b16 %v3627, %v3617
    %v3898 = vpack.c.b16 %v3628, %v3618
    %v3899 = vpack.c.b16 %v3629, %v3619
    %v3900 = vpack.c.b16 %v3630, %v3620
    %v3901 = vpack.c.b16 %v3631, %v3621
    %v3902 = vpack.c.b16 %v3632, %v3622
    %v3903 = vpack.c.b16 %v3633, %v3623
    %v3904 = vpack.c.b16 %v3644, %v3634
    %v3905 = vpack.c.b16 %v3645, %v3635
    %v3906 = vpack.c.b16 %v3646, %v3636
    %v3907 = vpack.c.b16 %v3647, %v3637
    %v3908 = vpack.c.b16 %v3648, %v3638
    %v3909 = vpack.c.b16 %v3649, %v3639
    %v3910 = vpack.c.b16 %v3650, %v3640
    %v3911 = vpack.c.b16 %v3651, %v3641
    %v3912 = vpack.c.b16 %v3652, %v3642
    %v3913 = vpack.c.b16 %v3653, %v3643
    %v3914 = vpack.c.b16 %v3664, %v3654
    %v3915 = vpack.c.b16 %v3665, %v3655
    %v3916 = vpack.c.b16 %v3666, %v3656
    %v3917 = vpack.c.b16 %v3667, %v3657
    %v3918 = vpack.c.b16 %v3668, %v3658
    %v3919 = vpack.c.b16 %v3669, %v3659
    %v3920 = vpack.c.b16 %v3670, %v3660
    %v3921 = vpack.c.b16 %v3671, %v3661
    %v3922 = vpack.c.b16 %v3672, %v3662
    %v3923 = vpack.c.b16 %v3673, %v3663
    %v3924 = vpack.c.b16 %v3684, %v3674
    %v3925 = vpack.c.b16 %v3685, %v3675
    %v3926 = vpack.c.b16 %v3686, %v3676
    %v3927 = vpack.c.b16 %v3687, %v3677
    %v3928 = vpack.c.b16 %v3688, %v3678
    %v3929 = vpack.c.b16 %v3689, %v3679
    %v3930 = vpack.c.b16 %v3690, %v3680
    %v3931 = vpack.c.b16 %v3691, %v3681
    %v3932 = vpack.c.b16 %v3692, %v3682
    %v3933 = vpack.c.b16 %v3693, %v3683
    %v3934 = vpack.c.b16 %v3704, %v3694
    %v3935 = vpack.c.b16 %v3705, %v3695
    %v3936 = vpack.c.b16 %v3706, %v3696
    %v3937 = vpack.c.b16 %v3707, %v3697
    %v3938 = vpack.c.b16 %v3708, %v3698
    %v3939 = vpack.c.b16 %v3709, %v3699
    %v3940 = vpack.c.b16 %v3710, %v3700
    %v3941 = vpack.c.b16 %v3711, %v3701
    %v3942 = vpack.c.b16 %v3712, %v3702
    %v3943 = vpack.c.b16 %v3713, %v3703
    %v3944 = vpack.c.b16 %v3724, %v3714
    %v3945 = vpack.c.b16 %v3725, %v3715
    %v3946 = vpack.c.b16 %v3726, %v3716
    %v3947 = vpack.c.b16 %v3727, %v3717
    %v3948 = vpack.c.b16 %v3728, %v3718
    %v3949 = vpack.c.b16 %v3729, %v3719
    %v3950 = vpack.c.b16 %v3730, %v3720
    %v3951 = vpack.c.b16 %v3731, %v3721
    %v3952 = vpack.c.b16 %v3732, %v3722
    %v3953 = vpack.c.b16 %v3733, %v3723
    %v3954 = vpack.c.b16 %v3744, %v3734
    %v3955 = vpack.c.b16 %v3745, %v3735
    %v3956 = vpack.c.b16 %v3746, %v3736
    %v3957 = vpack.c.b16 %v3747, %v3737
    %v3958 = vpack.c.b16 %v3748, %v3738
    %v3959 = vpack.c.b16 %v3749, %v3739
    %v3960 = vpack.c.b16 %v3750, %v3740
    %v3961 = vpack.c.b16 %v3751, %v3741
    %v3962 = vpack.c.b16 %v3752, %v3742
    %v3963 = vpack.c.b16 %v3753, %v3743
    %v3964 = vpack.c.b16 %v3764, %v3754
    %v3965 = vpack.c.b16 %v3765, %v3755
    %v3966 = vpack.c.b16 %v3766, %v3756
    %v3967 = vpack.c.b16 %v3767, %v3757
    %v3968 = vpack.c.b16 %v3768, %v3758
    %v3969 = vpack.c.b16 %v3769, %v3759
    %v3970 = vpack.c.b16 %v3770, %v3760
    %v3971 = vpack.c.b16 %v3771, %v3761
    %v3972 = vpack.c.b16 %v3772, %v3762
    %v3973 = vpack.c.b16 %v3773, %v3763
    %v3974 = vpack.c.b16 %v3784, %v3774
    %v3975 = vpack.c.b16 %v3785, %v3775
    %v3976 = vpack.c.b16 %v3786, %v3776
    %v3977 = vpack.c.b16 %v3787, %v3777
    %v3978 = vpack.c.b16 %v3788, %v3778
    %v3979 = vpack.c.b16 %v3789, %v3779
    %v3980 = vpack.c.b16 %v3790, %v3780
    %v3981 = vpack.c.b16 %v3791, %v3781
    %v3982 = vpack.c.b16 %v3792, %v3782
    %v3983 = vpack.c.b16 %v3793, %v3783
    %v3984 = vpack.c.b16 %v3804, %v3794
    %v3985 = vpack.c.b16 %v3805, %v3795
    %v3986 = vpack.c.b16 %v3806, %v3796
    %v3987 = vpack.c.b16 %v3807, %v3797
    %v3988 = vpack.c.b16 %v3808, %v3798
    %v3989 = vpack.c.b16 %v3809, %v3799
    %v3990 = vpack.c.b16 %v3810, %v3800
    %v3991 = vpack.c.b16 %v3811, %v3801
    %v3992 = vpack.c.b16 %v3812, %v3802
    %v3993 = vpack.c.b16 %v3813, %v3803
    %v3994 = vpack.c.b16 %v3824, %v3814
    %v3995 = vpack.c.b16 %v3825, %v3815
    %v3996 = vpack.c.b16 %v3826, %v3816
    %v3997 = vpack.c.b16 %v3827, %v3817
    %v3998 = vpack.c.b16 %v3828, %v3818
    %v3999 = vpack.c.b16 %v3829, %v3819
    %v4000 = vpack.c.b16 %v3830, %v3820
    %v4001 = vpack.c.b16 %v3831, %v3821
    %v4002 = vpack.c.b16 %v3832, %v3822
    %v4003 = vpack.c.b16 %v3833, %v3823
    %v4004 = vpack.c.b16 %v3844, %v3834
    %v4005 = vpack.c.b16 %v3845, %v3835
    %v4006 = vpack.c.b16 %v3846, %v3836
    %v4007 = vpack.c.b16 %v3847, %v3837
    %v4008 = vpack.c.b16 %v3848, %v3838
    %v4009 = vpack.c.b16 %v3849, %v3839
    %v4010 = vpack.c.b16 %v3850, %v3840
    %v4011 = vpack.c.b16 %v3851, %v3841
    %v4012 = vpack.c.b16 %v3852, %v3842
    %v4013 = vpack.c.b16 %v3853, %v3843
    %4174 = vmatprep.subr.bf16.mxu0 %v3855
    %4175 = vmatpush1.bf16.msra.mxu0 %v3854
    %4176 = vmatprep.subr.bf16.mxu0 %v3865
    %4177 = vmatpush1.bf16.msra.mxu0 %v3864
    %4178 = vmatprep.subr.bf16.mxu0 %v3875
    %4179 = vmatpush1.bf16.msra.mxu0 %v3874
    %4180 = vmatprep.subr.bf16.mxu0 %v3885
    %4181 = vmatpush1.bf16.msra.mxu0 %v3884
    %4182 = vmatprep.subr.bf16.mxu0 %v3895
    %4183 = vmatpush1.bf16.msra.mxu0 %v3894
    %4184 = vmatprep.subr.bf16.mxu0 %v3905
    %4185 = vmatpush1.bf16.msra.mxu0 %v3904
    %4186 = vmatprep.subr.bf16.mxu0 %v3915
    %4187 = vmatpush1.bf16.msra.mxu0 %v3914
    %4188 = vmatprep.subr.bf16.mxu0 %v3925
    %4189 = vmatpush1.bf16.msra.mxu0 %v3924
    %4190 = vmatprep.subr.bf16.mxu0 %v3935
    %4191 = vmatpush1.bf16.msra.mxu0 %v3934
    %4192 = vmatprep.subr.bf16.mxu0 %v3945
    %4193 = vmatpush1.bf16.msra.mxu0 %v3944
    %4194 = vmatprep.subr.bf16.mxu0 %v3955
    %4195 = vmatpush1.bf16.msra.mxu0 %v3954
    %4196 = vmatprep.subr.bf16.mxu0 %v3965
    %4197 = vmatpush1.bf16.msra.mxu0 %v3964
    %4198 = vmatprep.subr.bf16.mxu0 %v3975
    %4199 = vmatpush1.bf16.msra.mxu0 %v3974
    %4200 = vmatprep.subr.bf16.mxu0 %v3985
    %4201 = vmatpush1.bf16.msra.mxu0 %v3984
    %4202 = vmatprep.subr.bf16.mxu0 %v3995
    %4203 = vmatpush1.bf16.msra.mxu0 %v3994
    %4204 = vmatprep.subr.bf16.mxu0 %v4005
    %4205 = vmatpush1.bf16.msra.mxu0 %v4004
    %4206 = vmatprep.mubr.bf16.mxu0 %v3213
    %4207 = vmatmul.mubr.bf16.gmra.mrb[0].mxu0 %v3212
    %v4208 = vpop.f32.mrb[0].mxu0
    %v4209 = vadd.f32 0.0, %v4208
    %v4210 = vpop.f32.mrb[0].mxu0
    %v4211 = vadd.f32 0.0, %v4210
    %v4212 = vpop.f32.mrb[0].mxu0
    %v4213 = vadd.f32 0.0, %v4212
    %v4214 = vpop.f32.mrb[0].mxu0
    %v4215 = vadd.f32 0.0, %v4214
    %4216 = vdwg.mxu0
    %4217 = vmatprep.subr.bf16.mxu0 %v3857
    %4218 = vmatpush1.bf16.msra.mxu0 %v3856
    %4219 = vmatprep.subr.bf16.mxu0 %v3867
    %4220 = vmatpush1.bf16.msra.mxu0 %v3866
    %4221 = vmatprep.subr.bf16.mxu0 %v3877
    %4222 = vmatpush1.bf16.msra.mxu0 %v3876
    %4223 = vmatprep.subr.bf16.mxu0 %v3887
    %4224 = vmatpush1.bf16.msra.mxu0 %v3886
    %4225 = vmatprep.subr.bf16.mxu0 %v3897
    %4226 = vmatpush1.bf16.msra.mxu0 %v3896
    %4227 = vmatprep.subr.bf16.mxu0 %v3907
    %4228 = vmatpush1.bf16.msra.mxu0 %v3906
    %4229 = vmatprep.subr.bf16.mxu0 %v3917
    %4230 = vmatpush1.bf16.msra.mxu0 %v3916
    %4231 = vmatprep.subr.bf16.mxu0 %v3927
    %4232 = vmatpush1.bf16.msra.mxu0 %v3926
    %4233 = vmatprep.subr.bf16.mxu0 %v3937
    %4234 = vmatpush1.bf16.msra.mxu0 %v3936
    %4235 = vmatprep.subr.bf16.mxu0 %v3947
    %4236 = vmatpush1.bf16.msra.mxu0 %v3946
    %4237 = vmatprep.subr.bf16.mxu0 %v3957
    %4238 = vmatpush1.bf16.msra.mxu0 %v3956
    %4239 = vmatprep.subr.bf16.mxu0 %v3967
    %4240 = vmatpush1.bf16.msra.mxu0 %v3966
    %4241 = vmatprep.subr.bf16.mxu0 %v3977
    %4242 = vmatpush1.bf16.msra.mxu0 %v3976
    %4243 = vmatprep.subr.bf16.mxu0 %v3987
    %4244 = vmatpush1.bf16.msra.mxu0 %v3986
    %4245 = vmatprep.subr.bf16.mxu0 %v3997
    %4246 = vmatpush1.bf16.msra.mxu0 %v3996
    %4247 = vmatprep.subr.bf16.mxu0 %v4007
    %4248 = vmatpush1.bf16.msra.mxu0 %v4006
    %4249 = vmatprep.mubr.bf16.mxu0 %v3213
    %4250 = vmatmul.mubr.bf16.gmra.mrb[0].mxu0 %v3212
    %v4251 = vpop.f32.mrb[0].mxu0
    %v4252 = vadd.f32 0.0, %v4251
    %v4253 = vpop.f32.mrb[0].mxu0
    %v4254 = vadd.f32 0.0, %v4253
    %v4255 = vpop.f32.mrb[0].mxu0
    %v4256 = vadd.f32 0.0, %v4255
    %v4257 = vpop.f32.mrb[0].mxu0
    %v4258 = vadd.f32 0.0, %v4257
    %4259 = vdwg.mxu0
    %4260 = vmatprep.subr.bf16.mxu0 %v3859
    %4261 = vmatpush1.bf16.msra.mxu0 %v3858
    %4262 = vmatprep.subr.bf16.mxu0 %v3869
    %4263 = vmatpush1.bf16.msra.mxu0 %v3868
    %4264 = vmatprep.subr.bf16.mxu0 %v3879
    %4265 = vmatpush1.bf16.msra.mxu0 %v3878
    %4266 = vmatprep.subr.bf16.mxu0 %v3889
    %4267 = vmatpush1.bf16.msra.mxu0 %v3888
    %4268 = vmatprep.subr.bf16.mxu0 %v3899
    %4269 = vmatpush1.bf16.msra.mxu0 %v3898
    %4270 = vmatprep.subr.bf16.mxu0 %v3909
    %4271 = vmatpush1.bf16.msra.mxu0 %v3908
    %4272 = vmatprep.subr.bf16.mxu0 %v3919
    %4273 = vmatpush1.bf16.msra.mxu0 %v3918
    %4274 = vmatprep.subr.bf16.mxu0 %v3929
    %4275 = vmatpush1.bf16.msra.mxu0 %v3928
    %4276 = vmatprep.subr.bf16.mxu0 %v3939
    %4277 = vmatpush1.bf16.msra.mxu0 %v3938
    %4278 = vmatprep.subr.bf16.mxu0 %v3949
    %4279 = vmatpush1.bf16.msra.mxu0 %v3948
    %4280 = vmatprep.subr.bf16.mxu0 %v3959
    %4281 = vmatpush1.bf16.msra.mxu0 %v3958
    %4282 = vmatprep.subr.bf16.mxu0 %v3969
    %4283 = vmatpush1.bf16.msra.mxu0 %v3968
    %4284 = vmatprep.subr.bf16.mxu0 %v3979
    %4285 = vmatpush1.bf16.msra.mxu0 %v3978
    %4286 = vmatprep.subr.bf16.mxu0 %v3989
    %4287 = vmatpush1.bf16.msra.mxu0 %v3988
    %4288 = vmatprep.subr.bf16.mxu0 %v3999
    %4289 = vmatpush1.bf16.msra.mxu0 %v3998
    %4290 = vmatprep.subr.bf16.mxu0 %v4009
    %4291 = vmatpush1.bf16.msra.mxu0 %v4008
    %4292 = vmatprep.mubr.bf16.mxu0 %v3213
    %4293 = vmatmul.mubr.bf16.gmra.mrb[0].mxu0 %v3212
    %v4294 = vpop.f32.mrb[0].mxu0
    %v4295 = vadd.f32 0.0, %v4294
    %v4296 = vpop.f32.mrb[0].mxu0
    %v4297 = vadd.f32 0.0, %v4296
    %v4298 = vpop.f32.mrb[0].mxu0
    %v4299 = vadd.f32 0.0, %v4298
    %v4300 = vpop.f32.mrb[0].mxu0
    %v4301 = vadd.f32 0.0, %v4300
    %4302 = vdwg.mxu0
    %4303 = vmatprep.subr.bf16.mxu0 %v3861
    %4304 = vmatpush1.bf16.msra.mxu0 %v3860
    %4305 = vmatprep.subr.bf16.mxu0 %v3871
    %4306 = vmatpush1.bf16.msra.mxu0 %v3870
    %4307 = vmatprep.subr.bf16.mxu0 %v3881
    %4308 = vmatpush1.bf16.msra.mxu0 %v3880
    %4309 = vmatprep.subr.bf16.mxu0 %v3891
    %4310 = vmatpush1.bf16.msra.mxu0 %v3890
    %4311 = vmatprep.subr.bf16.mxu0 %v3901
    %4312 = vmatpush1.bf16.msra.mxu0 %v3900
    %4313 = vmatprep.subr.bf16.mxu0 %v3911
    %4314 = vmatpush1.bf16.msra.mxu0 %v3910
    %4315 = vmatprep.subr.bf16.mxu0 %v3921
    %4316 = vmatpush1.bf16.msra.mxu0 %v3920
    %4317 = vmatprep.subr.bf16.mxu0 %v3931
    %4318 = vmatpush1.bf16.msra.mxu0 %v3930
    %4319 = vmatprep.subr.bf16.mxu0 %v3941
    %4320 = vmatpush1.bf16.msra.mxu0 %v3940
    %4321 = vmatprep.subr.bf16.mxu0 %v3951
    %4322 = vmatpush1.bf16.msra.mxu0 %v3950
    %4323 = vmatprep.subr.bf16.mxu0 %v3961
    %4324 = vmatpush1.bf16.msra.mxu0 %v3960
    %4325 = vmatprep.subr.bf16.mxu0 %v3971
    %4326 = vmatpush1.bf16.msra.mxu0 %v3970
    %4327 = vmatprep.subr.bf16.mxu0 %v3981
    %4328 = vmatpush1.bf16.msra.mxu0 %v3980
    %4329 = vmatprep.subr.bf16.mxu0 %v3991
    %4330 = vmatpush1.bf16.msra.mxu0 %v3990
    %4331 = vmatprep.subr.bf16.mxu0 %v4001
    %4332 = vmatpush1.bf16.msra.mxu0 %v4000
    %4333 = vmatprep.subr.bf16.mxu0 %v4011
    %4334 = vmatpush1.bf16.msra.mxu0 %v4010
    %4335 = vmatprep.mubr.bf16.mxu0 %v3213
    %4336 = vmatmul.mubr.bf16.gmra.mrb[0].mxu0 %v3212
    %v4337 = vpop.f32.mrb[0].mxu0
    %v4338 = vadd.f32 0.0, %v4337
    %v4339 = vpop.f32.mrb[0].mxu0
    %v4340 = vadd.f32 0.0, %v4339
    %v4341 = vpop.f32.mrb[0].mxu0
    %v4342 = vadd.f32 0.0, %v4341
    %v4343 = vpop.f32.mrb[0].mxu0
    %v4344 = vadd.f32 0.0, %v4343
    %4345 = vdwg.mxu0
    %4346 = vmatprep.subr.bf16.mxu0 %v3863
    %4347 = vmatpush1.bf16.msra.mxu0 %v3862
    %4348 = vmatprep.subr.bf16.mxu0 %v3873
    %4349 = vmatpush1.bf16.msra.mxu0 %v3872
    %4350 = vmatprep.subr.bf16.mxu0 %v3883
    %4351 = vmatpush1.bf16.msra.mxu0 %v3882
    %4352 = vmatprep.subr.bf16.mxu0 %v3893
    %4353 = vmatpush1.bf16.msra.mxu0 %v3892
    %4354 = vmatprep.subr.bf16.mxu0 %v3903
    %4355 = vmatpush1.bf16.msra.mxu0 %v3902
    %4356 = vmatprep.subr.bf16.mxu0 %v3913
    %4357 = vmatpush1.bf16.msra.mxu0 %v3912
    %4358 = vmatprep.subr.bf16.mxu0 %v3923
    %4359 = vmatpush1.bf16.msra.mxu0 %v3922
    %4360 = vmatprep.subr.bf16.mxu0 %v3933
    %4361 = vmatpush1.bf16.msra.mxu0 %v3932
    %4362 = vmatprep.subr.bf16.mxu0 %v3943
    %4363 = vmatpush1.bf16.msra.mxu0 %v3942
    %4364 = vmatprep.subr.bf16.mxu0 %v3953
    %4365 = vmatpush1.bf16.msra.mxu0 %v3952
    %4366 = vmatprep.subr.bf16.mxu0 %v3963
    %4367 = vmatpush1.bf16.msra.mxu0 %v3962
    %4368 = vmatprep.subr.bf16.mxu0 %v3973
    %4369 = vmatpush1.bf16.msra.mxu0 %v3972
    %4370 = vmatprep.subr.bf16.mxu0 %v3983
    %4371 = vmatpush1.bf16.msra.mxu0 %v3982
    %4372 = vmatprep.subr.bf16.mxu0 %v3993
    %4373 = vmatpush1.bf16.msra.mxu0 %v3992
    %4374 = vmatprep.subr.bf16.mxu0 %v4003
    %4375 = vmatpush1.bf16.msra.mxu0 %v4002
    %4376 = vmatprep.subr.bf16.mxu0 %v4013
    %4377 = vmatpush1.bf16.msra.mxu0 %v4012
    %4378 = vmatprep.mubr.bf16.mxu0 %v3213
    %4379 = vmatmul.mubr.bf16.gmra.mrb[0].mxu0 %v3212
    %v4380 = vpop.f32.mrb[0].mxu0
    %v4381 = vadd.f32 0.0, %v4380
    %v4382 = vpop.f32.mrb[0].mxu0
    %v4383 = vadd.f32 0.0, %v4382
    %v4384 = vpop.f32.mrb[0].mxu0
    %v4385 = vadd.f32 0.0, %v4384
    %v4386 = vpop.f32.mrb[0].mxu0
    %v4387 = vadd.f32 0.0, %v4386
    %4388 = vdwg.mxu0
    %4389 = vxpose.xlu0.b32.start [1/16] %v4295, 128
    %4390 = vxpose.xlu0.b32.cont [2/16] %v4299, 128
    %4391 = vxpose.xlu0.b32.cont [3/16] 0.0, 128
    %4392 = vxpose.xlu0.b32.cont [4/16] 0.0, 128
    %4393 = vxpose.xlu0.b32.cont [5/16] 0.0, 128
    %4394 = vxpose.xlu0.b32.cont [6/16] 0.0, 128
    %4395 = vxpose.xlu0.b32.cont [7/16] 0.0, 128
    %4396 = vxpose.xlu0.b32.cont [8/16] 0.0, 128
    %4397 = vxpose.xlu0.b32.cont [9/16] 0.0, 128
    %4398 = vxpose.xlu0.b32.cont [10/16] 0.0, 128
    %4399 = vxpose.xlu0.b32.cont [11/16] 0.0, 128
    %4400 = vxpose.xlu0.b32.cont [12/16] 0.0, 128
    %4401 = vxpose.xlu0.b32.cont [13/16] 0.0, 128
    %4402 = vxpose.xlu0.b32.cont [14/16] 0.0, 128
    %4403 = vxpose.xlu0.b32.cont [15/16] 0.0, 128
    %4404 = vxpose.xlu0.b32.end [16/16] 0.0, 128
    %v4405 = vpop.trf.xlu0
    %v4406 = vpop.trf.xlu0
    %v4407 = vpop.trf.xlu0
    %v4408 = vpop.trf.xlu0
    %v4409 = vpop.trf.xlu0
    %v4410 = vpop.trf.xlu0
    %v4411 = vpop.trf.xlu0
    %v4412 = vpop.trf.xlu0
    %v4413 = vpop.trf.xlu0
    %v4414 = vpop.trf.xlu0
    %v4415 = vpop.trf.xlu0
    %v4416 = vpop.trf.xlu0
    %v4417 = vpop.trf.xlu0
    %v4418 = vpop.trf.xlu0
    %v4419 = vpop.trf.xlu0
    %v4420 = vpop.trf.xlu0
    %4422 = vset.pattern.permute.xlu0 1
    %4423 = vperm.xlu0 %4422, %v4295
    %v4424 = vpop.permute.xlu0 %4423
    %4427 = vset.pattern.permute.xlu0 1
    %4428 = vperm.xlu0 %4427, %v4299
    %v4429 = vpop.permute.xlu0 %4428
    %v4431 = vlaneseq
    %v4432 = vshrl.u32 %v4431, 7
    %v4433 = vsub.s32 0, %v4432
    %v4434 = vrot.slane %v4405, %v4433
    %v4435 = vadd.f32 %v4424, %v4434
    %v4436 = vadd.f32 %v4429, %v4434
    %vm4437 = vcmp.gt.f32.partialorder %v4435, 0.0
    %vm4438 = vcmp.gt.f32.partialorder %v4436, 0.0
    %v4439 = vmul.f32 %v4435, 0.2
    %v4440 = vmul.f32 %v4436, 0.2
    %v4441 = vsel %vm4437, %v4435, %v4439
    %v4442 = vsel %vm4438, %v4436, %v4440
    %v4443 = vsel %vm1050, %v4441, -1e+30
    %v4444 = vsel %vm1051, %v4442, -1e+30
    %v4445 = vsel %vm814, %v4443, -inf
    %4446 = vmax.xlane.f32.xlu0 %v4445
    %v4447 = vpop.xlane.xlu0 %4446
    %v4448 = vsel %vm814, %v4444, -inf
    %4449 = vmax.xlane.f32.xlu0 %v4448
    %v4450 = vpop.xlane.xlu0 %4449
    %v4451 = vsub.f32 %v4443, %v4447
    %v4452 = vsub.f32 %v4444, %v4450
    %v4453 = vmul.f32 %v4451, 1.442695
    %v4454 = vpow.pop %v4453
    %v4455 = vmul.f32 %v4452, 1.442695
    %v4456 = vpow.pop %v4455
    %v4457 = vsel %vm814, %v4454, 0.0
    %4458 = vadd.xlane.f32.xlu0 %v4457
    %v4459 = vpop.xlane.xlu0 %4458
    %v4460 = vsel %vm814, %v4456, 0.0
    %4461 = vadd.xlane.f32.xlu0 %v4460
    %v4462 = vpop.xlane.xlu0 %4461
    %v4463 = vrcp.pop %v4459
    %v4464 = vrcp.pop %v4462
    %v4465 = vmul.f32 %v4454, %v4463
    %v4466 = vmul.f32 %v4456, %v4464
    %4467 = vxpose.xlu0.b32.start [1/16] %v4383, 128
    %4468 = vxpose.xlu0.b32.cont [2/16] %v4387, 128
    %4469 = vxpose.xlu0.b32.cont [3/16] 0.0, 128
    %4470 = vxpose.xlu0.b32.cont [4/16] 0.0, 128
    %4471 = vxpose.xlu0.b32.cont [5/16] 0.0, 128
    %4472 = vxpose.xlu0.b32.cont [6/16] 0.0, 128
    %4473 = vxpose.xlu0.b32.cont [7/16] 0.0, 128
    %4474 = vxpose.xlu0.b32.cont [8/16] 0.0, 128
    %4475 = vxpose.xlu0.b32.cont [9/16] 0.0, 128
    %4476 = vxpose.xlu0.b32.cont [10/16] 0.0, 128
    %4477 = vxpose.xlu0.b32.cont [11/16] 0.0, 128
    %4478 = vxpose.xlu0.b32.cont [12/16] 0.0, 128
    %4479 = vxpose.xlu0.b32.cont [13/16] 0.0, 128
    %4480 = vxpose.xlu0.b32.cont [14/16] 0.0, 128
    %4481 = vxpose.xlu0.b32.cont [15/16] 0.0, 128
    %4482 = vxpose.xlu0.b32.end [16/16] 0.0, 128
    %v4483 = vpop.trf.xlu0
    %v4484 = vpop.trf.xlu0
    %v4485 = vpop.trf.xlu0
    %v4486 = vpop.trf.xlu0
    %v4487 = vpop.trf.xlu0
    %v4488 = vpop.trf.xlu0
    %v4489 = vpop.trf.xlu0
    %v4490 = vpop.trf.xlu0
    %v4491 = vpop.trf.xlu0
    %v4492 = vpop.trf.xlu0
    %v4493 = vpop.trf.xlu0
    %v4494 = vpop.trf.xlu0
    %v4495 = vpop.trf.xlu0
    %v4496 = vpop.trf.xlu0
    %v4497 = vpop.trf.xlu0
    %v4498 = vpop.trf.xlu0
    %4500 = vset.pattern.permute.xlu0 1
    %4501 = vperm.xlu0 %4500, %v4383
    %v4502 = vpop.permute.xlu0 %4501
    %4505 = vset.pattern.permute.xlu0 1
    %4506 = vperm.xlu0 %4505, %v4387
    %v4507 = vpop.permute.xlu0 %4506
    %v4509 = vlaneseq
    %v4510 = vshrl.u32 %v4509, 7
    %v4511 = vsub.s32 0, %v4510
    %v4512 = vrot.slane %v4483, %v4511
    %v4513 = vadd.f32 %v4502, %v4512
    %v4514 = vadd.f32 %v4507, %v4512
    %vm4515 = vcmp.gt.f32.partialorder %v4513, 0.0
    %vm4516 = vcmp.gt.f32.partialorder %v4514, 0.0
    %v4517 = vmul.f32 %v4513, 0.2
    %v4518 = vmul.f32 %v4514, 0.2
    %v4519 = vsel %vm4515, %v4513, %v4517
    %v4520 = vsel %vm4516, %v4514, %v4518
    %v4521 = vsel %vm1050, %v4519, -1e+30
    %v4522 = vsel %vm1051, %v4520, -1e+30
    %v4523 = vsel %vm814, %v4521, -inf
    %4524 = vmax.xlane.f32.xlu0 %v4523
    %v4525 = vpop.xlane.xlu0 %4524
    %v4526 = vsel %vm814, %v4522, -inf
    %4527 = vmax.xlane.f32.xlu0 %v4526
    %v4528 = vpop.xlane.xlu0 %4527
    %v4529 = vsub.f32 %v4521, %v4525
    %v4530 = vsub.f32 %v4522, %v4528
    %v4531 = vmul.f32 %v4529, 1.442695
    %v4532 = vpow.pop %v4531
    %v4533 = vmul.f32 %v4530, 1.442695
    %v4534 = vpow.pop %v4533
    %v4535 = vsel %vm814, %v4532, 0.0
    %4536 = vadd.xlane.f32.xlu0 %v4535
    %v4537 = vpop.xlane.xlu0 %4536
    %v4538 = vsel %vm814, %v4534, 0.0
    %4539 = vadd.xlane.f32.xlu0 %v4538
    %v4540 = vpop.xlane.xlu0 %4539
    %v4541 = vrcp.pop %v4537
    %v4542 = vrcp.pop %v4540
    %v4543 = vmul.f32 %v4532, %v4541
    %v4544 = vmul.f32 %v4534, %v4542
    %4547 = vrot.lane.b32.xlu0 %v4543, 16
    %v4548 = vpop.permute.xlu0 %4547
    %4549 = vrot.lane.b32.xlu0 %v4544, 16
    %v4550 = vpop.permute.xlu0 %4549
    %v4553 = vsel %vm814, %v4465, %v4548
    %v4554 = vsel %vm814, %v4466, %v4550
    %v4555 = vpack.c.bf16 %v4554, %v4553
    %v4556 = vpack.c.bf16 %v4213, %v4209
    %v4557 = vpack.c.bf16 %v4215, %v4211
    %v4558 = vpack.c.bf16 %v4256, %v4252
    %v4559 = vpack.c.bf16 %v4258, %v4254
    %v4560 = vpack.c.bf16 %v4301, %v4297
    %v4561 = vpack.c.bf16 %v4342, %v4338
    %v4562 = vpack.c.bf16 %v4344, %v4340
    %v4563 = vpack.c.bf16 %v4385, %v4381
    %v4565 = vsel %vm1173, %v4555, 0
    %4567 = vmatprep.subr.bf16.mxu0 %v4557
    %4568 = vmatpush1.bf16.msra.mxu0 %v4556
    %4569 = vmatprep.subr.bf16.mxu0 %v4561
    %4570 = vmatpush1.bf16.msra.mxu0 %v4560
    %4571 = vmatprep.subr.bf16.mxu0 0
    %4572 = vmatpush1.bf16.msra.mxu0 0
    %4573 = vmatprep.subr.bf16.mxu0 0
    %4574 = vmatpush1.bf16.msra.mxu0 0
    %4575 = vmatprep.subr.bf16.mxu0 0
    %4576 = vmatpush1.bf16.msra.mxu0 0
    %4577 = vmatprep.subr.bf16.mxu0 0
    %4578 = vmatpush1.bf16.msra.mxu0 0
    %4579 = vmatprep.subr.bf16.mxu0 0
    %4580 = vmatpush1.bf16.msra.mxu0 0
    %4581 = vmatprep.subr.bf16.mxu0 0
    %4582 = vmatpush1.bf16.msra.mxu0 0
    %4583 = vmatprep.subr.bf16.mxu0 0
    %4584 = vmatpush1.bf16.msra.mxu0 0
    %4585 = vmatprep.subr.bf16.mxu0 0
    %4586 = vmatpush1.bf16.msra.mxu0 0
    %4587 = vmatprep.subr.bf16.mxu0 0
    %4588 = vmatpush1.bf16.msra.mxu0 0
    %4589 = vmatprep.subr.bf16.mxu0 0
    %4590 = vmatpush1.bf16.msra.mxu0 0
    %4591 = vmatprep.subr.bf16.mxu0 0
    %4592 = vmatpush1.bf16.msra.mxu0 0
    %4593 = vmatprep.subr.bf16.mxu0 0
    %4594 = vmatpush1.bf16.msra.mxu0 0
    %4595 = vmatprep.subr.bf16.mxu0 0
    %4596 = vmatpush1.bf16.msra.mxu0 0
    %4597 = vmatprep.subr.bf16.mxu0 0
    %4598 = vmatpush1.bf16.msra.mxu0 0
    %4599 = vmatprep.mubr.bf16.mxu0 0
    %4600 = vmatmul.mubr.bf16.gmra.mrb[0].mxu0 %v4565
    %v4601 = vpop.f32.mrb[0].mxu0
    %v4602 = vadd.f32 0.0, %v4601
    %v4603 = vpop.f32.mrb[0].mxu0
    %v4604 = vadd.f32 0.0, %v4603
    %v4605 = vpop.f32.mrb[0].mxu0
    %v4606 = vadd.f32 0.0, %v4605
    %v4607 = vpop.f32.mrb[0].mxu0
    %v4608 = vadd.f32 0.0, %v4607
    %4609 = vdwg.mxu0
    %4610 = vmatprep.subr.bf16.mxu0 %v4559
    %4611 = vmatpush1.bf16.msra.mxu0 %v4558
    %4612 = vmatprep.subr.bf16.mxu0 %v4563
    %4613 = vmatpush1.bf16.msra.mxu0 %v4562
    %4614 = vmatprep.subr.bf16.mxu0 0
    %4615 = vmatpush1.bf16.msra.mxu0 0
    %4616 = vmatprep.subr.bf16.mxu0 0
    %4617 = vmatpush1.bf16.msra.mxu0 0
    %4618 = vmatprep.subr.bf16.mxu0 0
    %4619 = vmatpush1.bf16.msra.mxu0 0
    %4620 = vmatprep.subr.bf16.mxu0 0
    %4621 = vmatpush1.bf16.msra.mxu0 0
    %4622 = vmatprep.subr.bf16.mxu0 0
    %4623 = vmatpush1.bf16.msra.mxu0 0
    %4624 = vmatprep.subr.bf16.mxu0 0
    %4625 = vmatpush1.bf16.msra.mxu0 0
    %4626 = vmatprep.subr.bf16.mxu0 0
    %4627 = vmatpush1.bf16.msra.mxu0 0
    %4628 = vmatprep.subr.bf16.mxu0 0
    %4629 = vmatpush1.bf16.msra.mxu0 0
    %4630 = vmatprep.subr.bf16.mxu0 0
    %4631 = vmatpush1.bf16.msra.mxu0 0
    %4632 = vmatprep.subr.bf16.mxu0 0
    %4633 = vmatpush1.bf16.msra.mxu0 0
    %4634 = vmatprep.subr.bf16.mxu0 0
    %4635 = vmatpush1.bf16.msra.mxu0 0
    %4636 = vmatprep.subr.bf16.mxu0 0
    %4637 = vmatpush1.bf16.msra.mxu0 0
    %4638 = vmatprep.subr.bf16.mxu0 0
    %4639 = vmatpush1.bf16.msra.mxu0 0
    %4640 = vmatprep.subr.bf16.mxu0 0
    %4641 = vmatpush1.bf16.msra.mxu0 0
    %4642 = vmatprep.mubr.bf16.mxu0 0
    %4643 = vmatmul.mubr.bf16.gmra.mrb[0].mxu0 %v4565
    %v4644 = vpop.f32.mrb[0].mxu0
    %v4645 = vadd.f32 0.0, %v4644
    %v4646 = vpop.f32.mrb[0].mxu0
    %v4647 = vadd.f32 0.0, %v4646
    %v4648 = vpop.f32.mrb[0].mxu0
    %v4649 = vadd.f32 0.0, %v4648
    %v4650 = vpop.f32.mrb[0].mxu0
    %v4651 = vadd.f32 0.0, %v4650
    %4652 = vdwg.mxu0
    %v4653 = vmul.f32 %v4602, 0.5
    %v4654 = vmul.f32 %v4604, 0.5
    %v4655 = vmul.f32 %v4645, 0.5
    %v4656 = vmul.f32 %v4647, 0.5
    %v4657 = vmul.f32 %v4606, 0.5
    %v4658 = vmul.f32 %v4608, 0.5
    %v4659 = vmul.f32 %v4649, 0.5
    %v4660 = vmul.f32 %v4651, 0.5
    %v4661 = vld [vmem:[%s15] sm:$0xf]
    %v4663 = vlaneseq
    %v4664 = vshrl.u32 %v4663, 7
    %v4665 = vsub.s32 0, %v4664
    %v4666 = vrot.slane %v4661, %v4665
    %v4667 = vlaneseq
    %v4668 = vshrl.u32 %v4667, 7
    %v4669 = vsub.s32 1, %v4668
    %v4670 = vrot.slane %v4661, %v4669
    %v4671 = vlaneseq
    %v4672 = vshrl.u32 %v4671, 7
    %v4673 = vsub.s32 2, %v4672
    %v4674 = vrot.slane %v4661, %v4673
    %v4675 = vlaneseq
    %v4676 = vshrl.u32 %v4675, 7
    %v4677 = vsub.s32 3, %v4676
    %v4678 = vrot.slane %v4661, %v4677
    %v4683 = vadd.f32 %v4653, %v4666
    %v4684 = vadd.f32 %v4654, %v4670
    %v4685 = vadd.f32 %v4655, %v4674
    %v4686 = vadd.f32 %v4656, %v4678
    %v4687 = vadd.f32 %v4657, %v4666
    %v4688 = vadd.f32 %v4658, %v4670
    %v4689 = vadd.f32 %v4659, %v4674
    %v4690 = vadd.f32 %v4660, %v4678
    %v4691 = vmax.f32 %v4683, 0.0
    %v4692 = vmax.f32 %v4684, 0.0
    %v4693 = vmax.f32 %v4685, 0.0
    %v4694 = vmax.f32 %v4686, 0.0
    %v4695 = vmax.f32 %v4687, 0.0
    %v4696 = vmax.f32 %v4688, 0.0
    %v4697 = vmax.f32 %v4689, 0.0
    %v4698 = vmax.f32 %v4690, 0.0
    %v4699 = vpack.c.bf16 %v4695, %v4691
    %v4700 = vpack.c.bf16 %v4696, %v4692
    %v4701 = vpack.c.bf16 %v4697, %v4693
    %v4702 = vpack.c.bf16 %v4698, %v4694
    %v4703 = vld [vmem:[#allocation18] sm:$0xff]
    %v4704 = vld [vmem:[#allocation18 + $0x8] sm:$0xff]
    %v4705 = vld [vmem:[#allocation18 + $0x10] sm:$0xff]
    %v4706 = vld [vmem:[#allocation18 + $0x18] sm:$0xff]
    %v4707 = vld [vmem:[#allocation18 + $0x20] sm:$0xff]
    %v4708 = vld [vmem:[#allocation18 + $0x28] sm:$0xff]
    %v4709 = vld [vmem:[#allocation18 + $0x30] sm:$0xff]
    %v4710 = vld [vmem:[#allocation18 + $0x38] sm:$0xff]
    %v4711 = vld [vmem:[#allocation18 + $0x40] sm:$0xff]
    %v4712 = vld [vmem:[#allocation18 + $0x48] sm:$0xff]
    %v4713 = vld [vmem:[#allocation18 + $0x50] sm:$0xff]
    %v4714 = vld [vmem:[#allocation18 + $0x58] sm:$0xff]
    %v4715 = vld [vmem:[#allocation18 + $0x60] sm:$0xff]
    %v4716 = vld [vmem:[#allocation18 + $0x68] sm:$0xff]
    %v4717 = vld [vmem:[#allocation18 + $0x70] sm:$0xff]
    %v4718 = vld [vmem:[#allocation18 + $0x78] sm:$0xff]
    %v4719 = vld [vmem:[#allocation18 + $0x80] sm:$0xff]
    %v4720 = vld [vmem:[#allocation18 + $0x88] sm:$0xff]
    %v4721 = vld [vmem:[#allocation18 + $0x90] sm:$0xff]
    %v4722 = vld [vmem:[#allocation18 + $0x98] sm:$0xff]
    %v4723 = vld [vmem:[#allocation18 + $0xa0] sm:$0xff]
    %v4724 = vld [vmem:[#allocation18 + $0xa8] sm:$0xff]
    %v4725 = vld [vmem:[#allocation18 + $0xb0] sm:$0xff]
    %v4726 = vld [vmem:[#allocation18 + $0xb8] sm:$0xff]
    %v4727 = vld [vmem:[#allocation18 + $0xc0] sm:$0xff]
    %v4728 = vld [vmem:[#allocation18 + $0xc8] sm:$0xff]
    %v4729 = vld [vmem:[#allocation18 + $0xd0] sm:$0xff]
    %v4730 = vld [vmem:[#allocation18 + $0xd8] sm:$0xff]
    %v4731 = vld [vmem:[#allocation18 + $0xe0] sm:$0xff]
    %v4732 = vld [vmem:[#allocation18 + $0xe8] sm:$0xff]
    %v4733 = vld [vmem:[#allocation18 + $0xf0] sm:$0xff]
    %v4734 = vld [vmem:[#allocation18 + $0xf8] sm:$0xff]
    %v4735 = vld [vmem:[#allocation18 + $0x100] sm:$0xff]
    %v4736 = vld [vmem:[#allocation18 + $0x108] sm:$0xff]
    %v4737 = vld [vmem:[#allocation18 + $0x110] sm:$0xff]
    %v4738 = vld [vmem:[#allocation18 + $0x118] sm:$0xff]
    %v4739 = vld [vmem:[#allocation18 + $0x120] sm:$0xff]
    %v4740 = vld [vmem:[#allocation18 + $0x128] sm:$0xff]
    %v4741 = vld [vmem:[#allocation18 + $0x130] sm:$0xff]
    %v4742 = vld [vmem:[#allocation18 + $0x138] sm:$0xff]
    %v4743 = vld [vmem:[#allocation18 + $0x140] sm:$0xff]
    %v4744 = vld [vmem:[#allocation18 + $0x148] sm:$0xff]
    %v4745 = vld [vmem:[#allocation18 + $0x150] sm:$0xff]
    %v4746 = vld [vmem:[#allocation18 + $0x158] sm:$0xff]
    %v4747 = vld [vmem:[#allocation18 + $0x160] sm:$0xff]
    %v4748 = vld [vmem:[#allocation18 + $0x168] sm:$0xff]
    %v4749 = vld [vmem:[#allocation18 + $0x170] sm:$0xff]
    %v4750 = vld [vmem:[#allocation18 + $0x178] sm:$0xff]
    %v4751 = vld [vmem:[#allocation18 + $0x180] sm:$0xff]
    %v4752 = vld [vmem:[#allocation18 + $0x188] sm:$0xff]
    %v4753 = vld [vmem:[#allocation18 + $0x190] sm:$0xff]
    %v4754 = vld [vmem:[#allocation18 + $0x198] sm:$0xff]
    %v4755 = vld [vmem:[#allocation18 + $0x1a0] sm:$0xff]
    %v4756 = vld [vmem:[#allocation18 + $0x1a8] sm:$0xff]
    %v4757 = vld [vmem:[#allocation18 + $0x1b0] sm:$0xff]
    %v4758 = vld [vmem:[#allocation18 + $0x1b8] sm:$0xff]
    %v4759 = vld [vmem:[#allocation18 + $0x1c0] sm:$0xff]
    %v4760 = vld [vmem:[#allocation18 + $0x1c8] sm:$0xff]
    %v4761 = vld [vmem:[#allocation18 + $0x1d0] sm:$0xff]
    %v4762 = vld [vmem:[#allocation18 + $0x1d8] sm:$0xff]
    %v4763 = vld [vmem:[#allocation18 + $0x1e0] sm:$0xff]
    %v4764 = vld [vmem:[#allocation18 + $0x1e8] sm:$0xff]
    %v4765 = vld [vmem:[#allocation18 + $0x1f0] sm:$0xff]
    %v4766 = vld [vmem:[#allocation18 + $0x1f8] sm:$0xff]
    %v4831 = vunpack.c.l.b16 %v4703
    %v4832 = vunpack.c.h.b16 %v4703
    %v4833 = vunpack.c.l.b16 %v4704
    %v4834 = vunpack.c.h.b16 %v4704
    %v4835 = vunpack.c.l.b16 %v4705
    %v4836 = vunpack.c.h.b16 %v4705
    %v4837 = vunpack.c.l.b16 %v4706
    %v4838 = vunpack.c.h.b16 %v4706
    %v4839 = vunpack.c.l.b16 %v4707
    %v4840 = vunpack.c.h.b16 %v4707
    %v4841 = vunpack.c.l.b16 %v4708
    %v4842 = vunpack.c.h.b16 %v4708
    %v4843 = vunpack.c.l.b16 %v4709
    %v4844 = vunpack.c.h.b16 %v4709
    %v4845 = vunpack.c.l.b16 %v4710
    %v4846 = vunpack.c.h.b16 %v4710
    %v4847 = vunpack.c.l.b16 %v4711
    %v4848 = vunpack.c.h.b16 %v4711
    %v4849 = vunpack.c.l.b16 %v4712
    %v4850 = vunpack.c.h.b16 %v4712
    %v4851 = vunpack.c.l.b16 %v4713
    %v4852 = vunpack.c.h.b16 %v4713
    %v4853 = vunpack.c.l.b16 %v4714
    %v4854 = vunpack.c.h.b16 %v4714
    %v4855 = vunpack.c.l.b16 %v4715
    %v4856 = vunpack.c.h.b16 %v4715
    %v4857 = vunpack.c.l.b16 %v4716
    %v4858 = vunpack.c.h.b16 %v4716
    %v4859 = vunpack.c.l.b16 %v4717
    %v4860 = vunpack.c.h.b16 %v4717
    %v4861 = vunpack.c.l.b16 %v4718
    %v4862 = vunpack.c.h.b16 %v4718
    %v4863 = vunpack.c.l.b16 %v4719
    %v4864 = vunpack.c.h.b16 %v4719
    %v4865 = vunpack.c.l.b16 %v4720
    %v4866 = vunpack.c.h.b16 %v4720
    %v4867 = vunpack.c.l.b16 %v4721
    %v4868 = vunpack.c.h.b16 %v4721
    %v4869 = vunpack.c.l.b16 %v4722
    %v4870 = vunpack.c.h.b16 %v4722
    %v4871 = vunpack.c.l.b16 %v4723
    %v4872 = vunpack.c.h.b16 %v4723
    %v4873 = vunpack.c.l.b16 %v4724
    %v4874 = vunpack.c.h.b16 %v4724
    %v4875 = vunpack.c.l.b16 %v4725
    %v4876 = vunpack.c.h.b16 %v4725
    %v4877 = vunpack.c.l.b16 %v4726
    %v4878 = vunpack.c.h.b16 %v4726
    %v4879 = vunpack.c.l.b16 %v4727
    %v4880 = vunpack.c.h.b16 %v4727
    %v4881 = vunpack.c.l.b16 %v4728
    %v4882 = vunpack.c.h.b16 %v4728
    %v4883 = vunpack.c.l.b16 %v4729
    %v4884 = vunpack.c.h.b16 %v4729
    %v4885 = vunpack.c.l.b16 %v4730
    %v4886 = vunpack.c.h.b16 %v4730
    %v4887 = vunpack.c.l.b16 %v4731
    %v4888 = vunpack.c.h.b16 %v4731
    %v4889 = vunpack.c.l.b16 %v4732
    %v4890 = vunpack.c.h.b16 %v4732
    %v4891 = vunpack.c.l.b16 %v4733
    %v4892 = vunpack.c.h.b16 %v4733
    %v4893 = vunpack.c.l.b16 %v4734
    %v4894 = vunpack.c.h.b16 %v4734
    %v4895 = vunpack.c.l.b16 %v4735
    %v4896 = vunpack.c.h.b16 %v4735
    %v4897 = vunpack.c.l.b16 %v4736
    %v4898 = vunpack.c.h.b16 %v4736
    %v4899 = vunpack.c.l.b16 %v4737
    %v4900 = vunpack.c.h.b16 %v4737
    %v4901 = vunpack.c.l.b16 %v4738
    %v4902 = vunpack.c.h.b16 %v4738
    %v4903 = vunpack.c.l.b16 %v4739
    %v4904 = vunpack.c.h.b16 %v4739
    %v4905 = vunpack.c.l.b16 %v4740
    %v4906 = vunpack.c.h.b16 %v4740
    %v4907 = vunpack.c.l.b16 %v4741
    %v4908 = vunpack.c.h.b16 %v4741
    %v4909 = vunpack.c.l.b16 %v4742
    %v4910 = vunpack.c.h.b16 %v4742
    %v4911 = vunpack.c.l.b16 %v4743
    %v4912 = vunpack.c.h.b16 %v4743
    %v4913 = vunpack.c.l.b16 %v4744
    %v4914 = vunpack.c.h.b16 %v4744
    %v4915 = vunpack.c.l.b16 %v4745
    %v4916 = vunpack.c.h.b16 %v4745
    %v4917 = vunpack.c.l.b16 %v4746
    %v4918 = vunpack.c.h.b16 %v4746
    %v4919 = vunpack.c.l.b16 %v4747
    %v4920 = vunpack.c.h.b16 %v4747
    %v4921 = vunpack.c.l.b16 %v4748
    %v4922 = vunpack.c.h.b16 %v4748
    %v4923 = vunpack.c.l.b16 %v4749
    %v4924 = vunpack.c.h.b16 %v4749
    %v4925 = vunpack.c.l.b16 %v4750
    %v4926 = vunpack.c.h.b16 %v4750
    %v4927 = vunpack.c.l.b16 %v4751
    %v4928 = vunpack.c.h.b16 %v4751
    %v4929 = vunpack.c.l.b16 %v4752
    %v4930 = vunpack.c.h.b16 %v4752
    %v4931 = vunpack.c.l.b16 %v4753
    %v4932 = vunpack.c.h.b16 %v4753
    %v4933 = vunpack.c.l.b16 %v4754
    %v4934 = vunpack.c.h.b16 %v4754
    %v4935 = vunpack.c.l.b16 %v4755
    %v4936 = vunpack.c.h.b16 %v4755
    %v4937 = vunpack.c.l.b16 %v4756
    %v4938 = vunpack.c.h.b16 %v4756
    %v4939 = vunpack.c.l.b16 %v4757
    %v4940 = vunpack.c.h.b16 %v4757
    %v4941 = vunpack.c.l.b16 %v4758
    %v4942 = vunpack.c.h.b16 %v4758
    %v4943 = vunpack.c.l.b16 %v4759
    %v4944 = vunpack.c.h.b16 %v4759
    %v4945 = vunpack.c.l.b16 %v4760
    %v4946 = vunpack.c.h.b16 %v4760
    %v4947 = vunpack.c.l.b16 %v4761
    %v4948 = vunpack.c.h.b16 %v4761
    %v4949 = vunpack.c.l.b16 %v4762
    %v4950 = vunpack.c.h.b16 %v4762
    %v4951 = vunpack.c.l.b16 %v4763
    %v4952 = vunpack.c.h.b16 %v4763
    %v4953 = vunpack.c.l.b16 %v4764
    %v4954 = vunpack.c.h.b16 %v4764
    %v4955 = vunpack.c.l.b16 %v4765
    %v4956 = vunpack.c.h.b16 %v4765
    %v4957 = vunpack.c.l.b16 %v4766
    %v4958 = vunpack.c.h.b16 %v4766
    %v4959 = vpack.c.b16 %v4833, %v4831
    %v4960 = vpack.c.b16 %v4834, %v4832
    %v4961 = vpack.c.b16 %v4837, %v4835
    %v4962 = vpack.c.b16 %v4838, %v4836
    %v4963 = vpack.c.b16 %v4841, %v4839
    %v4964 = vpack.c.b16 %v4842, %v4840
    %v4965 = vpack.c.b16 %v4845, %v4843
    %v4966 = vpack.c.b16 %v4846, %v4844
    %v4967 = vpack.c.b16 %v4849, %v4847
    %v4968 = vpack.c.b16 %v4850, %v4848
    %v4969 = vpack.c.b16 %v4853, %v4851
    %v4970 = vpack.c.b16 %v4854, %v4852
    %v4971 = vpack.c.b16 %v4857, %v4855
    %v4972 = vpack.c.b16 %v4858, %v4856
    %v4973 = vpack.c.b16 %v4861, %v4859
    %v4974 = vpack.c.b16 %v4862, %v4860
    %v4975 = vpack.c.b16 %v4865, %v4863
    %v4976 = vpack.c.b16 %v4866, %v4864
    %v4977 = vpack.c.b16 %v4869, %v4867
    %v4978 = vpack.c.b16 %v4870, %v4868
    %v4979 = vpack.c.b16 %v4873, %v4871
    %v4980 = vpack.c.b16 %v4874, %v4872
    %v4981 = vpack.c.b16 %v4877, %v4875
    %v4982 = vpack.c.b16 %v4878, %v4876
    %v4983 = vpack.c.b16 %v4881, %v4879
    %v4984 = vpack.c.b16 %v4882, %v4880
    %v4985 = vpack.c.b16 %v4885, %v4883
    %v4986 = vpack.c.b16 %v4886, %v4884
    %v4987 = vpack.c.b16 %v4889, %v4887
    %v4988 = vpack.c.b16 %v4890, %v4888
    %v4989 = vpack.c.b16 %v4893, %v4891
    %v4990 = vpack.c.b16 %v4894, %v4892
    %v4991 = vpack.c.b16 %v4897, %v4895
    %v4992 = vpack.c.b16 %v4898, %v4896
    %v4993 = vpack.c.b16 %v4901, %v4899
    %v4994 = vpack.c.b16 %v4902, %v4900
    %v4995 = vpack.c.b16 %v4905, %v4903
    %v4996 = vpack.c.b16 %v4906, %v4904
    %v4997 = vpack.c.b16 %v4909, %v4907
    %v4998 = vpack.c.b16 %v4910, %v4908
    %v4999 = vpack.c.b16 %v4913, %v4911
    %v5000 = vpack.c.b16 %v4914, %v4912
    %v5001 = vpack.c.b16 %v4917, %v4915
    %v5002 = vpack.c.b16 %v4918, %v4916
    %v5003 = vpack.c.b16 %v4921, %v4919
    %v5004 = vpack.c.b16 %v4922, %v4920
    %v5005 = vpack.c.b16 %v4925, %v4923
    %v5006 = vpack.c.b16 %v4926, %v4924
    %v5007 = vpack.c.b16 %v4929, %v4927
    %v5008 = vpack.c.b16 %v4930, %v4928
    %v5009 = vpack.c.b16 %v4933, %v4931
    %v5010 = vpack.c.b16 %v4934, %v4932
    %v5011 = vpack.c.b16 %v4937, %v4935
    %v5012 = vpack.c.b16 %v4938, %v4936
    %v5013 = vpack.c.b16 %v4941, %v4939
    %v5014 = vpack.c.b16 %v4942, %v4940
    %v5015 = vpack.c.b16 %v4945, %v4943
    %v5016 = vpack.c.b16 %v4946, %v4944
    %v5017 = vpack.c.b16 %v4949, %v4947
    %v5018 = vpack.c.b16 %v4950, %v4948
    %v5019 = vpack.c.b16 %v4953, %v4951
    %v5020 = vpack.c.b16 %v4954, %v4952
    %v5021 = vpack.c.b16 %v4957, %v4955
    %v5022 = vpack.c.b16 %v4958, %v4956
    %5087 = vmatprep.subr.bf16.mxu0 %v4960
    %5088 = vmatpush1.bf16.msra.mxu0 %v4959
    %5089 = vmatprep.subr.bf16.mxu0 %v4962
    %5090 = vmatpush1.bf16.msra.mxu0 %v4961
    %5091 = vmatprep.subr.bf16.mxu0 %v4964
    %5092 = vmatpush1.bf16.msra.mxu0 %v4963
    %5093 = vmatprep.subr.bf16.mxu0 %v4966
    %5094 = vmatpush1.bf16.msra.mxu0 %v4965
    %5095 = vmatprep.subr.bf16.mxu0 %v4968
    %5096 = vmatpush1.bf16.msra.mxu0 %v4967
    %5097 = vmatprep.subr.bf16.mxu0 %v4970
    %5098 = vmatpush1.bf16.msra.mxu0 %v4969
    %5099 = vmatprep.subr.bf16.mxu0 %v4972
    %5100 = vmatpush1.bf16.msra.mxu0 %v4971
    %5101 = vmatprep.subr.bf16.mxu0 %v4974
    %5102 = vmatpush1.bf16.msra.mxu0 %v4973
    %5103 = vmatprep.subr.bf16.mxu0 %v4976
    %5104 = vmatpush1.bf16.msra.mxu0 %v4975
    %5105 = vmatprep.subr.bf16.mxu0 %v4978
    %5106 = vmatpush1.bf16.msra.mxu0 %v4977
    %5107 = vmatprep.subr.bf16.mxu0 %v4980
    %5108 = vmatpush1.bf16.msra.mxu0 %v4979
    %5109 = vmatprep.subr.bf16.mxu0 %v4982
    %5110 = vmatpush1.bf16.msra.mxu0 %v4981
    %5111 = vmatprep.subr.bf16.mxu0 %v4984
    %5112 = vmatpush1.bf16.msra.mxu0 %v4983
    %5113 = vmatprep.subr.bf16.mxu0 %v4986
    %5114 = vmatpush1.bf16.msra.mxu0 %v4985
    %5115 = vmatprep.subr.bf16.mxu0 %v4988
    %5116 = vmatpush1.bf16.msra.mxu0 %v4987
    %5117 = vmatprep.subr.bf16.mxu0 %v4990
    %5118 = vmatpush1.bf16.msra.mxu0 %v4989
    %5119 = vmatprep.mubr.bf16.mxu0 %v4700
    %5120 = vmatmul.mubr.bf16.gmra.mrb[0].mxu0 %v4699
    %v5121 = vpop.f32.mrb[0].mxu0
    %v5122 = vadd.f32 0.0, %v5121
    %v5123 = vpop.f32.mrb[0].mxu0
    %v5124 = vadd.f32 0.0, %v5123
    %v5125 = vpop.f32.mrb[0].mxu0
    %v5126 = vadd.f32 0.0, %v5125
    %v5127 = vpop.f32.mrb[0].mxu0
    %v5128 = vadd.f32 0.0, %v5127
    %5129 = vdwg.mxu0
    %5130 = vmatprep.subr.bf16.mxu0 %v4992
    %5131 = vmatpush1.bf16.msra.mxu0 %v4991
    %5132 = vmatprep.subr.bf16.mxu0 %v4994
    %5133 = vmatpush1.bf16.msra.mxu0 %v4993
    %5134 = vmatprep.subr.bf16.mxu0 %v4996
    %5135 = vmatpush1.bf16.msra.mxu0 %v4995
    %5136 = vmatprep.subr.bf16.mxu0 %v4998
    %5137 = vmatpush1.bf16.msra.mxu0 %v4997
    %5138 = vmatprep.subr.bf16.mxu0 %v5000
    %5139 = vmatpush1.bf16.msra.mxu0 %v4999
    %5140 = vmatprep.subr.bf16.mxu0 %v5002
    %5141 = vmatpush1.bf16.msra.mxu0 %v5001
    %5142 = vmatprep.subr.bf16.mxu0 %v5004
    %5143 = vmatpush1.bf16.msra.mxu0 %v5003
    %5144 = vmatprep.subr.bf16.mxu0 %v5006
    %5145 = vmatpush1.bf16.msra.mxu0 %v5005
    %5146 = vmatprep.subr.bf16.mxu0 %v5008
    %5147 = vmatpush1.bf16.msra.mxu0 %v5007
    %5148 = vmatprep.subr.bf16.mxu0 %v5010
    %5149 = vmatpush1.bf16.msra.mxu0 %v5009
    %5150 = vmatprep.subr.bf16.mxu0 %v5012
    %5151 = vmatpush1.bf16.msra.mxu0 %v5011
    %5152 = vmatprep.subr.bf16.mxu0 %v5014
    %5153 = vmatpush1.bf16.msra.mxu0 %v5013
    %5154 = vmatprep.subr.bf16.mxu0 %v5016
    %5155 = vmatpush1.bf16.msra.mxu0 %v5015
    %5156 = vmatprep.subr.bf16.mxu0 %v5018
    %5157 = vmatpush1.bf16.msra.mxu0 %v5017
    %5158 = vmatprep.subr.bf16.mxu0 %v5020
    %5159 = vmatpush1.bf16.msra.mxu0 %v5019
    %5160 = vmatprep.subr.bf16.mxu0 %v5022
    %5161 = vmatpush1.bf16.msra.mxu0 %v5021
    %5162 = vmatprep.mubr.bf16.mxu0 %v4702
    %5163 = vmatmul.mubr.bf16.gmra.mrb[0].mxu0 %v4701
    %v5164 = vpop.f32.mrb[0].mxu0
    %v5165 = vadd.f32 %v5122, %v5164
    %v5166 = vpop.f32.mrb[0].mxu0
    %v5167 = vadd.f32 %v5124, %v5166
    %v5168 = vpop.f32.mrb[0].mxu0
    %v5169 = vadd.f32 %v5126, %v5168
    %v5170 = vpop.f32.mrb[0].mxu0
    %v5171 = vadd.f32 %v5128, %v5170
    %5172 = vdwg.mxu0
    %5175 = vrot.lane.b32.xlu0 %v5165, 126
    %v5176 = vpop.permute.xlu0 %5175
    %5177 = vrot.lane.b32.xlu0 %v5169, 126
    %v5178 = vpop.permute.xlu0 %5177
    %5181 = vxpose.xlu0.b32.start [1/16] %v5176, 128
    %5182 = vxpose.xlu0.b32.cont [2/16] %v5178, 128
    %5183 = vxpose.xlu0.b32.cont [3/16] 0.0, 128
    %5184 = vxpose.xlu0.b32.cont [4/16] 0.0, 128
    %5185 = vxpose.xlu0.b32.cont [5/16] 0.0, 128
    %5186 = vxpose.xlu0.b32.cont [6/16] 0.0, 128
    %5187 = vxpose.xlu0.b32.cont [7/16] 0.0, 128
    %5188 = vxpose.xlu0.b32.cont [8/16] 0.0, 128
    %5189 = vxpose.xlu0.b32.cont [9/16] 0.0, 128
    %5190 = vxpose.xlu0.b32.cont [10/16] 0.0, 128
    %5191 = vxpose.xlu0.b32.cont [11/16] 0.0, 128
    %5192 = vxpose.xlu0.b32.cont [12/16] 0.0, 128
    %5193 = vxpose.xlu0.b32.cont [13/16] 0.0, 128
    %5194 = vxpose.xlu0.b32.cont [14/16] 0.0, 128
    %5195 = vxpose.xlu0.b32.cont [15/16] 0.0, 128
    %5196 = vxpose.xlu0.b32.end [16/16] 0.0, 128
    %v5197 = vpop.trf.xlu0
    %v5198 = vpop.trf.xlu0
    %v5199 = vpop.trf.xlu0
    %v5200 = vpop.trf.xlu0
    %v5201 = vpop.trf.xlu0
    %v5202 = vpop.trf.xlu0
    %v5203 = vpop.trf.xlu0
    %v5204 = vpop.trf.xlu0
    %v5205 = vpop.trf.xlu0
    %v5206 = vpop.trf.xlu0
    %v5207 = vpop.trf.xlu0
    %v5208 = vpop.trf.xlu0
    %v5209 = vpop.trf.xlu0
    %v5210 = vpop.trf.xlu0
    %v5211 = vpop.trf.xlu0
    %v5212 = vpop.trf.xlu0
    %5213 = vset.pattern.permute.xlu0 3
    %5214 = vperm.xlu0 %5213, %v5165
    %v5215 = vpop.permute.xlu0 %5214
    %5217 = vset.pattern.permute.xlu0 3
    %5218 = vperm.xlu0 %5217, %v5169
    %v5219 = vpop.permute.xlu0 %5218
    %v5221 = vlaneseq
    %v5222 = vshrl.u32 %v5221, 7
    %v5223 = vsub.s32 0, %v5222
    %v5224 = vrot.slane %v5197, %v5223
    %v5225 = vadd.f32 %v5215, %v5224
    %v5226 = vadd.f32 %v5219, %v5224
    %vm5227 = vcmp.gt.f32.partialorder %v5225, 0.0
    %vm5228 = vcmp.gt.f32.partialorder %v5226, 0.0
    %v5229 = vmul.f32 %v5225, 0.2
    %v5230 = vmul.f32 %v5226, 0.2
    %v5231 = vsel %vm5227, %v5225, %v5229
    %v5232 = vsel %vm5228, %v5226, %v5230
    %v5233 = vsel %vm1050, %v5231, -1e+30
    %v5234 = vsel %vm1051, %v5232, -1e+30
    %v5235 = vsel %vm814, %v5233, -inf
    %5236 = vmax.xlane.f32.xlu0 %v5235
    %v5237 = vpop.xlane.xlu0 %5236
    %v5238 = vsel %vm814, %v5234, -inf
    %5239 = vmax.xlane.f32.xlu0 %v5238
    %v5240 = vpop.xlane.xlu0 %5239
    %v5241 = vsub.f32 %v5233, %v5237
    %v5242 = vsub.f32 %v5234, %v5240
    %v5243 = vmul.f32 %v5241, 1.442695
    %v5244 = vpow.pop %v5243
    %v5245 = vmul.f32 %v5242, 1.442695
    %v5246 = vpow.pop %v5245
    %v5247 = vsel %vm814, %v5244, 0.0
    %5248 = vadd.xlane.f32.xlu0 %v5247
    %v5249 = vpop.xlane.xlu0 %5248
    %v5250 = vsel %vm814, %v5246, 0.0
    %5251 = vadd.xlane.f32.xlu0 %v5250
    %v5252 = vpop.xlane.xlu0 %5251
    %v5253 = vrcp.pop %v5249
    %v5254 = vrcp.pop %v5252
    %v5255 = vmul.f32 %v5244, %v5253
    %v5256 = vmul.f32 %v5246, %v5254
    %5259 = vrot.lane.b32.xlu0 %v5167, 126
    %v5260 = vpop.permute.xlu0 %5259
    %5261 = vrot.lane.b32.xlu0 %v5171, 126
    %v5262 = vpop.permute.xlu0 %5261
    %5265 = vxpose.xlu0.b32.start [1/16] %v5260, 128
    %5266 = vxpose.xlu0.b32.cont [2/16] %v5262, 128
    %5267 = vxpose.xlu0.b32.cont [3/16] 0.0, 128
    %5268 = vxpose.xlu0.b32.cont [4/16] 0.0, 128
    %5269 = vxpose.xlu0.b32.cont [5/16] 0.0, 128
    %5270 = vxpose.xlu0.b32.cont [6/16] 0.0, 128
    %5271 = vxpose.xlu0.b32.cont [7/16] 0.0, 128
    %5272 = vxpose.xlu0.b32.cont [8/16] 0.0, 128
    %5273 = vxpose.xlu0.b32.cont [9/16] 0.0, 128
    %5274 = vxpose.xlu0.b32.cont [10/16] 0.0, 128
    %5275 = vxpose.xlu0.b32.cont [11/16] 0.0, 128
    %5276 = vxpose.xlu0.b32.cont [12/16] 0.0, 128
    %5277 = vxpose.xlu0.b32.cont [13/16] 0.0, 128
    %5278 = vxpose.xlu0.b32.cont [14/16] 0.0, 128
    %5279 = vxpose.xlu0.b32.cont [15/16] 0.0, 128
    %5280 = vxpose.xlu0.b32.end [16/16] 0.0, 128
    %v5281 = vpop.trf.xlu0
    %v5282 = vpop.trf.xlu0
    %v5283 = vpop.trf.xlu0
    %v5284 = vpop.trf.xlu0
    %v5285 = vpop.trf.xlu0
    %v5286 = vpop.trf.xlu0
    %v5287 = vpop.trf.xlu0
    %v5288 = vpop.trf.xlu0
    %v5289 = vpop.trf.xlu0
    %v5290 = vpop.trf.xlu0
    %v5291 = vpop.trf.xlu0
    %v5292 = vpop.trf.xlu0
    %v5293 = vpop.trf.xlu0
    %v5294 = vpop.trf.xlu0
    %v5295 = vpop.trf.xlu0
    %v5296 = vpop.trf.xlu0
    %5297 = vset.pattern.permute.xlu0 3
    %5298 = vperm.xlu0 %5297, %v5167
    %v5299 = vpop.permute.xlu0 %5298
    %5301 = vset.pattern.permute.xlu0 3
    %5302 = vperm.xlu0 %5301, %v5171
    %v5303 = vpop.permute.xlu0 %5302
    %v5305 = vlaneseq
    %v5306 = vshrl.u32 %v5305, 7
    %v5307 = vsub.s32 0, %v5306
    %v5308 = vrot.slane %v5281, %v5307
    %v5309 = vadd.f32 %v5299, %v5308
    %v5310 = vadd.f32 %v5303, %v5308
    %vm5311 = vcmp.gt.f32.partialorder %v5309, 0.0
    %vm5312 = vcmp.gt.f32.partialorder %v5310, 0.0
    %v5313 = vmul.f32 %v5309, 0.2
    %v5314 = vmul.f32 %v5310, 0.2
    %v5315 = vsel %vm5311, %v5309, %v5313
    %v5316 = vsel %vm5312, %v5310, %v5314
    %v5317 = vsel %vm1050, %v5315, -1e+30
    %v5318 = vsel %vm1051, %v5316, -1e+30
    %v5319 = vsel %vm814, %v5317, -inf
    %5320 = vmax.xlane.f32.xlu0 %v5319
    %v5321 = vpop.xlane.xlu0 %5320
    %v5322 = vsel %vm814, %v5318, -inf
    %5323 = vmax.xlane.f32.xlu0 %v5322
    %v5324 = vpop.xlane.xlu0 %5323
    %v5325 = vsub.f32 %v5317, %v5321
    %v5326 = vsub.f32 %v5318, %v5324
    %v5327 = vmul.f32 %v5325, 1.442695
    %v5328 = vpow.pop %v5327
    %v5329 = vmul.f32 %v5326, 1.442695
    %v5330 = vpow.pop %v5329
    %v5331 = vsel %vm814, %v5328, 0.0
    %5332 = vadd.xlane.f32.xlu0 %v5331
    %v5333 = vpop.xlane.xlu0 %5332
    %v5334 = vsel %vm814, %v5330, 0.0
    %5335 = vadd.xlane.f32.xlu0 %v5334
    %v5336 = vpop.xlane.xlu0 %5335
    %v5337 = vrcp.pop %v5333
    %v5338 = vrcp.pop %v5336
    %v5339 = vmul.f32 %v5328, %v5337
    %v5340 = vmul.f32 %v5330, %v5338
    %5343 = vrot.lane.b32.xlu0 %v5339, 16
    %v5344 = vpop.permute.xlu0 %5343
    %5345 = vrot.lane.b32.xlu0 %v5340, 16
    %v5346 = vpop.permute.xlu0 %5345
    %v5349 = vsel %vm814, %v5255, %v5344
    %v5350 = vsel %vm814, %v5256, %v5346
    %v5351 = vpack.c.bf16 %v5350, %v5349
    %v5352 = vpack.c.bf16 %v5169, %v5165
    %v5353 = vpack.c.bf16 %v5171, %v5167
    %v5355 = vsel %vm1173, %v5351, 0
    %5357 = vmatprep.subr.bf16.mxu0 0
    %5358 = vmatpush1.bf16.msra.mxu0 %v5352
    %5359 = vmatprep.subr.bf16.mxu0 0
    %5360 = vmatpush1.bf16.msra.mxu0 %v5353
    %5361 = vmatprep.subr.bf16.mxu0 0
    %5362 = vmatpush1.bf16.msra.mxu0 0
    %5363 = vmatprep.subr.bf16.mxu0 0
    %5364 = vmatpush1.bf16.msra.mxu0 0
    %5365 = vmatprep.subr.bf16.mxu0 0
    %5366 = vmatpush1.bf16.msra.mxu0 0
    %5367 = vmatprep.subr.bf16.mxu0 0
    %5368 = vmatpush1.bf16.msra.mxu0 0
    %5369 = vmatprep.subr.bf16.mxu0 0
    %5370 = vmatpush1.bf16.msra.mxu0 0
    %5371 = vmatprep.subr.bf16.mxu0 0
    %5372 = vmatpush1.bf16.msra.mxu0 0
    %5373 = vmatprep.subr.bf16.mxu0 0
    %5374 = vmatpush1.bf16.msra.mxu0 0
    %5375 = vmatprep.subr.bf16.mxu0 0
    %5376 = vmatpush1.bf16.msra.mxu0 0
    %5377 = vmatprep.subr.bf16.mxu0 0
    %5378 = vmatpush1.bf16.msra.mxu0 0
    %5379 = vmatprep.subr.bf16.mxu0 0
    %5380 = vmatpush1.bf16.msra.mxu0 0
    %5381 = vmatprep.subr.bf16.mxu0 0
    %5382 = vmatpush1.bf16.msra.mxu0 0
    %5383 = vmatprep.subr.bf16.mxu0 0
    %5384 = vmatpush1.bf16.msra.mxu0 0
    %5385 = vmatprep.subr.bf16.mxu0 0
    %5386 = vmatpush1.bf16.msra.mxu0 0
    %5387 = vmatprep.subr.bf16.mxu0 0
    %5388 = vmatpush1.bf16.msra.mxu0 0
    %5389 = vmatprep.mubr.bf16.mxu0 0
    %5390 = vmatmul.mubr.bf16.gmra.mrb[0].mxu0 %v5355
    %v5391 = vpop.f32.mrb[0].mxu0
    %v5392 = vadd.f32 0.0, %v5391
    %v5393 = vpop.f32.mrb[0].mxu0
    %v5394 = vpop.f32.mrb[0].mxu0
    %v5395 = vadd.f32 0.0, %v5394
    %v5396 = vpop.f32.mrb[0].mxu0
    %5397 = vdwg.mxu0
    %v5398 = vmul.f32 %v5392, 0.5
    %v5399 = vmul.f32 %v5395, 0.5
    %v5400 = vld [vmem:[%s17] sm:$0x1]
    %v5402 = vlaneseq
    %v5403 = vshrl.u32 %v5402, 7
    %v5404 = vsub.s32 0, %v5403
    %v5405 = vrot.slane %v5400, %v5404
    %v5407 = vadd.f32 %v5398, %v5405
    %v5408 = vadd.f32 %v5399, %v5405
    %vm5409 = vcmask 15360
    %v5410 = vsel %vm5409, %v5407, -inf
    %5411 = vmax.xlane.f32.xlu0 %v5410
    %v5412 = vpop.xlane.xlu0 %5411
    %v5413 = vsel %vm5409, %v5408, -inf
    %5414 = vmax.xlane.f32.xlu0 %v5413
    %v5415 = vpop.xlane.xlu0 %5414
    %v5416 = vsub.f32 %v5407, %v5412
    %v5417 = vsub.f32 %v5408, %v5415
    %v5418 = vmul.f32 %v5416, 1.442695
    %v5419 = vpow.pop %v5418
    %v5420 = vmul.f32 %v5417, 1.442695
    %v5421 = vpow.pop %v5420
    %v5422 = vsel %vm5409, %v5419, 0.0
    %5423 = vadd.xlane.f32.xlu0 %v5422
    %v5424 = vpop.xlane.xlu0 %5423
    %v5425 = vsel %vm5409, %v5421, 0.0
    %5426 = vadd.xlane.f32.xlu0 %v5425
    %v5427 = vpop.xlane.xlu0 %5426
    %v5428 = vrcp.pop %v5424
    %v5429 = vrcp.pop %v5427
    %v5430 = vmul.f32 %v5419, %v5428
    %v5431 = vmul.f32 %v5421, %v5429
    %5432 = vst.msk [vmem:[%s18] sm:$0xff] %vm5409, %v5430
    %5433 = vst.msk [vmem:[%s18 + $0x8] sm:$0xff] %vm5409, %v5431
    // Predicated region
    $region118: #{_net_forward_impl.1} parent=1 // pred_check
      _
    $region119: #{_net_forward_impl.1} parent=1 // pred_check_branch
      %5435 = sbr.rel (0) target = $region121
    $region120: #{_net_forward_impl.1} parent=1 // pred_region
      _
    $region121: #{_net_forward_impl.1} parent=1 // pred_fallthru
      _
    // Predicated region
    $region122: #{_net_forward_impl.1} parent=1 // pred_check
      _
    $region123: #{_net_forward_impl.1} parent=1 // pred_check_branch
      %5437 = sbr.rel (0) target = $region125
    $region124: #{_net_forward_impl.1} parent=1 // pred_region
      _
    $region125: #{_net_forward_impl.1} parent=1 // pred_fallthru
      _
    %5438 = vsyncpa [#allocation3], 1
    %5439 = vsyncpa [#allocation5], 1
    %5440 = vsyncpa [#allocation8], 1
    %5441 = vsyncpa [#allocation11], 1
    %5442 = vsyncpa [#allocation14], 1
    %5443 = vsyncpa [#allocation17], 1

</llo_original>
